<compile_context>
chip_gen: v5e
topology: v5e:2x2
jax: 0.10.0
libtpu: 0.0.40
codegen_flags: <defaults>
</compile_context>

<pallas_src>
import functools

import jax
import jax.numpy as jnp
from jax import lax
from jax.experimental import pallas as pl
from jax.experimental.pallas import tpu as pltpu


# ----------------------------------------------------------------------------
# Helpers
# ----------------------------------------------------------------------------
def _full_spec(shape):
    # grid == (), single invocation, whole array resident in VMEM.
    return pl.BlockSpec(shape, lambda: tuple(0 for _ in shape))


def _round_up(x, m):
    return (x + m - 1) // m * m


# ----------------------------------------------------------------------------
# Fused conv stage kernel: matmul + bias + BN(train) + ReLU + 2x2 max-pool
# ----------------------------------------------------------------------------
def _conv_stage_kernel(p_ref, w_ref, b_ref, g_ref, beta_ref, o_ref, y_ref):
    # p_ref   : [4, M4, Kp] bf16  (leading axis = 2x2 pool-window element,
    #                              rows ordered (b, ph, pw), K zero-padded)
    # w_ref   : [Kp, C]     bf16
    # b/g/beta: [1, C]      f32
    # o_ref   : [M4, C]     f32   (pooled output, rows (b, ph, pw))
    # y_ref   : VMEM scratch [4, M4, C] f32 (pre-pool conv+bias output)
    m4, c = o_ref.shape
    n = 4 * m4  # number of (batch x spatial) samples for the BN statistics

    # Conv as 4 MXU matmuls (one per pool-window element), f32 accumulation.
    s = jnp.zeros((1, c), jnp.float32)
    for i in range(4):
        y = jnp.dot(p_ref[i], w_ref[...], preferred_element_type=jnp.float32)
        y = y + b_ref[...]
        y_ref[i] = y
        s = s + jnp.sum(y, axis=0, keepdims=True)

    # Training-mode BatchNorm2d statistics (biased variance) over all samples.
    mean = s * (1.0 / n)
    sq = jnp.zeros((1, c), jnp.float32)
    for i in range(4):
        d = y_ref[i] - mean
        sq = sq + jnp.sum(d * d, axis=0, keepdims=True)
    var = sq * (1.0 / n)
    scale = g_ref[...] * lax.rsqrt(var + 1e-5)
    shift = beta_ref[...] - mean * scale

    # Normalize + ReLU + 2x2 max-pool (elementwise max of the 4 window slabs).
    z0 = jnp.maximum(y_ref[0] * scale + shift, 0.0)
    z1 = jnp.maximum(y_ref[1] * scale + shift, 0.0)
    z2 = jnp.maximum(y_ref[2] * scale + shift, 0.0)
    z3 = jnp.maximum(y_ref[3] * scale + shift, 0.0)
    o_ref[...] = jnp.maximum(jnp.maximum(z0, z1), jnp.maximum(z2, z3))


def _im2col_pool_major(x, kh, kw):
    """x: [B, H, W, C] -> patches [4, B*PH*PW, C*kh*kw].

    Leading axis enumerates the 2x2 max-pool window element (wi*2 + wj);
    rows are ordered (b, ph, pw); feature order is (c, ki, kj) to match
    torch conv_w.view(OC, IC*KH*KW).
    """
    B, H, W, C = x.shape
    OH, OW = H - kh + 1, W - kw + 1
    assert OH % 2 == 0 and OW % 2 == 0
    PH, PW = OH // 2, OW // 2
    cols = [x[:, i:i + OH, j:j + OW, :] for i in range(kh) for j in range(kw)]
    p = jnp.stack(cols, axis=-1)                      # [B, OH, OW, C, kh*kw]
    K = C * kh * kw
    p = p.reshape(B, OH, OW, K)                       # features (c, ki, kj)
    p = p.reshape(B, PH, 2, PW, 2, K)                 # (b, ph, wi, pw, wj, K)
    p = jnp.transpose(p, (2, 4, 0, 1, 3, 5))          # (wi, wj, b, ph, pw, K)
    return p.reshape(4, B * PH * PW, K), (B, PH, PW)


def conv_bn_relu_pool(x_nhwc, conv_w, conv_b, gamma, beta):
    """One LeNet feature stage: Conv(k5,valid) + BN2d(train) + ReLU + MaxPool2x2."""
    Cout, Cin, kh, kw = conv_w.shape
    p, (B, PH, PW) = _im2col_pool_major(x_nhwc, kh, kw)
    K = p.shape[-1]
    Kp = _round_up(K, 128)                            # unmasked MXU contraction edge
    p = jnp.pad(p, ((0, 0), (0, 0), (0, Kp - K))).astype(jnp.bfloat16)
    w = conv_w.reshape(Cout, K).T                     # [K, Cout], torch feature order
    w = jnp.pad(w, ((0, Kp - K), (0, 0))).astype(jnp.bfloat16)
    M4 = B * PH * PW

    out = pl.pallas_call(
        _conv_stage_kernel,
        out_shape=jax.ShapeDtypeStruct((M4, Cout), jnp.float32),
        in_specs=[
            _full_spec((4, M4, Kp)),
            _full_spec((Kp, Cout)),
            _full_spec((1, Cout)),
            _full_spec((1, Cout)),
            _full_spec((1, Cout)),
        ],
        out_specs=_full_spec((M4, Cout)),
        scratch_shapes=[pltpu.VMEM((4, M4, Cout), jnp.float32)],
    )(p, w, conv_b.reshape(1, Cout), gamma.reshape(1, Cout), beta.reshape(1, Cout))
    return out.reshape(B, PH, PW, Cout)               # NHWC pooled output


# ----------------------------------------------------------------------------
# Fused classifier kernel: fc1 + BN + ReLU + fc2 + BN + ReLU + fc3
# ----------------------------------------------------------------------------
def _classifier_kernel(x_ref, w1_ref, b1_ref, g1_ref, be1_ref,
                       w2_ref, b2_ref, g2_ref, be2_ref,
                       w3_ref, b3_ref, o_ref):
    def bn_relu(h, g, b):
        mean = jnp.mean(h, axis=0, keepdims=True)
        var = jnp.mean((h - mean) ** 2, axis=0, keepdims=True)  # biased (train)
        return jnp.maximum((h - mean) * lax.rsqrt(var + 1e-5) * g + b, 0.0)

    h = jnp.dot(x_ref[...], w1_ref[...], preferred_element_type=jnp.float32)
    h = bn_relu(h + b1_ref[...], g1_ref[...], be1_ref[...])
    h = jnp.dot(h, w2_ref[...], preferred_element_type=jnp.float32)
    h = bn_relu(h + b2_ref[...], g2_ref[...], be2_ref[...])
    o_ref[...] = (
        jnp.dot(h, w3_ref[...], preferred_element_type=jnp.float32) + b3_ref[...]
    )


def classifier(flat, params):
    B = flat.shape[0]
    OUT = params["fc3_b"].shape[0]
    args = [
        flat,
        params["fc1_w"], params["fc1_b"].reshape(1, -1),
        params["bn3_g"].reshape(1, -1), params["bn3_b"].reshape(1, -1),
        params["fc2_w"], params["fc2_b"].reshape(1, -1),
        params["bn4_g"].reshape(1, -1), params["bn4_b"].reshape(1, -1),
        params["fc3_w"], params["fc3_b"].reshape(1, -1),
    ]
    return pl.pallas_call(
        _classifier_kernel,
        out_shape=jax.ShapeDtypeStruct((B, OUT), jnp.float32),
        in_specs=[_full_spec(a.shape) for a in args],
        out_specs=_full_spec((B, OUT)),
    )(*args)


# ----------------------------------------------------------------------------
# LeNet forward (3 pallas_calls total)
# ----------------------------------------------------------------------------
@functools.partial(jax.jit, static_argnums=())
def lenet_forward(x_nchw, params):
    x = jnp.transpose(x_nchw, (0, 2, 3, 1)).astype(jnp.float32)   # -> NHWC

    y = conv_bn_relu_pool(x, params["conv1_w"], params["conv1_b"],
                          params["bn1_g"], params["bn1_b"])       # [B,14,14,6]
    y = conv_bn_relu_pool(y, params["conv2_w"], params["conv2_b"],
                          params["bn2_g"], params["bn2_b"])       # [B,5,5,16]

    activation = jnp.transpose(y, (0, 3, 1, 2))                   # NCHW [B,16,5,5]
    flat = activation.reshape(activation.shape[0], -1)            # torch .view order

    out = classifier(flat, params)
    return out, {"activation": [activation]}


# ----------------------------------------------------------------------------
# Pure-JAX reference (for correctness check)
# ----------------------------------------------------------------------------
def _bn_ref(x, g, b, axes):
    mean = jnp.mean(x, axis=axes, keepdims=True)
    var = jnp.mean((x - mean) ** 2, axis=axes, keepdims=True)
    return (x - mean) * lax.rsqrt(var + 1e-5) * g + b


def ref_forward(x, params, output_dim):
    y = lax.conv_general_dilated(
        x, params["conv1_w"], (1, 1), "VALID",
        dimension_numbers=("NCHW", "OIHW", "NCHW")) + params["conv1_b"][None, :, None, None]
    y = jnp.maximum(_bn_ref(y, params["bn1_g"][None, :, None, None],
                            params["bn1_b"][None, :, None, None], (0, 2, 3)), 0.0)
    B, C, H, W = y.shape
    y = y.reshape(B, C, H // 2, 2, W // 2, 2).max(axis=(3, 5))
    y = lax.conv_general_dilated(
        y, params["conv2_w"], (1, 1), "VALID",
        dimension_numbers=("NCHW", "OIHW", "NCHW")) + params["conv2_b"][None, :, None, None]
    y = jnp.maximum(_bn_ref(y, params["bn2_g"][None, :, None, None],
                            params["bn2_b"][None, :, None, None], (0, 2, 3)), 0.0)
    B, C, H, W = y.shape
    y = y.reshape(B, C, H // 2, 2, W // 2, 2).max(axis=(3, 5))
    act = y
    h = act.reshape(B, -1)
    h = h @ params["fc1_w"] + params["fc1_b"]
    h = jnp.maximum(_bn_ref(h, params["bn3_g"], params["bn3_b"], (0,)), 0.0)
    h = h @ params["fc2_w"] + params["fc2_b"]
    h = jnp.maximum(_bn_ref(h, params["bn4_g"], params["bn4_b"], (0,)), 0.0)
    out = h @ params["fc3_w"] + params["fc3_b"]
    return out, act


# ----------------------------------------------------------------------------
# Deterministic parameter init (shapes from LeNet.__init__)
# ----------------------------------------------------------------------------
def init_params(key, output_dim):
    ks = jax.random.split(key, 10)

    def u(k, shape, fan_in):
        s = 1.0 / jnp.sqrt(jnp.float32(fan_in))
        return jax.random.uniform(k, shape, jnp.float32, -1.0, 1.0) * s

    return {
        "conv1_w": u(ks[0], (6, 3, 5, 5), 3 * 25),
        "conv1_b": u(ks[1], (6,), 3 * 25),
        "bn1_g": jnp.ones((6,), jnp.float32), "bn1_b": jnp.zeros((6,), jnp.float32),
        "conv2_w": u(ks[2], (16, 6, 5, 5), 6 * 25),
        "conv2_b": u(ks[3], (16,), 6 * 25),
        "bn2_g": jnp.ones((16,), jnp.float32), "bn2_b": jnp.zeros((16,), jnp.float32),
        "fc1_w": u(ks[4], (400, 120), 400),
        "fc1_b": u(ks[5], (120,), 400),
        "bn3_g": jnp.ones((120,), jnp.float32), "bn3_b": jnp.zeros((120,), jnp.float32),
        "fc2_w": u(ks[6], (120, 84), 120),
        "fc2_b": u(ks[7], (84,), 120),
        "bn4_g": jnp.ones((84,), jnp.float32), "bn4_b": jnp.zeros((84,), jnp.float32),
        "fc3_w": u(ks[8], (84, output_dim), 84),
        "fc3_b": u(ks[9], (output_dim,), 84),
    }


if __name__ == "__main__":
    OUTPUT_DIM = 10
    key = jax.random.PRNGKey(0)
    kx, kp = jax.random.split(key)

    # LeNet is hard-wired to 3x32x32 inputs (classifier expects 16*5*5).
    x = jax.random.normal(kx, (2, 3, 32, 32), jnp.float32)   # NCHW like PyTorch
    params = init_params(kp, OUTPUT_DIM)

    logits, aux = lenet_forward(x, params)
    logits = jax.block_until_ready(logits)
    act = jax.block_until_ready(aux["activation"][0])

    assert logits.shape == (2, OUTPUT_DIM)
    assert act.shape == (2, 16, 5, 5)

    # Sanity-check against a pure-JAX reference.
    ref_logits, ref_act = ref_forward(x, params, OUTPUT_DIM)
    # Feature path: BN averages over thousands of samples, bf16-class tolerance.
    assert jnp.allclose(act, ref_act, atol=5e-2, rtol=5e-2)
    # Classifier BN runs over only B=2 samples; bf16-class differences in the
    # conv path can be amplified when a feature's batch variance is tiny, so
    # the logit check uses a looser tolerance.
    assert jnp.allclose(logits, ref_logits, atol=1e-1, rtol=1e-1)

    print("KERNEL_OK")
</pallas_src>

<mosaic_0001>
module attributes {stable_mosaic.version = 11 : i64} {
  func.func @_conv_stage_kernel(%arg0: memref<4x392x128xbf16, #tpu.memory_space<vmem>>, %arg1: memref<128x6xbf16, #tpu.memory_space<vmem>>, %arg2: memref<1x6xf32, #tpu.memory_space<vmem>>, %arg3: memref<1x6xf32, #tpu.memory_space<vmem>>, %arg4: memref<1x6xf32, #tpu.memory_space<vmem>>, %arg5: memref<392x6xf32, #tpu.memory_space<vmem>>, %arg6: memref<4x392x6xf32, #tpu.memory_space<vmem>>) attributes {dimension_semantics = [], scalar_prefetch = 0 : i64, scratch_operands = 1 : i64, tpu.core_type = #tpu.core_type<tc>} {
    %cst = arith.constant 0.000000e+00 : f32
    %0 = vector.broadcast %cst : f32 to vector<1x6xf32>
    %c0 = arith.constant 0 : index
    %c0_0 = arith.constant 0 : index
    %c0_1 = arith.constant 0 : index
    %1 = vector.load %arg0[%c0, %c0_0, %c0_1] : memref<4x392x128xbf16, #tpu.memory_space<vmem>>, vector<1x392x128xbf16>
    %2 = vector.shape_cast %1 : vector<1x392x128xbf16> to vector<392x128xbf16>
    %c0_2 = arith.constant 0 : index
    %c0_3 = arith.constant 0 : index
    %3 = vector.load %arg1[%c0_2, %c0_3] : memref<128x6xbf16, #tpu.memory_space<vmem>>, vector<128x6xbf16>
    %cst_4 = arith.constant dense<0.000000e+00> : vector<392x6xf32>
    %4 = tpu.matmul %2, %3, %cst_4 {dimension_numbers = #tpu.dot_dimension_numbers<[1], [0], [0], [1], [0, 0, 1, 1], [], []>} : vector<392x128xbf16>, vector<128x6xbf16>, vector<392x6xf32> -> vector<392x6xf32>
    %c0_5 = arith.constant 0 : index
    %c0_6 = arith.constant 0 : index
    %5 = vector.load %arg2[%c0_5, %c0_6] : memref<1x6xf32, #tpu.memory_space<vmem>>, vector<1x6xf32>
    %6 = vector.broadcast %5 : vector<1x6xf32> to vector<392x6xf32>
    %7 = arith.addf %4, %6 : vector<392x6xf32>
    %c0_7 = arith.constant 0 : index
    %c0_8 = arith.constant 0 : index
    %c0_9 = arith.constant 0 : index
    %8 = vector.load %arg6[%c0_7, %c0_8, %c0_9] : memref<4x392x6xf32, #tpu.memory_space<vmem>>, vector<1x392x6xf32>
    %9 = vector.shape_cast %8 : vector<1x392x6xf32> to vector<392x6xf32>
    %10 = vector.shape_cast %7 : vector<392x6xf32> to vector<1x392x6xf32>
    tpu.vector_store %arg6[%c0_7, %c0_8, %c0_9], %10 {strides = array<i32>} : memref<4x392x6xf32, #tpu.memory_space<vmem>>, vector<1x392x6xf32>,
    %cst_10 = arith.constant dense<0.000000e+00> : vector<6xf32>
    %11 = vector.multi_reduction <add>, %7, %cst_10 [0] : vector<392x6xf32> to vector<6xf32>
    %12 = vector.shape_cast %11 : vector<6xf32> to vector<1x6xf32>
    %13 = arith.addf %0, %12 : vector<1x6xf32>
    %c1 = arith.constant 1 : index
    %c0_11 = arith.constant 0 : index
    %c0_12 = arith.constant 0 : index
    %14 = vector.load %arg0[%c1, %c0_11, %c0_12] : memref<4x392x128xbf16, #tpu.memory_space<vmem>>, vector<1x392x128xbf16>
    %15 = vector.shape_cast %14 : vector<1x392x128xbf16> to vector<392x128xbf16>
    %c0_13 = arith.constant 0 : index
    %c0_14 = arith.constant 0 : index
    %16 = vector.load %arg1[%c0_13, %c0_14] : memref<128x6xbf16, #tpu.memory_space<vmem>>, vector<128x6xbf16>
    %cst_15 = arith.constant dense<0.000000e+00> : vector<392x6xf32>
    %17 = tpu.matmul %15, %16, %cst_15 {dimension_numbers = #tpu.dot_dimension_numbers<[1], [0], [0], [1], [0, 0, 1, 1], [], []>} : vector<392x128xbf16>, vector<128x6xbf16>, vector<392x6xf32> -> vector<392x6xf32>
    %c0_16 = arith.constant 0 : index
    %c0_17 = arith.constant 0 : index
    %18 = vector.load %arg2[%c0_16, %c0_17] : memref<1x6xf32, #tpu.memory_space<vmem>>, vector<1x6xf32>
    %19 = vector.broadcast %18 : vector<1x6xf32> to vector<392x6xf32>
    %20 = arith.addf %17, %19 : vector<392x6xf32>
    %c1_18 = arith.constant 1 : index
    %c0_19 = arith.constant 0 : index
    %c0_20 = arith.constant 0 : index
    %21 = vector.load %arg6[%c1_18, %c0_19, %c0_20] : memref<4x392x6xf32, #tpu.memory_space<vmem>>, vector<1x392x6xf32>
    %22 = vector.shape_cast %21 : vector<1x392x6xf32> to vector<392x6xf32>
    %23 = vector.shape_cast %20 : vector<392x6xf32> to vector<1x392x6xf32>
    tpu.vector_store %arg6[%c1_18, %c0_19, %c0_20], %23 {strides = array<i32>} : memref<4x392x6xf32, #tpu.memory_space<vmem>>, vector<1x392x6xf32>,
    %cst_21 = arith.constant dense<0.000000e+00> : vector<6xf32>
    %24 = vector.multi_reduction <add>, %20, %cst_21 [0] : vector<392x6xf32> to vector<6xf32>
    %25 = vector.shape_cast %24 : vector<6xf32> to vector<1x6xf32>
    %26 = arith.addf %13, %25 : vector<1x6xf32>
    %c2 = arith.constant 2 : index
    %c0_22 = arith.constant 0 : index
    %c0_23 = arith.constant 0 : index
    %27 = vector.load %arg0[%c2, %c0_22, %c0_23] : memref<4x392x128xbf16, #tpu.memory_space<vmem>>, vector<1x392x128xbf16>
    %28 = vector.shape_cast %27 : vector<1x392x128xbf16> to vector<392x128xbf16>
    %c0_24 = arith.constant 0 : index
    %c0_25 = arith.constant 0 : index
    %29 = vector.load %arg1[%c0_24, %c0_25] : memref<128x6xbf16, #tpu.memory_space<vmem>>, vector<128x6xbf16>
    %cst_26 = arith.constant dense<0.000000e+00> : vector<392x6xf32>
    %30 = tpu.matmul %28, %29, %cst_26 {dimension_numbers = #tpu.dot_dimension_numbers<[1], [0], [0], [1], [0, 0, 1, 1], [], []>} : vector<392x128xbf16>, vector<128x6xbf16>, vector<392x6xf32> -> vector<392x6xf32>
    %c0_27 = arith.constant 0 : index
    %c0_28 = arith.constant 0 : index
    %31 = vector.load %arg2[%c0_27, %c0_28] : memref<1x6xf32, #tpu.memory_space<vmem>>, vector<1x6xf32>
    %32 = vector.broadcast %31 : vector<1x6xf32> to vector<392x6xf32>
    %33 = arith.addf %30, %32 : vector<392x6xf32>
    %c2_29 = arith.constant 2 : index
    %c0_30 = arith.constant 0 : index
    %c0_31 = arith.constant 0 : index
    %34 = vector.load %arg6[%c2_29, %c0_30, %c0_31] : memref<4x392x6xf32, #tpu.memory_space<vmem>>, vector<1x392x6xf32>
    %35 = vector.shape_cast %34 : vector<1x392x6xf32> to vector<392x6xf32>
    %36 = vector.shape_cast %33 : vector<392x6xf32> to vector<1x392x6xf32>
    tpu.vector_store %arg6[%c2_29, %c0_30, %c0_31], %36 {strides = array<i32>} : memref<4x392x6xf32, #tpu.memory_space<vmem>>, vector<1x392x6xf32>,
    %cst_32 = arith.constant dense<0.000000e+00> : vector<6xf32>
    %37 = vector.multi_reduction <add>, %33, %cst_32 [0] : vector<392x6xf32> to vector<6xf32>
    %38 = vector.shape_cast %37 : vector<6xf32> to vector<1x6xf32>
    %39 = arith.addf %26, %38 : vector<1x6xf32>
    %c3 = arith.constant 3 : index
    %c0_33 = arith.constant 0 : index
    %c0_34 = arith.constant 0 : index
    %40 = vector.load %arg0[%c3, %c0_33, %c0_34] : memref<4x392x128xbf16, #tpu.memory_space<vmem>>, vector<1x392x128xbf16>
    %41 = vector.shape_cast %40 : vector<1x392x128xbf16> to vector<392x128xbf16>
    %c0_35 = arith.constant 0 : index
    %c0_36 = arith.constant 0 : index
    %42 = vector.load %arg1[%c0_35, %c0_36] : memref<128x6xbf16, #tpu.memory_space<vmem>>, vector<128x6xbf16>
    %cst_37 = arith.constant dense<0.000000e+00> : vector<392x6xf32>
    %43 = tpu.matmul %41, %42, %cst_37 {dimension_numbers = #tpu.dot_dimension_numbers<[1], [0], [0], [1], [0, 0, 1, 1], [], []>} : vector<392x128xbf16>, vector<128x6xbf16>, vector<392x6xf32> -> vector<392x6xf32>
    %c0_38 = arith.constant 0 : index
    %c0_39 = arith.constant 0 : index
    %44 = vector.load %arg2[%c0_38, %c0_39] : memref<1x6xf32, #tpu.memory_space<vmem>>, vector<1x6xf32>
    %45 = vector.broadcast %44 : vector<1x6xf32> to vector<392x6xf32>
    %46 = arith.addf %43, %45 : vector<392x6xf32>
    %c3_40 = arith.constant 3 : index
    %c0_41 = arith.constant 0 : index
    %c0_42 = arith.constant 0 : index
    %47 = vector.load %arg6[%c3_40, %c0_41, %c0_42] : memref<4x392x6xf32, #tpu.memory_space<vmem>>, vector<1x392x6xf32>
    %48 = vector.shape_cast %47 : vector<1x392x6xf32> to vector<392x6xf32>
    %49 = vector.shape_cast %46 : vector<392x6xf32> to vector<1x392x6xf32>
    tpu.vector_store %arg6[%c3_40, %c0_41, %c0_42], %49 {strides = array<i32>} : memref<4x392x6xf32, #tpu.memory_space<vmem>>, vector<1x392x6xf32>,
    %cst_43 = arith.constant dense<0.000000e+00> : vector<6xf32>
    %50 = vector.multi_reduction <add>, %46, %cst_43 [0] : vector<392x6xf32> to vector<6xf32>
    %51 = vector.shape_cast %50 : vector<6xf32> to vector<1x6xf32>
    %52 = arith.addf %39, %51 : vector<1x6xf32>
    %cst_44 = arith.constant 6.37755089E-4 : f32
    %53 = vector.broadcast %cst_44 : f32 to vector<1x6xf32>
    %54 = arith.mulf %52, %53 : vector<1x6xf32>
    %cst_45 = arith.constant 0.000000e+00 : f32
    %55 = vector.broadcast %cst_45 : f32 to vector<1x6xf32>
    %c0_46 = arith.constant 0 : index
    %c0_47 = arith.constant 0 : index
    %c0_48 = arith.constant 0 : index
    %56 = vector.load %arg6[%c0_46, %c0_47, %c0_48] : memref<4x392x6xf32, #tpu.memory_space<vmem>>, vector<1x392x6xf32>
    %57 = vector.shape_cast %56 : vector<1x392x6xf32> to vector<392x6xf32>
    %58 = vector.broadcast %54 : vector<1x6xf32> to vector<392x6xf32>
    %59 = arith.subf %57, %58 : vector<392x6xf32>
    %60 = arith.mulf %59, %59 : vector<392x6xf32>
    %cst_49 = arith.constant dense<0.000000e+00> : vector<6xf32>
    %61 = vector.multi_reduction <add>, %60, %cst_49 [0] : vector<392x6xf32> to vector<6xf32>
    %62 = vector.shape_cast %61 : vector<6xf32> to vector<1x6xf32>
    %63 = arith.addf %55, %62 : vector<1x6xf32>
    %c1_50 = arith.constant 1 : index
    %c0_51 = arith.constant 0 : index
    %c0_52 = arith.constant 0 : index
    %64 = vector.load %arg6[%c1_50, %c0_51, %c0_52] : memref<4x392x6xf32, #tpu.memory_space<vmem>>, vector<1x392x6xf32>
    %65 = vector.shape_cast %64 : vector<1x392x6xf32> to vector<392x6xf32>
    %66 = vector.broadcast %54 : vector<1x6xf32> to vector<392x6xf32>
    %67 = arith.subf %65, %66 : vector<392x6xf32>
    %68 = arith.mulf %67, %67 : vector<392x6xf32>
    %cst_53 = arith.constant dense<0.000000e+00> : vector<6xf32>
    %69 = vector.multi_reduction <add>, %68, %cst_53 [0] : vector<392x6xf32> to vector<6xf32>
    %70 = vector.shape_cast %69 : vector<6xf32> to vector<1x6xf32>
    %71 = arith.addf %63, %70 : vector<1x6xf32>
    %c2_54 = arith.constant 2 : index
    %c0_55 = arith.constant 0 : index
    %c0_56 = arith.constant 0 : index
    %72 = vector.load %arg6[%c2_54, %c0_55, %c0_56] : memref<4x392x6xf32, #tpu.memory_space<vmem>>, vector<1x392x6xf32>
    %73 = vector.shape_cast %72 : vector<1x392x6xf32> to vector<392x6xf32>
    %74 = vector.broadcast %54 : vector<1x6xf32> to vector<392x6xf32>
    %75 = arith.subf %73, %74 : vector<392x6xf32>
    %76 = arith.mulf %75, %75 : vector<392x6xf32>
    %cst_57 = arith.constant dense<0.000000e+00> : vector<6xf32>
    %77 = vector.multi_reduction <add>, %76, %cst_57 [0] : vector<392x6xf32> to vector<6xf32>
    %78 = vector.shape_cast %77 : vector<6xf32> to vector<1x6xf32>
    %79 = arith.addf %71, %78 : vector<1x6xf32>
    %c3_58 = arith.constant 3 : index
    %c0_59 = arith.constant 0 : index
    %c0_60 = arith.constant 0 : index
    %80 = vector.load %arg6[%c3_58, %c0_59, %c0_60] : memref<4x392x6xf32, #tpu.memory_space<vmem>>, vector<1x392x6xf32>
    %81 = vector.shape_cast %80 : vector<1x392x6xf32> to vector<392x6xf32>
    %82 = vector.broadcast %54 : vector<1x6xf32> to vector<392x6xf32>
    %83 = arith.subf %81, %82 : vector<392x6xf32>
    %84 = arith.mulf %83, %83 : vector<392x6xf32>
    %cst_61 = arith.constant dense<0.000000e+00> : vector<6xf32>
    %85 = vector.multi_reduction <add>, %84, %cst_61 [0] : vector<392x6xf32> to vector<6xf32>
    %86 = vector.shape_cast %85 : vector<6xf32> to vector<1x6xf32>
    %87 = arith.addf %79, %86 : vector<1x6xf32>
    %cst_62 = arith.constant 6.37755089E-4 : f32
    %88 = vector.broadcast %cst_62 : f32 to vector<1x6xf32>
    %89 = arith.mulf %87, %88 : vector<1x6xf32>
    %c0_63 = arith.constant 0 : index
    %c0_64 = arith.constant 0 : index
    %90 = vector.load %arg3[%c0_63, %c0_64] : memref<1x6xf32, #tpu.memory_space<vmem>>, vector<1x6xf32>
    %cst_65 = arith.constant 9.99999974E-6 : f32
    %91 = vector.broadcast %cst_65 : f32 to vector<1x6xf32>
    %92 = arith.addf %89, %91 : vector<1x6xf32>
    %93 = math.rsqrt %92 : vector<1x6xf32>
    %94 = arith.mulf %90, %93 : vector<1x6xf32>
    %c0_66 = arith.constant 0 : index
    %c0_67 = arith.constant 0 : index
    %95 = vector.load %arg4[%c0_66, %c0_67] : memref<1x6xf32, #tpu.memory_space<vmem>>, vector<1x6xf32>
    %96 = arith.mulf %54, %94 : vector<1x6xf32>
    %97 = arith.subf %95, %96 : vector<1x6xf32>
    %c0_68 = arith.constant 0 : index
    %c0_69 = arith.constant 0 : index
    %c0_70 = arith.constant 0 : index
    %98 = vector.load %arg6[%c0_68, %c0_69, %c0_70] : memref<4x392x6xf32, #tpu.memory_space<vmem>>, vector<1x392x6xf32>
    %99 = vector.shape_cast %98 : vector<1x392x6xf32> to vector<392x6xf32>
    %100 = vector.broadcast %94 : vector<1x6xf32> to vector<392x6xf32>
    %101 = arith.mulf %99, %100 : vector<392x6xf32>
    %102 = vector.broadcast %97 : vector<1x6xf32> to vector<392x6xf32>
    %103 = arith.addf %101, %102 : vector<392x6xf32>
    %cst_71 = arith.constant 0.000000e+00 : f32
    %104 = vector.broadcast %cst_71 : f32 to vector<392x6xf32>
    %105 = arith.maximumf %103, %104 : vector<392x6xf32>
    %c1_72 = arith.constant 1 : index
    %c0_73 = arith.constant 0 : index
    %c0_74 = arith.constant 0 : index
    %106 = vector.load %arg6[%c1_72, %c0_73, %c0_74] : memref<4x392x6xf32, #tpu.memory_space<vmem>>, vector<1x392x6xf32>
    %107 = vector.shape_cast %106 : vector<1x392x6xf32> to vector<392x6xf32>
    %108 = vector.broadcast %94 : vector<1x6xf32> to vector<392x6xf32>
    %109 = arith.mulf %107, %108 : vector<392x6xf32>
    %110 = vector.broadcast %97 : vector<1x6xf32> to vector<392x6xf32>
    %111 = arith.addf %109, %110 : vector<392x6xf32>
    %cst_75 = arith.constant 0.000000e+00 : f32
    %112 = vector.broadcast %cst_75 : f32 to vector<392x6xf32>
    %113 = arith.maximumf %111, %112 : vector<392x6xf32>
    %c2_76 = arith.constant 2 : index
    %c0_77 = arith.constant 0 : index
    %c0_78 = arith.constant 0 : index
    %114 = vector.load %arg6[%c2_76, %c0_77, %c0_78] : memref<4x392x6xf32, #tpu.memory_space<vmem>>, vector<1x392x6xf32>
    %115 = vector.shape_cast %114 : vector<1x392x6xf32> to vector<392x6xf32>
    %116 = vector.broadcast %94 : vector<1x6xf32> to vector<392x6xf32>
    %117 = arith.mulf %115, %116 : vector<392x6xf32>
    %118 = vector.broadcast %97 : vector<1x6xf32> to vector<392x6xf32>
    %119 = arith.addf %117, %118 : vector<392x6xf32>
    %cst_79 = arith.constant 0.000000e+00 : f32
    %120 = vector.broadcast %cst_79 : f32 to vector<392x6xf32>
    %121 = arith.maximumf %119, %120 : vector<392x6xf32>
    %c3_80 = arith.constant 3 : index
    %c0_81 = arith.constant 0 : index
    %c0_82 = arith.constant 0 : index
    %122 = vector.load %arg6[%c3_80, %c0_81, %c0_82] : memref<4x392x6xf32, #tpu.memory_space<vmem>>, vector<1x392x6xf32>
    %123 = vector.shape_cast %122 : vector<1x392x6xf32> to vector<392x6xf32>
    %124 = vector.broadcast %94 : vector<1x6xf32> to vector<392x6xf32>
    %125 = arith.mulf %123, %124 : vector<392x6xf32>
    %126 = vector.broadcast %97 : vector<1x6xf32> to vector<392x6xf32>
    %127 = arith.addf %125, %126 : vector<392x6xf32>
    %cst_83 = arith.constant 0.000000e+00 : f32
    %128 = vector.broadcast %cst_83 : f32 to vector<392x6xf32>
    %129 = arith.maximumf %127, %128 : vector<392x6xf32>
    %130 = arith.maximumf %105, %113 : vector<392x6xf32>
    %131 = arith.maximumf %121, %129 : vector<392x6xf32>
    %132 = arith.maximumf %130, %131 : vector<392x6xf32>
    %c0_84 = arith.constant 0 : index
    %c0_85 = arith.constant 0 : index
    %133 = vector.load %arg5[%c0_84, %c0_85] : memref<392x6xf32, #tpu.memory_space<vmem>>, vector<392x6xf32>
    tpu.vector_store %arg5[%c0_84, %c0_85], %132 {strides = array<i32>} : memref<392x6xf32, #tpu.memory_space<vmem>>, vector<392x6xf32>,
    return
  }
}

module attributes {stable_mosaic.version = 11 : i64} {
  func.func @_conv_stage_kernel(%arg0: memref<4x50x256xbf16, #tpu.memory_space<vmem>>, %arg1: memref<256x16xbf16, #tpu.memory_space<vmem>>, %arg2: memref<1x16xf32, #tpu.memory_space<vmem>>, %arg3: memref<1x16xf32, #tpu.memory_space<vmem>>, %arg4: memref<1x16xf32, #tpu.memory_space<vmem>>, %arg5: memref<50x16xf32, #tpu.memory_space<vmem>>, %arg6: memref<4x50x16xf32, #tpu.memory_space<vmem>>) attributes {dimension_semantics = [], scalar_prefetch = 0 : i64, scratch_operands = 1 : i64, tpu.core_type = #tpu.core_type<tc>} {
    %cst = arith.constant 0.000000e+00 : f32
    %0 = vector.broadcast %cst : f32 to vector<1x16xf32>
    %c0 = arith.constant 0 : index
    %c0_0 = arith.constant 0 : index
    %c0_1 = arith.constant 0 : index
    %1 = vector.load %arg0[%c0, %c0_0, %c0_1] : memref<4x50x256xbf16, #tpu.memory_space<vmem>>, vector<1x50x256xbf16>
    %2 = vector.shape_cast %1 : vector<1x50x256xbf16> to vector<50x256xbf16>
    %c0_2 = arith.constant 0 : index
    %c0_3 = arith.constant 0 : index
    %3 = vector.load %arg1[%c0_2, %c0_3] : memref<256x16xbf16, #tpu.memory_space<vmem>>, vector<256x16xbf16>
    %cst_4 = arith.constant dense<0.000000e+00> : vector<50x16xf32>
    %4 = tpu.matmul %2, %3, %cst_4 {dimension_numbers = #tpu.dot_dimension_numbers<[1], [0], [0], [1], [0, 0, 1, 1], [], []>} : vector<50x256xbf16>, vector<256x16xbf16>, vector<50x16xf32> -> vector<50x16xf32>
    %c0_5 = arith.constant 0 : index
    %c0_6 = arith.constant 0 : index
    %5 = vector.load %arg2[%c0_5, %c0_6] : memref<1x16xf32, #tpu.memory_space<vmem>>, vector<1x16xf32>
    %6 = vector.broadcast %5 : vector<1x16xf32> to vector<50x16xf32>
    %7 = arith.addf %4, %6 : vector<50x16xf32>
    %c0_7 = arith.constant 0 : index
    %c0_8 = arith.constant 0 : index
    %c0_9 = arith.constant 0 : index
    %8 = vector.load %arg6[%c0_7, %c0_8, %c0_9] : memref<4x50x16xf32, #tpu.memory_space<vmem>>, vector<1x50x16xf32>
    %9 = vector.shape_cast %8 : vector<1x50x16xf32> to vector<50x16xf32>
    %10 = vector.shape_cast %7 : vector<50x16xf32> to vector<1x50x16xf32>
    tpu.vector_store %arg6[%c0_7, %c0_8, %c0_9], %10 {strides = array<i32>} : memref<4x50x16xf32, #tpu.memory_space<vmem>>, vector<1x50x16xf32>,
    %cst_10 = arith.constant dense<0.000000e+00> : vector<16xf32>
    %11 = vector.multi_reduction <add>, %7, %cst_10 [0] : vector<50x16xf32> to vector<16xf32>
    %12 = vector.shape_cast %11 : vector<16xf32> to vector<1x16xf32>
    %13 = arith.addf %0, %12 : vector<1x16xf32>
    %c1 = arith.constant 1 : index
    %c0_11 = arith.constant 0 : index
    %c0_12 = arith.constant 0 : index
    %14 = vector.load %arg0[%c1, %c0_11, %c0_12] : memref<4x50x256xbf16, #tpu.memory_space<vmem>>, vector<1x50x256xbf16>
    %15 = vector.shape_cast %14 : vector<1x50x256xbf16> to vector<50x256xbf16>
    %c0_13 = arith.constant 0 : index
    %c0_14 = arith.constant 0 : index
    %16 = vector.load %arg1[%c0_13, %c0_14] : memref<256x16xbf16, #tpu.memory_space<vmem>>, vector<256x16xbf16>
    %cst_15 = arith.constant dense<0.000000e+00> : vector<50x16xf32>
    %17 = tpu.matmul %15, %16, %cst_15 {dimension_numbers = #tpu.dot_dimension_numbers<[1], [0], [0], [1], [0, 0, 1, 1], [], []>} : vector<50x256xbf16>, vector<256x16xbf16>, vector<50x16xf32> -> vector<50x16xf32>
    %c0_16 = arith.constant 0 : index
    %c0_17 = arith.constant 0 : index
    %18 = vector.load %arg2[%c0_16, %c0_17] : memref<1x16xf32, #tpu.memory_space<vmem>>, vector<1x16xf32>
    %19 = vector.broadcast %18 : vector<1x16xf32> to vector<50x16xf32>
    %20 = arith.addf %17, %19 : vector<50x16xf32>
    %c1_18 = arith.constant 1 : index
    %c0_19 = arith.constant 0 : index
    %c0_20 = arith.constant 0 : index
    %21 = vector.load %arg6[%c1_18, %c0_19, %c0_20] : memref<4x50x16xf32, #tpu.memory_space<vmem>>, vector<1x50x16xf32>
    %22 = vector.shape_cast %21 : vector<1x50x16xf32> to vector<50x16xf32>
    %23 = vector.shape_cast %20 : vector<50x16xf32> to vector<1x50x16xf32>
    tpu.vector_store %arg6[%c1_18, %c0_19, %c0_20], %23 {strides = array<i32>} : memref<4x50x16xf32, #tpu.memory_space<vmem>>, vector<1x50x16xf32>,
    %cst_21 = arith.constant dense<0.000000e+00> : vector<16xf32>
    %24 = vector.multi_reduction <add>, %20, %cst_21 [0] : vector<50x16xf32> to vector<16xf32>
    %25 = vector.shape_cast %24 : vector<16xf32> to vector<1x16xf32>
    %26 = arith.addf %13, %25 : vector<1x16xf32>
    %c2 = arith.constant 2 : index
    %c0_22 = arith.constant 0 : index
    %c0_23 = arith.constant 0 : index
    %27 = vector.load %arg0[%c2, %c0_22, %c0_23] : memref<4x50x256xbf16, #tpu.memory_space<vmem>>, vector<1x50x256xbf16>
    %28 = vector.shape_cast %27 : vector<1x50x256xbf16> to vector<50x256xbf16>
    %c0_24 = arith.constant 0 : index
    %c0_25 = arith.constant 0 : index
    %29 = vector.load %arg1[%c0_24, %c0_25] : memref<256x16xbf16, #tpu.memory_space<vmem>>, vector<256x16xbf16>
    %cst_26 = arith.constant dense<0.000000e+00> : vector<50x16xf32>
    %30 = tpu.matmul %28, %29, %cst_26 {dimension_numbers = #tpu.dot_dimension_numbers<[1], [0], [0], [1], [0, 0, 1, 1], [], []>} : vector<50x256xbf16>, vector<256x16xbf16>, vector<50x16xf32> -> vector<50x16xf32>
    %c0_27 = arith.constant 0 : index
    %c0_28 = arith.constant 0 : index
    %31 = vector.load %arg2[%c0_27, %c0_28] : memref<1x16xf32, #tpu.memory_space<vmem>>, vector<1x16xf32>
    %32 = vector.broadcast %31 : vector<1x16xf32> to vector<50x16xf32>
    %33 = arith.addf %30, %32 : vector<50x16xf32>
    %c2_29 = arith.constant 2 : index
    %c0_30 = arith.constant 0 : index
    %c0_31 = arith.constant 0 : index
    %34 = vector.load %arg6[%c2_29, %c0_30, %c0_31] : memref<4x50x16xf32, #tpu.memory_space<vmem>>, vector<1x50x16xf32>
    %35 = vector.shape_cast %34 : vector<1x50x16xf32> to vector<50x16xf32>
    %36 = vector.shape_cast %33 : vector<50x16xf32> to vector<1x50x16xf32>
    tpu.vector_store %arg6[%c2_29, %c0_30, %c0_31], %36 {strides = array<i32>} : memref<4x50x16xf32, #tpu.memory_space<vmem>>, vector<1x50x16xf32>,
    %cst_32 = arith.constant dense<0.000000e+00> : vector<16xf32>
    %37 = vector.multi_reduction <add>, %33, %cst_32 [0] : vector<50x16xf32> to vector<16xf32>
    %38 = vector.shape_cast %37 : vector<16xf32> to vector<1x16xf32>
    %39 = arith.addf %26, %38 : vector<1x16xf32>
    %c3 = arith.constant 3 : index
    %c0_33 = arith.constant 0 : index
    %c0_34 = arith.constant 0 : index
    %40 = vector.load %arg0[%c3, %c0_33, %c0_34] : memref<4x50x256xbf16, #tpu.memory_space<vmem>>, vector<1x50x256xbf16>
    %41 = vector.shape_cast %40 : vector<1x50x256xbf16> to vector<50x256xbf16>
    %c0_35 = arith.constant 0 : index
    %c0_36 = arith.constant 0 : index
    %42 = vector.load %arg1[%c0_35, %c0_36] : memref<256x16xbf16, #tpu.memory_space<vmem>>, vector<256x16xbf16>
    %cst_37 = arith.constant dense<0.000000e+00> : vector<50x16xf32>
    %43 = tpu.matmul %41, %42, %cst_37 {dimension_numbers = #tpu.dot_dimension_numbers<[1], [0], [0], [1], [0, 0, 1, 1], [], []>} : vector<50x256xbf16>, vector<256x16xbf16>, vector<50x16xf32> -> vector<50x16xf32>
    %c0_38 = arith.constant 0 : index
    %c0_39 = arith.constant 0 : index
    %44 = vector.load %arg2[%c0_38, %c0_39] : memref<1x16xf32, #tpu.memory_space<vmem>>, vector<1x16xf32>
    %45 = vector.broadcast %44 : vector<1x16xf32> to vector<50x16xf32>
    %46 = arith.addf %43, %45 : vector<50x16xf32>
    %c3_40 = arith.constant 3 : index
    %c0_41 = arith.constant 0 : index
    %c0_42 = arith.constant 0 : index
    %47 = vector.load %arg6[%c3_40, %c0_41, %c0_42] : memref<4x50x16xf32, #tpu.memory_space<vmem>>, vector<1x50x16xf32>
    %48 = vector.shape_cast %47 : vector<1x50x16xf32> to vector<50x16xf32>
    %49 = vector.shape_cast %46 : vector<50x16xf32> to vector<1x50x16xf32>
    tpu.vector_store %arg6[%c3_40, %c0_41, %c0_42], %49 {strides = array<i32>} : memref<4x50x16xf32, #tpu.memory_space<vmem>>, vector<1x50x16xf32>,
    %cst_43 = arith.constant dense<0.000000e+00> : vector<16xf32>
    %50 = vector.multi_reduction <add>, %46, %cst_43 [0] : vector<50x16xf32> to vector<16xf32>
    %51 = vector.shape_cast %50 : vector<16xf32> to vector<1x16xf32>
    %52 = arith.addf %39, %51 : vector<1x16xf32>
    %cst_44 = arith.constant 5.000000e-03 : f32
    %53 = vector.broadcast %cst_44 : f32 to vector<1x16xf32>
    %54 = arith.mulf %52, %53 : vector<1x16xf32>
    %cst_45 = arith.constant 0.000000e+00 : f32
    %55 = vector.broadcast %cst_45 : f32 to vector<1x16xf32>
    %c0_46 = arith.constant 0 : index
    %c0_47 = arith.constant 0 : index
    %c0_48 = arith.constant 0 : index
    %56 = vector.load %arg6[%c0_46, %c0_47, %c0_48] : memref<4x50x16xf32, #tpu.memory_space<vmem>>, vector<1x50x16xf32>
    %57 = vector.shape_cast %56 : vector<1x50x16xf32> to vector<50x16xf32>
    %58 = vector.broadcast %54 : vector<1x16xf32> to vector<50x16xf32>
    %59 = arith.subf %57, %58 : vector<50x16xf32>
    %60 = arith.mulf %59, %59 : vector<50x16xf32>
    %cst_49 = arith.constant dense<0.000000e+00> : vector<16xf32>
    %61 = vector.multi_reduction <add>, %60, %cst_49 [0] : vector<50x16xf32> to vector<16xf32>
    %62 = vector.shape_cast %61 : vector<16xf32> to vector<1x16xf32>
    %63 = arith.addf %55, %62 : vector<1x16xf32>
    %c1_50 = arith.constant 1 : index
    %c0_51 = arith.constant 0 : index
    %c0_52 = arith.constant 0 : index
    %64 = vector.load %arg6[%c1_50, %c0_51, %c0_52] : memref<4x50x16xf32, #tpu.memory_space<vmem>>, vector<1x50x16xf32>
    %65 = vector.shape_cast %64 : vector<1x50x16xf32> to vector<50x16xf32>
    %66 = vector.broadcast %54 : vector<1x16xf32> to vector<50x16xf32>
    %67 = arith.subf %65, %66 : vector<50x16xf32>
    %68 = arith.mulf %67, %67 : vector<50x16xf32>
    %cst_53 = arith.constant dense<0.000000e+00> : vector<16xf32>
    %69 = vector.multi_reduction <add>, %68, %cst_53 [0] : vector<50x16xf32> to vector<16xf32>
    %70 = vector.shape_cast %69 : vector<16xf32> to vector<1x16xf32>
    %71 = arith.addf %63, %70 : vector<1x16xf32>
    %c2_54 = arith.constant 2 : index
    %c0_55 = arith.constant 0 : index
    %c0_56 = arith.constant 0 : index
    %72 = vector.load %arg6[%c2_54, %c0_55, %c0_56] : memref<4x50x16xf32, #tpu.memory_space<vmem>>, vector<1x50x16xf32>
    %73 = vector.shape_cast %72 : vector<1x50x16xf32> to vector<50x16xf32>
    %74 = vector.broadcast %54 : vector<1x16xf32> to vector<50x16xf32>
    %75 = arith.subf %73, %74 : vector<50x16xf32>
    %76 = arith.mulf %75, %75 : vector<50x16xf32>
    %cst_57 = arith.constant dense<0.000000e+00> : vector<16xf32>
    %77 = vector.multi_reduction <add>, %76, %cst_57 [0] : vector<50x16xf32> to vector<16xf32>
    %78 = vector.shape_cast %77 : vector<16xf32> to vector<1x16xf32>
    %79 = arith.addf %71, %78 : vector<1x16xf32>
    %c3_58 = arith.constant 3 : index
    %c0_59 = arith.constant 0 : index
    %c0_60 = arith.constant 0 : index
    %80 = vector.load %arg6[%c3_58, %c0_59, %c0_60] : memref<4x50x16xf32, #tpu.memory_space<vmem>>, vector<1x50x16xf32>
    %81 = vector.shape_cast %80 : vector<1x50x16xf32> to vector<50x16xf32>
    %82 = vector.broadcast %54 : vector<1x16xf32> to vector<50x16xf32>
    %83 = arith.subf %81, %82 : vector<50x16xf32>
    %84 = arith.mulf %83, %83 : vector<50x16xf32>
    %cst_61 = arith.constant dense<0.000000e+00> : vector<16xf32>
    %85 = vector.multi_reduction <add>, %84, %cst_61 [0] : vector<50x16xf32> to vector<16xf32>
    %86 = vector.shape_cast %85 : vector<16xf32> to vector<1x16xf32>
    %87 = arith.addf %79, %86 : vector<1x16xf32>
    %cst_62 = arith.constant 5.000000e-03 : f32
    %88 = vector.broadcast %cst_62 : f32 to vector<1x16xf32>
    %89 = arith.mulf %87, %88 : vector<1x16xf32>
    %c0_63 = arith.constant 0 : index
    %c0_64 = arith.constant 0 : index
    %90 = vector.load %arg3[%c0_63, %c0_64] : memref<1x16xf32, #tpu.memory_space<vmem>>, vector<1x16xf32>
    %cst_65 = arith.constant 9.99999974E-6 : f32
    %91 = vector.broadcast %cst_65 : f32 to vector<1x16xf32>
    %92 = arith.addf %89, %91 : vector<1x16xf32>
    %93 = math.rsqrt %92 : vector<1x16xf32>
    %94 = arith.mulf %90, %93 : vector<1x16xf32>
    %c0_66 = arith.constant 0 : index
    %c0_67 = arith.constant 0 : index
    %95 = vector.load %arg4[%c0_66, %c0_67] : memref<1x16xf32, #tpu.memory_space<vmem>>, vector<1x16xf32>
    %96 = arith.mulf %54, %94 : vector<1x16xf32>
    %97 = arith.subf %95, %96 : vector<1x16xf32>
    %c0_68 = arith.constant 0 : index
    %c0_69 = arith.constant 0 : index
    %c0_70 = arith.constant 0 : index
    %98 = vector.load %arg6[%c0_68, %c0_69, %c0_70] : memref<4x50x16xf32, #tpu.memory_space<vmem>>, vector<1x50x16xf32>
    %99 = vector.shape_cast %98 : vector<1x50x16xf32> to vector<50x16xf32>
    %100 = vector.broadcast %94 : vector<1x16xf32> to vector<50x16xf32>
    %101 = arith.mulf %99, %100 : vector<50x16xf32>
    %102 = vector.broadcast %97 : vector<1x16xf32> to vector<50x16xf32>
    %103 = arith.addf %101, %102 : vector<50x16xf32>
    %cst_71 = arith.constant 0.000000e+00 : f32
    %104 = vector.broadcast %cst_71 : f32 to vector<50x16xf32>
    %105 = arith.maximumf %103, %104 : vector<50x16xf32>
    %c1_72 = arith.constant 1 : index
    %c0_73 = arith.constant 0 : index
    %c0_74 = arith.constant 0 : index
    %106 = vector.load %arg6[%c1_72, %c0_73, %c0_74] : memref<4x50x16xf32, #tpu.memory_space<vmem>>, vector<1x50x16xf32>
    %107 = vector.shape_cast %106 : vector<1x50x16xf32> to vector<50x16xf32>
    %108 = vector.broadcast %94 : vector<1x16xf32> to vector<50x16xf32>
    %109 = arith.mulf %107, %108 : vector<50x16xf32>
    %110 = vector.broadcast %97 : vector<1x16xf32> to vector<50x16xf32>
    %111 = arith.addf %109, %110 : vector<50x16xf32>
    %cst_75 = arith.constant 0.000000e+00 : f32
    %112 = vector.broadcast %cst_75 : f32 to vector<50x16xf32>
    %113 = arith.maximumf %111, %112 : vector<50x16xf32>
    %c2_76 = arith.constant 2 : index
    %c0_77 = arith.constant 0 : index
    %c0_78 = arith.constant 0 : index
    %114 = vector.load %arg6[%c2_76, %c0_77, %c0_78] : memref<4x50x16xf32, #tpu.memory_space<vmem>>, vector<1x50x16xf32>
    %115 = vector.shape_cast %114 : vector<1x50x16xf32> to vector<50x16xf32>
    %116 = vector.broadcast %94 : vector<1x16xf32> to vector<50x16xf32>
    %117 = arith.mulf %115, %116 : vector<50x16xf32>
    %118 = vector.broadcast %97 : vector<1x16xf32> to vector<50x16xf32>
    %119 = arith.addf %117, %118 : vector<50x16xf32>
    %cst_79 = arith.constant 0.000000e+00 : f32
    %120 = vector.broadcast %cst_79 : f32 to vector<50x16xf32>
    %121 = arith.maximumf %119, %120 : vector<50x16xf32>
    %c3_80 = arith.constant 3 : index
    %c0_81 = arith.constant 0 : index
    %c0_82 = arith.constant 0 : index
    %122 = vector.load %arg6[%c3_80, %c0_81, %c0_82] : memref<4x50x16xf32, #tpu.memory_space<vmem>>, vector<1x50x16xf32>
    %123 = vector.shape_cast %122 : vector<1x50x16xf32> to vector<50x16xf32>
    %124 = vector.broadcast %94 : vector<1x16xf32> to vector<50x16xf32>
    %125 = arith.mulf %123, %124 : vector<50x16xf32>
    %126 = vector.broadcast %97 : vector<1x16xf32> to vector<50x16xf32>
    %127 = arith.addf %125, %126 : vector<50x16xf32>
    %cst_83 = arith.constant 0.000000e+00 : f32
    %128 = vector.broadcast %cst_83 : f32 to vector<50x16xf32>
    %129 = arith.maximumf %127, %128 : vector<50x16xf32>
    %130 = arith.maximumf %105, %113 : vector<50x16xf32>
    %131 = arith.maximumf %121, %129 : vector<50x16xf32>
    %132 = arith.maximumf %130, %131 : vector<50x16xf32>
    %c0_84 = arith.constant 0 : index
    %c0_85 = arith.constant 0 : index
    %133 = vector.load %arg5[%c0_84, %c0_85] : memref<50x16xf32, #tpu.memory_space<vmem>>, vector<50x16xf32>
    tpu.vector_store %arg5[%c0_84, %c0_85], %132 {strides = array<i32>} : memref<50x16xf32, #tpu.memory_space<vmem>>, vector<50x16xf32>,
    return
  }
}

module attributes {stable_mosaic.version = 11 : i64} {
  func.func @_classifier_kernel(%arg0: memref<2x400xf32, #tpu.memory_space<vmem>>, %arg1: memref<400x120xf32, #tpu.memory_space<vmem>>, %arg2: memref<1x120xf32, #tpu.memory_space<vmem>>, %arg3: memref<1x120xf32, #tpu.memory_space<vmem>>, %arg4: memref<1x120xf32, #tpu.memory_space<vmem>>, %arg5: memref<120x84xf32, #tpu.memory_space<vmem>>, %arg6: memref<1x84xf32, #tpu.memory_space<vmem>>, %arg7: memref<1x84xf32, #tpu.memory_space<vmem>>, %arg8: memref<1x84xf32, #tpu.memory_space<vmem>>, %arg9: memref<84x10xf32, #tpu.memory_space<vmem>>, %arg10: memref<1x10xf32, #tpu.memory_space<vmem>>, %arg11: memref<2x10xf32, #tpu.memory_space<vmem>>) attributes {dimension_semantics = [], scalar_prefetch = 0 : i64, scratch_operands = 0 : i64, tpu.core_type = #tpu.core_type<tc>} {
    %c0 = arith.constant 0 : index
    %c0_0 = arith.constant 0 : index
    %0 = vector.load %arg0[%c0, %c0_0] : memref<2x400xf32, #tpu.memory_space<vmem>>, vector<2x400xf32>
    %c0_1 = arith.constant 0 : index
    %c0_2 = arith.constant 0 : index
    %1 = vector.load %arg1[%c0_1, %c0_2] : memref<400x120xf32, #tpu.memory_space<vmem>>, vector<400x120xf32>
    %cst = arith.constant dense<0.000000e+00> : vector<2x120xf32>
    %2 = tpu.matmul %0, %1, %cst {dimension_numbers = #tpu.dot_dimension_numbers<[1], [0], [0], [1], [0, 0, 1, 1], [], []>} : vector<2x400xf32>, vector<400x120xf32>, vector<2x120xf32> -> vector<2x120xf32>
    %c0_3 = arith.constant 0 : index
    %c0_4 = arith.constant 0 : index
    %3 = vector.load %arg2[%c0_3, %c0_4] : memref<1x120xf32, #tpu.memory_space<vmem>>, vector<1x120xf32>
    %4 = vector.broadcast %3 : vector<1x120xf32> to vector<2x120xf32>
    %5 = arith.addf %2, %4 : vector<2x120xf32>
    %c0_5 = arith.constant 0 : index
    %c0_6 = arith.constant 0 : index
    %6 = vector.load %arg3[%c0_5, %c0_6] : memref<1x120xf32, #tpu.memory_space<vmem>>, vector<1x120xf32>
    %c0_7 = arith.constant 0 : index
    %c0_8 = arith.constant 0 : index
    %7 = vector.load %arg4[%c0_7, %c0_8] : memref<1x120xf32, #tpu.memory_space<vmem>>, vector<1x120xf32>
    %cst_9 = arith.constant dense<0.000000e+00> : vector<120xf32>
    %8 = vector.multi_reduction <add>, %5, %cst_9 [0] : vector<2x120xf32> to vector<120xf32>
    %9 = vector.shape_cast %8 : vector<120xf32> to vector<1x120xf32>
    %cst_10 = arith.constant 2.000000e+00 : f32
    %10 = vector.broadcast %cst_10 : f32 to vector<1x120xf32>
    %11 = arith.divf %9, %10 : vector<1x120xf32>
    %12 = vector.broadcast %11 : vector<1x120xf32> to vector<2x120xf32>
    %13 = arith.subf %5, %12 : vector<2x120xf32>
    %14 = arith.mulf %13, %13 : vector<2x120xf32>
    %cst_11 = arith.constant dense<0.000000e+00> : vector<120xf32>
    %15 = vector.multi_reduction <add>, %14, %cst_11 [0] : vector<2x120xf32> to vector<120xf32>
    %16 = vector.shape_cast %15 : vector<120xf32> to vector<1x120xf32>
    %cst_12 = arith.constant 2.000000e+00 : f32
    %17 = vector.broadcast %cst_12 : f32 to vector<1x120xf32>
    %18 = arith.divf %16, %17 : vector<1x120xf32>
    %19 = vector.broadcast %11 : vector<1x120xf32> to vector<2x120xf32>
    %20 = arith.subf %5, %19 : vector<2x120xf32>
    %cst_13 = arith.constant 9.99999974E-6 : f32
    %21 = vector.broadcast %cst_13 : f32 to vector<1x120xf32>
    %22 = arith.addf %18, %21 : vector<1x120xf32>
    %23 = math.rsqrt %22 : vector<1x120xf32>
    %24 = vector.broadcast %23 : vector<1x120xf32> to vector<2x120xf32>
    %25 = arith.mulf %20, %24 : vector<2x120xf32>
    %26 = vector.broadcast %6 : vector<1x120xf32> to vector<2x120xf32>
    %27 = arith.mulf %25, %26 : vector<2x120xf32>
    %28 = vector.broadcast %7 : vector<1x120xf32> to vector<2x120xf32>
    %29 = arith.addf %27, %28 : vector<2x120xf32>
    %cst_14 = arith.constant 0.000000e+00 : f32
    %30 = vector.broadcast %cst_14 : f32 to vector<2x120xf32>
    %31 = arith.maximumf %29, %30 : vector<2x120xf32>
    %c0_15 = arith.constant 0 : index
    %c0_16 = arith.constant 0 : index
    %32 = vector.load %arg5[%c0_15, %c0_16] : memref<120x84xf32, #tpu.memory_space<vmem>>, vector<120x84xf32>
    %cst_17 = arith.constant dense<0.000000e+00> : vector<2x84xf32>
    %33 = tpu.matmul %31, %32, %cst_17 {dimension_numbers = #tpu.dot_dimension_numbers<[1], [0], [0], [1], [0, 0, 1, 1], [], []>} : vector<2x120xf32>, vector<120x84xf32>, vector<2x84xf32> -> vector<2x84xf32>
    %c0_18 = arith.constant 0 : index
    %c0_19 = arith.constant 0 : index
    %34 = vector.load %arg6[%c0_18, %c0_19] : memref<1x84xf32, #tpu.memory_space<vmem>>, vector<1x84xf32>
    %35 = vector.broadcast %34 : vector<1x84xf32> to vector<2x84xf32>
    %36 = arith.addf %33, %35 : vector<2x84xf32>
    %c0_20 = arith.constant 0 : index
    %c0_21 = arith.constant 0 : index
    %37 = vector.load %arg7[%c0_20, %c0_21] : memref<1x84xf32, #tpu.memory_space<vmem>>, vector<1x84xf32>
    %c0_22 = arith.constant 0 : index
    %c0_23 = arith.constant 0 : index
    %38 = vector.load %arg8[%c0_22, %c0_23] : memref<1x84xf32, #tpu.memory_space<vmem>>, vector<1x84xf32>
    %cst_24 = arith.constant dense<0.000000e+00> : vector<84xf32>
    %39 = vector.multi_reduction <add>, %36, %cst_24 [0] : vector<2x84xf32> to vector<84xf32>
    %40 = vector.shape_cast %39 : vector<84xf32> to vector<1x84xf32>
    %cst_25 = arith.constant 2.000000e+00 : f32
    %41 = vector.broadcast %cst_25 : f32 to vector<1x84xf32>
    %42 = arith.divf %40, %41 : vector<1x84xf32>
    %43 = vector.broadcast %42 : vector<1x84xf32> to vector<2x84xf32>
    %44 = arith.subf %36, %43 : vector<2x84xf32>
    %45 = arith.mulf %44, %44 : vector<2x84xf32>
    %cst_26 = arith.constant dense<0.000000e+00> : vector<84xf32>
    %46 = vector.multi_reduction <add>, %45, %cst_26 [0] : vector<2x84xf32> to vector<84xf32>
    %47 = vector.shape_cast %46 : vector<84xf32> to vector<1x84xf32>
    %cst_27 = arith.constant 2.000000e+00 : f32
    %48 = vector.broadcast %cst_27 : f32 to vector<1x84xf32>
    %49 = arith.divf %47, %48 : vector<1x84xf32>
    %50 = vector.broadcast %42 : vector<1x84xf32> to vector<2x84xf32>
    %51 = arith.subf %36, %50 : vector<2x84xf32>
    %cst_28 = arith.constant 9.99999974E-6 : f32
    %52 = vector.broadcast %cst_28 : f32 to vector<1x84xf32>
    %53 = arith.addf %49, %52 : vector<1x84xf32>
    %54 = math.rsqrt %53 : vector<1x84xf32>
    %55 = vector.broadcast %54 : vector<1x84xf32> to vector<2x84xf32>
    %56 = arith.mulf %51, %55 : vector<2x84xf32>
    %57 = vector.broadcast %37 : vector<1x84xf32> to vector<2x84xf32>
    %58 = arith.mulf %56, %57 : vector<2x84xf32>
    %59 = vector.broadcast %38 : vector<1x84xf32> to vector<2x84xf32>
    %60 = arith.addf %58, %59 : vector<2x84xf32>
    %cst_29 = arith.constant 0.000000e+00 : f32
    %61 = vector.broadcast %cst_29 : f32 to vector<2x84xf32>
    %62 = arith.maximumf %60, %61 : vector<2x84xf32>
    %c0_30 = arith.constant 0 : index
    %c0_31 = arith.constant 0 : index
    %63 = vector.load %arg9[%c0_30, %c0_31] : memref<84x10xf32, #tpu.memory_space<vmem>>, vector<84x10xf32>
    %cst_32 = arith.constant dense<0.000000e+00> : vector<2x10xf32>
    %64 = tpu.matmul %62, %63, %cst_32 {dimension_numbers = #tpu.dot_dimension_numbers<[1], [0], [0], [1], [0, 0, 1, 1], [], []>} : vector<2x84xf32>, vector<84x10xf32>, vector<2x10xf32> -> vector<2x10xf32>
    %c0_33 = arith.constant 0 : index
    %c0_34 = arith.constant 0 : index
    %65 = vector.load %arg10[%c0_33, %c0_34] : memref<1x10xf32, #tpu.memory_space<vmem>>, vector<1x10xf32>
    %66 = vector.broadcast %65 : vector<1x10xf32> to vector<2x10xf32>
    %67 = arith.addf %64, %66 : vector<2x10xf32>
    %c0_35 = arith.constant 0 : index
    %c0_36 = arith.constant 0 : index
    %68 = vector.load %arg11[%c0_35, %c0_36] : memref<2x10xf32, #tpu.memory_space<vmem>>, vector<2x10xf32>
    tpu.vector_store %arg11[%c0_35, %c0_36], %67 {strides = array<i32>} : memref<2x10xf32, #tpu.memory_space<vmem>>, vector<2x10xf32>,
    return
  }
}

</mosaic_0001>

<llo_original>
// kernel: lenet_forward.3
$region0: #{lenet_forward.3}
  #allocation0 [shape = 'u32[]', space=smem, size = 0x4, offset = 0x4, fixed_abs, tag = 'smem constant byte address 0x4 - core index']
  #allocation1 [shape = 'u32[72,128]{1,0:T(1,128)}', space=vmem, size = 0x9000, scoped, tag = 'internal scratch']
  #allocation2 [shape = 'f32[4,392,6]{2,1,0:T(8,128)}', space=vmem, size = 0xc4000, scoped, tag = 'scratch operand']
  %s0 = inlined_call_operand.vmem [shape: bf16[4,392,128], index: 0, kind: input, shape index: {}]
  %s1 = inlined_call_operand.vmem [shape: bf16[128,6], index: 1, kind: input, shape index: {}]
  %s2 = inlined_call_operand.vmem [shape: f32[1,6], index: 2, kind: input, shape index: {}]
  %s3 = inlined_call_operand.vmem [shape: f32[1,6], index: 3, kind: input, shape index: {}]
  %s4 = inlined_call_operand.vmem [shape: f32[1,6], index: 4, kind: input, shape index: {}]
  %s5 = inlined_call_operand.vmem [shape: f32[392,6], index: 5, kind: output, shape index: {}]
  %s6 = sld [smem:[#allocation0]]
  $region30: #{lenet_forward.3} parent=0
    _
  %s8 = ssub.s32 1, %s6
  %s9 = scalar_select 0, %s8, %s6
  // Predicated region
  $region2: #{lenet_forward.3} parent=0 // pred_check
    _
  $region3: #{lenet_forward.3} parent=0 // pred_check_branch
    %11 = sbr.rel (0) target = $region5
  $region4: #{lenet_forward.3} parent=0 // pred_region
    _
  $region5: #{lenet_forward.3} parent=0 // pred_fallthru
    _
  // Predicated region
  $region6: #{lenet_forward.3} parent=0 // pred_check
    _
  $region7: #{lenet_forward.3} parent=0 // pred_check_branch
    %13 = sbr.rel (0) target = $region9
  $region8: #{lenet_forward.3} parent=0 // pred_region
    _
  $region9: #{lenet_forward.3} parent=0 // pred_fallthru
    _
  // Predicated region
  $region10: #{lenet_forward.3} parent=0 // pred_check
    _
  $region11: #{lenet_forward.3} parent=0 // pred_check_branch
    %15 = sbr.rel (0) target = $region13
  $region12: #{lenet_forward.3} parent=0 // pred_region
    _
  $region13: #{lenet_forward.3} parent=0 // pred_fallthru
    _
  // Predicated region
  $region14: #{lenet_forward.3} parent=0 // pred_check
    _
  $region15: #{lenet_forward.3} parent=0 // pred_check_branch
    %17 = sbr.rel (0) target = $region17
  $region16: #{lenet_forward.3} parent=0 // pred_region
    _
  $region17: #{lenet_forward.3} parent=0 // pred_fallthru
    _
  // Predicated region
  $region18: #{lenet_forward.3} parent=0 // pred_check
    _
  $region19: #{lenet_forward.3} parent=0 // pred_check_branch
    %19 = sbr.rel (0) target = $region21
  $region20: #{lenet_forward.3} parent=0 // pred_region
    _
  $region21: #{lenet_forward.3} parent=0 // pred_fallthru
    _
  %v20 = vld [vmem:[%s0] sm:$0xf]
  %v21 = vld [vmem:[%s0 + $0x4] sm:$0xf]
  %v22 = vld [vmem:[%s0 + $0x8] sm:$0xf]
  %v23 = vld [vmem:[%s0 + $0xc] sm:$0xf]
  %v24 = vld [vmem:[%s0 + $0x10] sm:$0xf]
  %v25 = vld [vmem:[%s0 + $0x14] sm:$0xf]
  %v26 = vld [vmem:[%s0 + $0x18] sm:$0xf]
  %v27 = vld [vmem:[%s0 + $0x1c] sm:$0xf]
  %v28 = vld [vmem:[%s0 + $0x20] sm:$0xf]
  %v29 = vld [vmem:[%s0 + $0x24] sm:$0xf]
  %v30 = vld [vmem:[%s0 + $0x28] sm:$0xf]
  %v31 = vld [vmem:[%s0 + $0x2c] sm:$0xf]
  %v32 = vld [vmem:[%s0 + $0x30] sm:$0xf]
  %v33 = vld [vmem:[%s0 + $0x34] sm:$0xf]
  %v34 = vld [vmem:[%s0 + $0x38] sm:$0xf]
  %v35 = vld [vmem:[%s0 + $0x3c] sm:$0xf]
  %v36 = vld [vmem:[%s0 + $0x40] sm:$0xf]
  %v37 = vld [vmem:[%s0 + $0x44] sm:$0xf]
  %v38 = vld [vmem:[%s0 + $0x48] sm:$0xf]
  %v39 = vld [vmem:[%s0 + $0x4c] sm:$0xf]
  %v40 = vld [vmem:[%s0 + $0x50] sm:$0xf]
  %v41 = vld [vmem:[%s0 + $0x54] sm:$0xf]
  %v42 = vld [vmem:[%s0 + $0x58] sm:$0xf]
  %v43 = vld [vmem:[%s0 + $0x5c] sm:$0xf]
  %v44 = vld [vmem:[%s0 + $0x60] sm:$0xf]
  %v45 = vld [vmem:[%s0 + $0x64] sm:$0xf]
  %v46 = vld [vmem:[%s0 + $0x68] sm:$0xf]
  %v47 = vld [vmem:[%s0 + $0x6c] sm:$0xf]
  %v48 = vld [vmem:[%s0 + $0x70] sm:$0xf]
  %v49 = vld [vmem:[%s0 + $0x74] sm:$0xf]
  %v50 = vld [vmem:[%s0 + $0x78] sm:$0xf]
  %v51 = vld [vmem:[%s0 + $0x7c] sm:$0xf]
  %v52 = vld [vmem:[%s0 + $0x80] sm:$0xf]
  %v53 = vld [vmem:[%s0 + $0x84] sm:$0xf]
  %v54 = vld [vmem:[%s0 + $0x88] sm:$0xf]
  %v55 = vld [vmem:[%s0 + $0x8c] sm:$0xf]
  %v56 = vld [vmem:[%s0 + $0x90] sm:$0xf]
  %v57 = vld [vmem:[%s0 + $0x94] sm:$0xf]
  %v58 = vld [vmem:[%s0 + $0x98] sm:$0xf]
  %v59 = vld [vmem:[%s0 + $0x9c] sm:$0xf]
  %v60 = vld [vmem:[%s0 + $0xa0] sm:$0xf]
  %v61 = vld [vmem:[%s0 + $0xa4] sm:$0xf]
  %v62 = vld [vmem:[%s0 + $0xa8] sm:$0xf]
  %v63 = vld [vmem:[%s0 + $0xac] sm:$0xf]
  %v64 = vld [vmem:[%s0 + $0xb0] sm:$0xf]
  %v65 = vld [vmem:[%s0 + $0xb4] sm:$0xf]
  %v66 = vld [vmem:[%s0 + $0xb8] sm:$0xf]
  %v67 = vld [vmem:[%s0 + $0xbc] sm:$0xf]
  %v68 = vld [vmem:[%s0 + $0xc0] sm:$0xf]
  %v69 = vld [vmem:[%s1] sm:$0xf]
  %v70 = vld [vmem:[%s1 + $0x4] sm:$0xf]
  %v71 = vld [vmem:[%s1 + $0x8] sm:$0xf]
  %v72 = vld [vmem:[%s1 + $0xc] sm:$0xf]
  %v73 = vld [vmem:[%s1 + $0x10] sm:$0xf]
  %v74 = vld [vmem:[%s1 + $0x14] sm:$0xf]
  %v75 = vld [vmem:[%s1 + $0x18] sm:$0xf]
  %v76 = vld [vmem:[%s1 + $0x1c] sm:$0xf]
  %v77 = vld [vmem:[%s1 + $0x20] sm:$0xf]
  %v78 = vld [vmem:[%s1 + $0x24] sm:$0xf]
  %v79 = vld [vmem:[%s1 + $0x28] sm:$0xf]
  %v80 = vld [vmem:[%s1 + $0x2c] sm:$0xf]
  %v81 = vld [vmem:[%s1 + $0x30] sm:$0xf]
  %v82 = vld [vmem:[%s1 + $0x34] sm:$0xf]
  %v83 = vld [vmem:[%s1 + $0x38] sm:$0xf]
  %v84 = vld [vmem:[%s1 + $0x3c] sm:$0xf]
  %v85 = vld [vmem:[%s2] sm:$0x1]
  %v87 = vperm.slane %v85, 0
  %v138 = vunpack.c.l.b16 %v20
  %v139 = vunpack.c.l.b16 %v21
  %v140 = vunpack.c.l.b16 %v22
  %v141 = vunpack.c.l.b16 %v23
  %v142 = vunpack.c.l.b16 %v24
  %v143 = vunpack.c.l.b16 %v25
  %v144 = vunpack.c.l.b16 %v26
  %v145 = vunpack.c.l.b16 %v27
  %v146 = vunpack.c.l.b16 %v28
  %v147 = vunpack.c.l.b16 %v29
  %v148 = vunpack.c.l.b16 %v30
  %v149 = vunpack.c.l.b16 %v31
  %v150 = vunpack.c.l.b16 %v32
  %v151 = vunpack.c.l.b16 %v33
  %v152 = vunpack.c.l.b16 %v34
  %v153 = vunpack.c.l.b16 %v35
  %v154 = vunpack.c.l.b16 %v36
  %v155 = vunpack.c.l.b16 %v37
  %v156 = vunpack.c.l.b16 %v38
  %v157 = vunpack.c.l.b16 %v39
  %v158 = vunpack.c.l.b16 %v40
  %v159 = vunpack.c.l.b16 %v41
  %v160 = vunpack.c.l.b16 %v42
  %v161 = vunpack.c.l.b16 %v43
  %v162 = vunpack.c.l.b16 %v44
  %v163 = vunpack.c.l.b16 %v45
  %v164 = vunpack.c.l.b16 %v46
  %v165 = vunpack.c.l.b16 %v47
  %v166 = vunpack.c.l.b16 %v48
  %v167 = vunpack.c.l.b16 %v49
  %v168 = vunpack.c.l.b16 %v50
  %v169 = vunpack.c.l.b16 %v51
  %v170 = vunpack.c.l.b16 %v52
  %v171 = vunpack.c.l.b16 %v53
  %v172 = vunpack.c.l.b16 %v54
  %v173 = vunpack.c.l.b16 %v55
  %v174 = vunpack.c.l.b16 %v56
  %v175 = vunpack.c.l.b16 %v57
  %v176 = vunpack.c.l.b16 %v58
  %v177 = vunpack.c.l.b16 %v59
  %v178 = vunpack.c.l.b16 %v60
  %v179 = vunpack.c.l.b16 %v61
  %v180 = vunpack.c.l.b16 %v62
  %v181 = vunpack.c.l.b16 %v63
  %v182 = vunpack.c.l.b16 %v64
  %v183 = vunpack.c.l.b16 %v65
  %v184 = vunpack.c.l.b16 %v66
  %v185 = vunpack.c.l.b16 %v67
  %v186 = vunpack.c.l.b16 %v68
  %v187 = vpack.c.b16 %v139, %v138
  %v188 = vpack.c.b16 %v141, %v140
  %v189 = vpack.c.b16 %v143, %v142
  %v190 = vpack.c.b16 %v145, %v144
  %v191 = vpack.c.b16 %v147, %v146
  %v192 = vpack.c.b16 %v149, %v148
  %v193 = vpack.c.b16 %v151, %v150
  %v194 = vpack.c.b16 %v153, %v152
  %v195 = vpack.c.b16 %v155, %v154
  %v196 = vpack.c.b16 %v157, %v156
  %v197 = vpack.c.b16 %v159, %v158
  %v198 = vpack.c.b16 %v161, %v160
  %v199 = vpack.c.b16 %v163, %v162
  %v200 = vpack.c.b16 %v165, %v164
  %v201 = vpack.c.b16 %v167, %v166
  %v202 = vpack.c.b16 %v169, %v168
  %v203 = vpack.c.b16 %v171, %v170
  %v204 = vpack.c.b16 %v173, %v172
  %v205 = vpack.c.b16 %v175, %v174
  %v206 = vpack.c.b16 %v177, %v176
  %v207 = vpack.c.b16 %v179, %v178
  %v208 = vpack.c.b16 %v181, %v180
  %v209 = vpack.c.b16 %v183, %v182
  %v210 = vpack.c.b16 %v185, %v184
  %v211 = vpack.c.b16 %v186, %v186
  %v253 = vunpack.c.l.b16 %v69
  %v254 = vunpack.c.l.b16 %v70
  %v255 = vunpack.c.l.b16 %v71
  %v256 = vunpack.c.l.b16 %v72
  %v257 = vunpack.c.l.b16 %v73
  %v258 = vunpack.c.l.b16 %v74
  %v259 = vunpack.c.l.b16 %v75
  %v260 = vunpack.c.l.b16 %v76
  %v261 = vunpack.c.l.b16 %v77
  %v262 = vunpack.c.l.b16 %v78
  %v263 = vunpack.c.l.b16 %v79
  %v264 = vunpack.c.l.b16 %v80
  %v265 = vunpack.c.l.b16 %v81
  %v266 = vunpack.c.l.b16 %v82
  %v267 = vunpack.c.l.b16 %v83
  %v268 = vunpack.c.l.b16 %v84
  %v269 = vpack.c.b16 %v254, %v253
  %v270 = vpack.c.b16 %v256, %v255
  %v271 = vpack.c.b16 %v258, %v257
  %v272 = vpack.c.b16 %v260, %v259
  %v273 = vpack.c.b16 %v262, %v261
  %v274 = vpack.c.b16 %v264, %v263
  %v275 = vpack.c.b16 %v266, %v265
  %v276 = vpack.c.b16 %v268, %v267
  %285 = vmatpush.bf16.msra.mxu0 %v276
  %286 = vmatpush.bf16.msra.mxu0 %v275
  %287 = vmatpush.bf16.msra.mxu0 %v274
  %288 = vmatpush.bf16.msra.mxu0 %v273
  %289 = vmatpush.bf16.msra.mxu0 %v272
  %290 = vmatpush.bf16.msra.mxu0 %v271
  %291 = vmatpush.bf16.msra.mxu0 %v270
  %292 = vmatpush.bf16.msra.mxu0 %v269
  %293 = vmatmul.bf16.gmra.mxu0 %v187
  %v294 = vpop.f32.mrf.mxu0
  %v295 = vadd.f32 %v87, %v294
  %v296 = vpop.f32.mrf.mxu0
  %v297 = vadd.f32 %v87, %v296
  %298 = vmatmul.bf16.gmra.mxu0 %v188
  %v299 = vpop.f32.mrf.mxu0
  %v300 = vadd.f32 %v87, %v299
  %v301 = vpop.f32.mrf.mxu0
  %v302 = vadd.f32 %v87, %v301
  %303 = vmatmul.bf16.gmra.mxu0 %v189
  %v304 = vpop.f32.mrf.mxu0
  %v305 = vadd.f32 %v87, %v304
  %v306 = vpop.f32.mrf.mxu0
  %v307 = vadd.f32 %v87, %v306
  %308 = vmatmul.bf16.gmra.mxu0 %v190
  %v309 = vpop.f32.mrf.mxu0
  %v310 = vadd.f32 %v87, %v309
  %v311 = vpop.f32.mrf.mxu0
  %v312 = vadd.f32 %v87, %v311
  %313 = vmatmul.bf16.gmra.mxu0 %v191
  %v314 = vpop.f32.mrf.mxu0
  %v315 = vadd.f32 %v87, %v314
  %v316 = vpop.f32.mrf.mxu0
  %v317 = vadd.f32 %v87, %v316
  %318 = vmatmul.bf16.gmra.mxu0 %v192
  %v319 = vpop.f32.mrf.mxu0
  %v320 = vadd.f32 %v87, %v319
  %v321 = vpop.f32.mrf.mxu0
  %v322 = vadd.f32 %v87, %v321
  %323 = vmatmul.bf16.gmra.mxu0 %v193
  %v324 = vpop.f32.mrf.mxu0
  %v325 = vadd.f32 %v87, %v324
  %v326 = vpop.f32.mrf.mxu0
  %v327 = vadd.f32 %v87, %v326
  %328 = vmatmul.bf16.gmra.mxu0 %v194
  %v329 = vpop.f32.mrf.mxu0
  %v330 = vadd.f32 %v87, %v329
  %v331 = vpop.f32.mrf.mxu0
  %v332 = vadd.f32 %v87, %v331
  %333 = vmatmul.bf16.gmra.mxu0 %v195
  %v334 = vpop.f32.mrf.mxu0
  %v335 = vadd.f32 %v87, %v334
  %v336 = vpop.f32.mrf.mxu0
  %v337 = vadd.f32 %v87, %v336
  %338 = vmatmul.bf16.gmra.mxu0 %v196
  %v339 = vpop.f32.mrf.mxu0
  %v340 = vadd.f32 %v87, %v339
  %v341 = vpop.f32.mrf.mxu0
  %v342 = vadd.f32 %v87, %v341
  %343 = vmatmul.bf16.gmra.mxu0 %v197
  %v344 = vpop.f32.mrf.mxu0
  %v345 = vadd.f32 %v87, %v344
  %v346 = vpop.f32.mrf.mxu0
  %v347 = vadd.f32 %v87, %v346
  %348 = vmatmul.bf16.gmra.mxu0 %v198
  %v349 = vpop.f32.mrf.mxu0
  %v350 = vadd.f32 %v87, %v349
  %v351 = vpop.f32.mrf.mxu0
  %v352 = vadd.f32 %v87, %v351
  %353 = vmatmul.bf16.gmra.mxu0 %v199
  %v354 = vpop.f32.mrf.mxu0
  %v355 = vadd.f32 %v87, %v354
  %v356 = vpop.f32.mrf.mxu0
  %v357 = vadd.f32 %v87, %v356
  %358 = vmatmul.bf16.gmra.mxu0 %v200
  %v359 = vpop.f32.mrf.mxu0
  %v360 = vadd.f32 %v87, %v359
  %v361 = vpop.f32.mrf.mxu0
  %v362 = vadd.f32 %v87, %v361
  %363 = vmatmul.bf16.gmra.mxu0 %v201
  %v364 = vpop.f32.mrf.mxu0
  %v365 = vadd.f32 %v87, %v364
  %v366 = vpop.f32.mrf.mxu0
  %v367 = vadd.f32 %v87, %v366
  %368 = vmatmul.bf16.gmra.mxu0 %v202
  %v369 = vpop.f32.mrf.mxu0
  %v370 = vadd.f32 %v87, %v369
  %v371 = vpop.f32.mrf.mxu0
  %v372 = vadd.f32 %v87, %v371
  %373 = vmatmul.bf16.gmra.mxu0 %v203
  %v374 = vpop.f32.mrf.mxu0
  %v375 = vadd.f32 %v87, %v374
  %v376 = vpop.f32.mrf.mxu0
  %v377 = vadd.f32 %v87, %v376
  %378 = vmatmul.bf16.gmra.mxu0 %v204
  %v379 = vpop.f32.mrf.mxu0
  %v380 = vadd.f32 %v87, %v379
  %v381 = vpop.f32.mrf.mxu0
  %v382 = vadd.f32 %v87, %v381
  %383 = vmatmul.bf16.gmra.mxu0 %v205
  %v384 = vpop.f32.mrf.mxu0
  %v385 = vadd.f32 %v87, %v384
  %v386 = vpop.f32.mrf.mxu0
  %v387 = vadd.f32 %v87, %v386
  %388 = vmatmul.bf16.gmra.mxu0 %v206
  %v389 = vpop.f32.mrf.mxu0
  %v390 = vadd.f32 %v87, %v389
  %v391 = vpop.f32.mrf.mxu0
  %v392 = vadd.f32 %v87, %v391
  %393 = vmatmul.bf16.gmra.mxu0 %v207
  %v394 = vpop.f32.mrf.mxu0
  %v395 = vadd.f32 %v87, %v394
  %v396 = vpop.f32.mrf.mxu0
  %v397 = vadd.f32 %v87, %v396
  %398 = vmatmul.bf16.gmra.mxu0 %v208
  %v399 = vpop.f32.mrf.mxu0
  %v400 = vadd.f32 %v87, %v399
  %v401 = vpop.f32.mrf.mxu0
  %v402 = vadd.f32 %v87, %v401
  %403 = vmatmul.bf16.gmra.mxu0 %v209
  %v404 = vpop.f32.mrf.mxu0
  %v405 = vadd.f32 %v87, %v404
  %v406 = vpop.f32.mrf.mxu0
  %v407 = vadd.f32 %v87, %v406
  %408 = vmatmul.bf16.gmra.mxu0 %v210
  %v409 = vpop.f32.mrf.mxu0
  %v410 = vadd.f32 %v87, %v409
  %v411 = vpop.f32.mrf.mxu0
  %v412 = vadd.f32 %v87, %v411
  %413 = vmatmul.bf16.gmra.mxu0 %v211
  %v414 = vpop.f32.mrf.mxu0
  %v415 = vadd.f32 %v87, %v414
  %v416 = vpop.f32.mrf.mxu0
  %417 = vdwg.mxu0
  %vm418 = vcmask 48128
  %419 = vst.msk [vmem:[#allocation2] sm:$0xff] %vm418, %v295
  %420 = vst.msk [vmem:[#allocation2 + $0x8] sm:$0xff] %vm418, %v297
  %421 = vst.msk [vmem:[#allocation2 + $0x10] sm:$0xff] %vm418, %v300
  %422 = vst.msk [vmem:[#allocation2 + $0x18] sm:$0xff] %vm418, %v302
  %423 = vst.msk [vmem:[#allocation2 + $0x20] sm:$0xff] %vm418, %v305
  %424 = vst.msk [vmem:[#allocation2 + $0x28] sm:$0xff] %vm418, %v307
  %425 = vst.msk [vmem:[#allocation2 + $0x30] sm:$0xff] %vm418, %v310
  %426 = vst.msk [vmem:[#allocation2 + $0x38] sm:$0xff] %vm418, %v312
  %427 = vst.msk [vmem:[#allocation2 + $0x40] sm:$0xff] %vm418, %v315
  %428 = vst.msk [vmem:[#allocation2 + $0x48] sm:$0xff] %vm418, %v317
  %429 = vst.msk [vmem:[#allocation2 + $0x50] sm:$0xff] %vm418, %v320
  %430 = vst.msk [vmem:[#allocation2 + $0x58] sm:$0xff] %vm418, %v322
  %431 = vst.msk [vmem:[#allocation2 + $0x60] sm:$0xff] %vm418, %v325
  %432 = vst.msk [vmem:[#allocation2 + $0x68] sm:$0xff] %vm418, %v327
  %433 = vst.msk [vmem:[#allocation2 + $0x70] sm:$0xff] %vm418, %v330
  %434 = vst.msk [vmem:[#allocation2 + $0x78] sm:$0xff] %vm418, %v332
  %435 = vst.msk [vmem:[#allocation2 + $0x80] sm:$0xff] %vm418, %v335
  %436 = vst.msk [vmem:[#allocation2 + $0x88] sm:$0xff] %vm418, %v337
  %437 = vst.msk [vmem:[#allocation2 + $0x90] sm:$0xff] %vm418, %v340
  %438 = vst.msk [vmem:[#allocation2 + $0x98] sm:$0xff] %vm418, %v342
  %439 = vst.msk [vmem:[#allocation2 + $0xa0] sm:$0xff] %vm418, %v345
  %440 = vst.msk [vmem:[#allocation2 + $0xa8] sm:$0xff] %vm418, %v347
  %441 = vst.msk [vmem:[#allocation2 + $0xb0] sm:$0xff] %vm418, %v350
  %442 = vst.msk [vmem:[#allocation2 + $0xb8] sm:$0xff] %vm418, %v352
  %443 = vst.msk [vmem:[#allocation2 + $0xc0] sm:$0xff] %vm418, %v355
  %444 = vst.msk [vmem:[#allocation2 + $0xc8] sm:$0xff] %vm418, %v357
  %445 = vst.msk [vmem:[#allocation2 + $0xd0] sm:$0xff] %vm418, %v360
  %446 = vst.msk [vmem:[#allocation2 + $0xd8] sm:$0xff] %vm418, %v362
  %447 = vst.msk [vmem:[#allocation2 + $0xe0] sm:$0xff] %vm418, %v365
  %448 = vst.msk [vmem:[#allocation2 + $0xe8] sm:$0xff] %vm418, %v367
  %449 = vst.msk [vmem:[#allocation2 + $0xf0] sm:$0xff] %vm418, %v370
  %450 = vst.msk [vmem:[#allocation2 + $0xf8] sm:$0xff] %vm418, %v372
  %451 = vst.msk [vmem:[#allocation2 + $0x100] sm:$0xff] %vm418, %v375
  %452 = vst.msk [vmem:[#allocation2 + $0x108] sm:$0xff] %vm418, %v377
  %453 = vst.msk [vmem:[#allocation2 + $0x110] sm:$0xff] %vm418, %v380
  %454 = vst.msk [vmem:[#allocation2 + $0x118] sm:$0xff] %vm418, %v382
  %455 = vst.msk [vmem:[#allocation2 + $0x120] sm:$0xff] %vm418, %v385
  %456 = vst.msk [vmem:[#allocation2 + $0x128] sm:$0xff] %vm418, %v387
  %457 = vst.msk [vmem:[#allocation2 + $0x130] sm:$0xff] %vm418, %v390
  %458 = vst.msk [vmem:[#allocation2 + $0x138] sm:$0xff] %vm418, %v392
  %459 = vst.msk [vmem:[#allocation2 + $0x140] sm:$0xff] %vm418, %v395
  %460 = vst.msk [vmem:[#allocation2 + $0x148] sm:$0xff] %vm418, %v397
  %461 = vst.msk [vmem:[#allocation2 + $0x150] sm:$0xff] %vm418, %v400
  %462 = vst.msk [vmem:[#allocation2 + $0x158] sm:$0xff] %vm418, %v402
  %463 = vst.msk [vmem:[#allocation2 + $0x160] sm:$0xff] %vm418, %v405
  %464 = vst.msk [vmem:[#allocation2 + $0x168] sm:$0xff] %vm418, %v407
  %465 = vst.msk [vmem:[#allocation2 + $0x170] sm:$0xff] %vm418, %v410
  %466 = vst.msk [vmem:[#allocation2 + $0x178] sm:$0xff] %vm418, %v412
  %467 = vst.msk [vmem:[#allocation2 + $0x180] sm:$0xff] %vm418, %v415
  %v468 = vsel %vm418, %v295, 0.0
  %v469 = vsel %vm418, %v297, 0.0
  %v470 = vadd.f32 %v468, %v469
  %v471 = vsel %vm418, %v300, 0.0
  %v472 = vadd.f32 %v470, %v471
  %v473 = vsel %vm418, %v302, 0.0
  %v474 = vadd.f32 %v472, %v473
  %v475 = vsel %vm418, %v305, 0.0
  %v476 = vadd.f32 %v474, %v475
  %v477 = vsel %vm418, %v307, 0.0
  %v478 = vadd.f32 %v476, %v477
  %v479 = vsel %vm418, %v310, 0.0
  %v480 = vadd.f32 %v478, %v479
  %v481 = vsel %vm418, %v312, 0.0
  %v482 = vadd.f32 %v480, %v481
  %v483 = vsel %vm418, %v315, 0.0
  %v484 = vadd.f32 %v482, %v483
  %v485 = vsel %vm418, %v317, 0.0
  %v486 = vadd.f32 %v484, %v485
  %v487 = vsel %vm418, %v320, 0.0
  %v488 = vadd.f32 %v486, %v487
  %v489 = vsel %vm418, %v322, 0.0
  %v490 = vadd.f32 %v488, %v489
  %v491 = vsel %vm418, %v325, 0.0
  %v492 = vadd.f32 %v490, %v491
  %v493 = vsel %vm418, %v327, 0.0
  %v494 = vadd.f32 %v492, %v493
  %v495 = vsel %vm418, %v330, 0.0
  %v496 = vadd.f32 %v494, %v495
  %v497 = vsel %vm418, %v332, 0.0
  %v498 = vadd.f32 %v496, %v497
  %v499 = vsel %vm418, %v335, 0.0
  %v500 = vadd.f32 %v498, %v499
  %v501 = vsel %vm418, %v337, 0.0
  %v502 = vadd.f32 %v500, %v501
  %v503 = vsel %vm418, %v340, 0.0
  %v504 = vadd.f32 %v502, %v503
  %v505 = vsel %vm418, %v342, 0.0
  %v506 = vadd.f32 %v504, %v505
  %v507 = vsel %vm418, %v345, 0.0
  %v508 = vadd.f32 %v506, %v507
  %v509 = vsel %vm418, %v347, 0.0
  %v510 = vadd.f32 %v508, %v509
  %v511 = vsel %vm418, %v350, 0.0
  %v512 = vadd.f32 %v510, %v511
  %v513 = vsel %vm418, %v352, 0.0
  %v514 = vadd.f32 %v512, %v513
  %v515 = vsel %vm418, %v355, 0.0
  %v516 = vadd.f32 %v514, %v515
  %v517 = vsel %vm418, %v357, 0.0
  %v518 = vadd.f32 %v516, %v517
  %v519 = vsel %vm418, %v360, 0.0
  %v520 = vadd.f32 %v518, %v519
  %v521 = vsel %vm418, %v362, 0.0
  %v522 = vadd.f32 %v520, %v521
  %v523 = vsel %vm418, %v365, 0.0
  %v524 = vadd.f32 %v522, %v523
  %v525 = vsel %vm418, %v367, 0.0
  %v526 = vadd.f32 %v524, %v525
  %v527 = vsel %vm418, %v370, 0.0
  %v528 = vadd.f32 %v526, %v527
  %v529 = vsel %vm418, %v372, 0.0
  %v530 = vadd.f32 %v528, %v529
  %v531 = vsel %vm418, %v375, 0.0
  %v532 = vadd.f32 %v530, %v531
  %v533 = vsel %vm418, %v377, 0.0
  %v534 = vadd.f32 %v532, %v533
  %v535 = vsel %vm418, %v380, 0.0
  %v536 = vadd.f32 %v534, %v535
  %v537 = vsel %vm418, %v382, 0.0
  %v538 = vadd.f32 %v536, %v537
  %v539 = vsel %vm418, %v385, 0.0
  %v540 = vadd.f32 %v538, %v539
  %v541 = vsel %vm418, %v387, 0.0
  %v542 = vadd.f32 %v540, %v541
  %v543 = vsel %vm418, %v390, 0.0
  %v544 = vadd.f32 %v542, %v543
  %v545 = vsel %vm418, %v392, 0.0
  %v546 = vadd.f32 %v544, %v545
  %v547 = vsel %vm418, %v395, 0.0
  %v548 = vadd.f32 %v546, %v547
  %v549 = vsel %vm418, %v397, 0.0
  %v550 = vadd.f32 %v548, %v549
  %v551 = vsel %vm418, %v400, 0.0
  %v552 = vadd.f32 %v550, %v551
  %v553 = vsel %vm418, %v402, 0.0
  %v554 = vadd.f32 %v552, %v553
  %v555 = vsel %vm418, %v405, 0.0
  %v556 = vadd.f32 %v554, %v555
  %v557 = vsel %vm418, %v407, 0.0
  %v558 = vadd.f32 %v556, %v557
  %v559 = vsel %vm418, %v410, 0.0
  %v560 = vadd.f32 %v558, %v559
  %v561 = vsel %vm418, %v412, 0.0
  %v562 = vadd.f32 %v560, %v561
  %v563 = vsel %vm418, %v415, 0.0
  %v564 = vadd.f32 %v562, %v563
  %v565 = vrot.slane %v564, 4
  %v566 = vadd.f32 %v564, %v565
  %v567 = vrot.slane %v566, 2
  %v568 = vadd.f32 %v566, %v567
  %v569 = vrot.slane %v568, 1
  %v570 = vadd.f32 %v568, %v569
  %v571 = vadd.f32 %v570, 0.0
  %s572 = scalar_lea.vmem %s0, 196
  %v573 = vld [vmem:[%s572] sm:$0xf]
  %v574 = vld [vmem:[%s572 + $0x4] sm:$0xf]
  %v575 = vld [vmem:[%s572 + $0x8] sm:$0xf]
  %v576 = vld [vmem:[%s572 + $0xc] sm:$0xf]
  %v577 = vld [vmem:[%s572 + $0x10] sm:$0xf]
  %v578 = vld [vmem:[%s572 + $0x14] sm:$0xf]
  %v579 = vld [vmem:[%s572 + $0x18] sm:$0xf]
  %v580 = vld [vmem:[%s572 + $0x1c] sm:$0xf]
  %v581 = vld [vmem:[%s572 + $0x20] sm:$0xf]
  %v582 = vld [vmem:[%s572 + $0x24] sm:$0xf]
  %v583 = vld [vmem:[%s572 + $0x28] sm:$0xf]
  %v584 = vld [vmem:[%s572 + $0x2c] sm:$0xf]
  %v585 = vld [vmem:[%s572 + $0x30] sm:$0xf]
  %v586 = vld [vmem:[%s572 + $0x34] sm:$0xf]
  %v587 = vld [vmem:[%s572 + $0x38] sm:$0xf]
  %v588 = vld [vmem:[%s572 + $0x3c] sm:$0xf]
  %v589 = vld [vmem:[%s572 + $0x40] sm:$0xf]
  %v590 = vld [vmem:[%s572 + $0x44] sm:$0xf]
  %v591 = vld [vmem:[%s572 + $0x48] sm:$0xf]
  %v592 = vld [vmem:[%s572 + $0x4c] sm:$0xf]
  %v593 = vld [vmem:[%s572 + $0x50] sm:$0xf]
  %v594 = vld [vmem:[%s572 + $0x54] sm:$0xf]
  %v595 = vld [vmem:[%s572 + $0x58] sm:$0xf]
  %v596 = vld [vmem:[%s572 + $0x5c] sm:$0xf]
  %v597 = vld [vmem:[%s572 + $0x60] sm:$0xf]
  %v598 = vld [vmem:[%s572 + $0x64] sm:$0xf]
  %v599 = vld [vmem:[%s572 + $0x68] sm:$0xf]
  %v600 = vld [vmem:[%s572 + $0x6c] sm:$0xf]
  %v601 = vld [vmem:[%s572 + $0x70] sm:$0xf]
  %v602 = vld [vmem:[%s572 + $0x74] sm:$0xf]
  %v603 = vld [vmem:[%s572 + $0x78] sm:$0xf]
  %v604 = vld [vmem:[%s572 + $0x7c] sm:$0xf]
  %v605 = vld [vmem:[%s572 + $0x80] sm:$0xf]
  %v606 = vld [vmem:[%s572 + $0x84] sm:$0xf]
  %v607 = vld [vmem:[%s572 + $0x88] sm:$0xf]
  %v608 = vld [vmem:[%s572 + $0x8c] sm:$0xf]
  %v609 = vld [vmem:[%s572 + $0x90] sm:$0xf]
  %v610 = vld [vmem:[%s572 + $0x94] sm:$0xf]
  %v611 = vld [vmem:[%s572 + $0x98] sm:$0xf]
  %v612 = vld [vmem:[%s572 + $0x9c] sm:$0xf]
  %v613 = vld [vmem:[%s572 + $0xa0] sm:$0xf]
  %v614 = vld [vmem:[%s572 + $0xa4] sm:$0xf]
  %v615 = vld [vmem:[%s572 + $0xa8] sm:$0xf]
  %v616 = vld [vmem:[%s572 + $0xac] sm:$0xf]
  %v617 = vld [vmem:[%s572 + $0xb0] sm:$0xf]
  %v618 = vld [vmem:[%s572 + $0xb4] sm:$0xf]
  %v619 = vld [vmem:[%s572 + $0xb8] sm:$0xf]
  %v620 = vld [vmem:[%s572 + $0xbc] sm:$0xf]
  %v621 = vld [vmem:[%s572 + $0xc0] sm:$0xf]
  %v622 = vld [vmem:[%s1] sm:$0xf]
  %v623 = vld [vmem:[%s1 + $0x4] sm:$0xf]
  %v624 = vld [vmem:[%s1 + $0x8] sm:$0xf]
  %v625 = vld [vmem:[%s1 + $0xc] sm:$0xf]
  %v626 = vld [vmem:[%s1 + $0x10] sm:$0xf]
  %v627 = vld [vmem:[%s1 + $0x14] sm:$0xf]
  %v628 = vld [vmem:[%s1 + $0x18] sm:$0xf]
  %v629 = vld [vmem:[%s1 + $0x1c] sm:$0xf]
  %v630 = vld [vmem:[%s1 + $0x20] sm:$0xf]
  %v631 = vld [vmem:[%s1 + $0x24] sm:$0xf]
  %v632 = vld [vmem:[%s1 + $0x28] sm:$0xf]
  %v633 = vld [vmem:[%s1 + $0x2c] sm:$0xf]
  %v634 = vld [vmem:[%s1 + $0x30] sm:$0xf]
  %v635 = vld [vmem:[%s1 + $0x34] sm:$0xf]
  %v636 = vld [vmem:[%s1 + $0x38] sm:$0xf]
  %v637 = vld [vmem:[%s1 + $0x3c] sm:$0xf]
  %v638 = vld [vmem:[%s2] sm:$0x1]
  %v640 = vperm.slane %v638, 0
  %v691 = vunpack.c.l.b16 %v573
  %v692 = vunpack.c.l.b16 %v574
  %v693 = vunpack.c.l.b16 %v575
  %v694 = vunpack.c.l.b16 %v576
  %v695 = vunpack.c.l.b16 %v577
  %v696 = vunpack.c.l.b16 %v578
  %v697 = vunpack.c.l.b16 %v579
  %v698 = vunpack.c.l.b16 %v580
  %v699 = vunpack.c.l.b16 %v581
  %v700 = vunpack.c.l.b16 %v582
  %v701 = vunpack.c.l.b16 %v583
  %v702 = vunpack.c.l.b16 %v584
  %v703 = vunpack.c.l.b16 %v585
  %v704 = vunpack.c.l.b16 %v586
  %v705 = vunpack.c.l.b16 %v587
  %v706 = vunpack.c.l.b16 %v588
  %v707 = vunpack.c.l.b16 %v589
  %v708 = vunpack.c.l.b16 %v590
  %v709 = vunpack.c.l.b16 %v591
  %v710 = vunpack.c.l.b16 %v592
  %v711 = vunpack.c.l.b16 %v593
  %v712 = vunpack.c.l.b16 %v594
  %v713 = vunpack.c.l.b16 %v595
  %v714 = vunpack.c.l.b16 %v596
  %v715 = vunpack.c.l.b16 %v597
  %v716 = vunpack.c.l.b16 %v598
  %v717 = vunpack.c.l.b16 %v599
  %v718 = vunpack.c.l.b16 %v600
  %v719 = vunpack.c.l.b16 %v601
  %v720 = vunpack.c.l.b16 %v602
  %v721 = vunpack.c.l.b16 %v603
  %v722 = vunpack.c.l.b16 %v604
  %v723 = vunpack.c.l.b16 %v605
  %v724 = vunpack.c.l.b16 %v606
  %v725 = vunpack.c.l.b16 %v607
  %v726 = vunpack.c.l.b16 %v608
  %v727 = vunpack.c.l.b16 %v609
  %v728 = vunpack.c.l.b16 %v610
  %v729 = vunpack.c.l.b16 %v611
  %v730 = vunpack.c.l.b16 %v612
  %v731 = vunpack.c.l.b16 %v613
  %v732 = vunpack.c.l.b16 %v614
  %v733 = vunpack.c.l.b16 %v615
  %v734 = vunpack.c.l.b16 %v616
  %v735 = vunpack.c.l.b16 %v617
  %v736 = vunpack.c.l.b16 %v618
  %v737 = vunpack.c.l.b16 %v619
  %v738 = vunpack.c.l.b16 %v620
  %v739 = vunpack.c.l.b16 %v621
  %v740 = vpack.c.b16 %v692, %v691
  %v741 = vpack.c.b16 %v694, %v693
  %v742 = vpack.c.b16 %v696, %v695
  %v743 = vpack.c.b16 %v698, %v697
  %v744 = vpack.c.b16 %v700, %v699
  %v745 = vpack.c.b16 %v702, %v701
  %v746 = vpack.c.b16 %v704, %v703
  %v747 = vpack.c.b16 %v706, %v705
  %v748 = vpack.c.b16 %v708, %v707
  %v749 = vpack.c.b16 %v710, %v709
  %v750 = vpack.c.b16 %v712, %v711
  %v751 = vpack.c.b16 %v714, %v713
  %v752 = vpack.c.b16 %v716, %v715
  %v753 = vpack.c.b16 %v718, %v717
  %v754 = vpack.c.b16 %v720, %v719
  %v755 = vpack.c.b16 %v722, %v721
  %v756 = vpack.c.b16 %v724, %v723
  %v757 = vpack.c.b16 %v726, %v725
  %v758 = vpack.c.b16 %v728, %v727
  %v759 = vpack.c.b16 %v730, %v729
  %v760 = vpack.c.b16 %v732, %v731
  %v761 = vpack.c.b16 %v734, %v733
  %v762 = vpack.c.b16 %v736, %v735
  %v763 = vpack.c.b16 %v738, %v737
  %v764 = vpack.c.b16 %v739, %v739
  %v806 = vunpack.c.l.b16 %v622
  %v807 = vunpack.c.l.b16 %v623
  %v808 = vunpack.c.l.b16 %v624
  %v809 = vunpack.c.l.b16 %v625
  %v810 = vunpack.c.l.b16 %v626
  %v811 = vunpack.c.l.b16 %v627
  %v812 = vunpack.c.l.b16 %v628
  %v813 = vunpack.c.l.b16 %v629
  %v814 = vunpack.c.l.b16 %v630
  %v815 = vunpack.c.l.b16 %v631
  %v816 = vunpack.c.l.b16 %v632
  %v817 = vunpack.c.l.b16 %v633
  %v818 = vunpack.c.l.b16 %v634
  %v819 = vunpack.c.l.b16 %v635
  %v820 = vunpack.c.l.b16 %v636
  %v821 = vunpack.c.l.b16 %v637
  %v822 = vpack.c.b16 %v807, %v806
  %v823 = vpack.c.b16 %v809, %v808
  %v824 = vpack.c.b16 %v811, %v810
  %v825 = vpack.c.b16 %v813, %v812
  %v826 = vpack.c.b16 %v815, %v814
  %v827 = vpack.c.b16 %v817, %v816
  %v828 = vpack.c.b16 %v819, %v818
  %v829 = vpack.c.b16 %v821, %v820
  %838 = vmatpush.bf16.msra.mxu0 %v829
  %839 = vmatpush.bf16.msra.mxu0 %v828
  %840 = vmatpush.bf16.msra.mxu0 %v827
  %841 = vmatpush.bf16.msra.mxu0 %v826
  %842 = vmatpush.bf16.msra.mxu0 %v825
  %843 = vmatpush.bf16.msra.mxu0 %v824
  %844 = vmatpush.bf16.msra.mxu0 %v823
  %845 = vmatpush.bf16.msra.mxu0 %v822
  %846 = vmatmul.bf16.gmra.mxu0 %v740
  %v847 = vpop.f32.mrf.mxu0
  %v848 = vadd.f32 %v640, %v847
  %v849 = vpop.f32.mrf.mxu0
  %v850 = vadd.f32 %v640, %v849
  %851 = vmatmul.bf16.gmra.mxu0 %v741
  %v852 = vpop.f32.mrf.mxu0
  %v853 = vadd.f32 %v640, %v852
  %v854 = vpop.f32.mrf.mxu0
  %v855 = vadd.f32 %v640, %v854
  %856 = vmatmul.bf16.gmra.mxu0 %v742
  %v857 = vpop.f32.mrf.mxu0
  %v858 = vadd.f32 %v640, %v857
  %v859 = vpop.f32.mrf.mxu0
  %v860 = vadd.f32 %v640, %v859
  %861 = vmatmul.bf16.gmra.mxu0 %v743
  %v862 = vpop.f32.mrf.mxu0
  %v863 = vadd.f32 %v640, %v862
  %v864 = vpop.f32.mrf.mxu0
  %v865 = vadd.f32 %v640, %v864
  %866 = vmatmul.bf16.gmra.mxu0 %v744
  %v867 = vpop.f32.mrf.mxu0
  %v868 = vadd.f32 %v640, %v867
  %v869 = vpop.f32.mrf.mxu0
  %v870 = vadd.f32 %v640, %v869
  %871 = vmatmul.bf16.gmra.mxu0 %v745
  %v872 = vpop.f32.mrf.mxu0
  %v873 = vadd.f32 %v640, %v872
  %v874 = vpop.f32.mrf.mxu0
  %v875 = vadd.f32 %v640, %v874
  %876 = vmatmul.bf16.gmra.mxu0 %v746
  %v877 = vpop.f32.mrf.mxu0
  %v878 = vadd.f32 %v640, %v877
  %v879 = vpop.f32.mrf.mxu0
  %v880 = vadd.f32 %v640, %v879
  %881 = vmatmul.bf16.gmra.mxu0 %v747
  %v882 = vpop.f32.mrf.mxu0
  %v883 = vadd.f32 %v640, %v882
  %v884 = vpop.f32.mrf.mxu0
  %v885 = vadd.f32 %v640, %v884
  %886 = vmatmul.bf16.gmra.mxu0 %v748
  %v887 = vpop.f32.mrf.mxu0
  %v888 = vadd.f32 %v640, %v887
  %v889 = vpop.f32.mrf.mxu0
  %v890 = vadd.f32 %v640, %v889
  %891 = vmatmul.bf16.gmra.mxu0 %v749
  %v892 = vpop.f32.mrf.mxu0
  %v893 = vadd.f32 %v640, %v892
  %v894 = vpop.f32.mrf.mxu0
  %v895 = vadd.f32 %v640, %v894
  %896 = vmatmul.bf16.gmra.mxu0 %v750
  %v897 = vpop.f32.mrf.mxu0
  %v898 = vadd.f32 %v640, %v897
  %v899 = vpop.f32.mrf.mxu0
  %v900 = vadd.f32 %v640, %v899
  %901 = vmatmul.bf16.gmra.mxu0 %v751
  %v902 = vpop.f32.mrf.mxu0
  %v903 = vadd.f32 %v640, %v902
  %v904 = vpop.f32.mrf.mxu0
  %v905 = vadd.f32 %v640, %v904
  %906 = vmatmul.bf16.gmra.mxu0 %v752
  %v907 = vpop.f32.mrf.mxu0
  %v908 = vadd.f32 %v640, %v907
  %v909 = vpop.f32.mrf.mxu0
  %v910 = vadd.f32 %v640, %v909
  %911 = vmatmul.bf16.gmra.mxu0 %v753
  %v912 = vpop.f32.mrf.mxu0
  %v913 = vadd.f32 %v640, %v912
  %v914 = vpop.f32.mrf.mxu0
  %v915 = vadd.f32 %v640, %v914
  %916 = vmatmul.bf16.gmra.mxu0 %v754
  %v917 = vpop.f32.mrf.mxu0
  %v918 = vadd.f32 %v640, %v917
  %v919 = vpop.f32.mrf.mxu0
  %v920 = vadd.f32 %v640, %v919
  %921 = vmatmul.bf16.gmra.mxu0 %v755
  %v922 = vpop.f32.mrf.mxu0
  %v923 = vadd.f32 %v640, %v922
  %v924 = vpop.f32.mrf.mxu0
  %v925 = vadd.f32 %v640, %v924
  %926 = vmatmul.bf16.gmra.mxu0 %v756
  %v927 = vpop.f32.mrf.mxu0
  %v928 = vadd.f32 %v640, %v927
  %v929 = vpop.f32.mrf.mxu0
  %v930 = vadd.f32 %v640, %v929
  %931 = vmatmul.bf16.gmra.mxu0 %v757
  %v932 = vpop.f32.mrf.mxu0
  %v933 = vadd.f32 %v640, %v932
  %v934 = vpop.f32.mrf.mxu0
  %v935 = vadd.f32 %v640, %v934
  %936 = vmatmul.bf16.gmra.mxu0 %v758
  %v937 = vpop.f32.mrf.mxu0
  %v938 = vadd.f32 %v640, %v937
  %v939 = vpop.f32.mrf.mxu0
  %v940 = vadd.f32 %v640, %v939
  %941 = vmatmul.bf16.gmra.mxu0 %v759
  %v942 = vpop.f32.mrf.mxu0
  %v943 = vadd.f32 %v640, %v942
  %v944 = vpop.f32.mrf.mxu0
  %v945 = vadd.f32 %v640, %v944
  %946 = vmatmul.bf16.gmra.mxu0 %v760
  %v947 = vpop.f32.mrf.mxu0
  %v948 = vadd.f32 %v640, %v947
  %v949 = vpop.f32.mrf.mxu0
  %v950 = vadd.f32 %v640, %v949
  %951 = vmatmul.bf16.gmra.mxu0 %v761
  %v952 = vpop.f32.mrf.mxu0
  %v953 = vadd.f32 %v640, %v952
  %v954 = vpop.f32.mrf.mxu0
  %v955 = vadd.f32 %v640, %v954
  %956 = vmatmul.bf16.gmra.mxu0 %v762
  %v957 = vpop.f32.mrf.mxu0
  %v958 = vadd.f32 %v640, %v957
  %v959 = vpop.f32.mrf.mxu0
  %v960 = vadd.f32 %v640, %v959
  %961 = vmatmul.bf16.gmra.mxu0 %v763
  %v962 = vpop.f32.mrf.mxu0
  %v963 = vadd.f32 %v640, %v962
  %v964 = vpop.f32.mrf.mxu0
  %v965 = vadd.f32 %v640, %v964
  %966 = vmatmul.bf16.gmra.mxu0 %v764
  %v967 = vpop.f32.mrf.mxu0
  %v968 = vadd.f32 %v640, %v967
  %v969 = vpop.f32.mrf.mxu0
  %970 = vdwg.mxu0
  %s971 = scalar_lea.vmem [#allocation2], 392
  %972 = vst.msk [vmem:[%s971] sm:$0xff] %vm418, %v848
  %973 = vst.msk [vmem:[%s971 + $0x8] sm:$0xff] %vm418, %v850
  %974 = vst.msk [vmem:[%s971 + $0x10] sm:$0xff] %vm418, %v853
  %975 = vst.msk [vmem:[%s971 + $0x18] sm:$0xff] %vm418, %v855
  %976 = vst.msk [vmem:[%s971 + $0x20] sm:$0xff] %vm418, %v858
  %977 = vst.msk [vmem:[%s971 + $0x28] sm:$0xff] %vm418, %v860
  %978 = vst.msk [vmem:[%s971 + $0x30] sm:$0xff] %vm418, %v863
  %979 = vst.msk [vmem:[%s971 + $0x38] sm:$0xff] %vm418, %v865
  %980 = vst.msk [vmem:[%s971 + $0x40] sm:$0xff] %vm418, %v868
  %981 = vst.msk [vmem:[%s971 + $0x48] sm:$0xff] %vm418, %v870
  %982 = vst.msk [vmem:[%s971 + $0x50] sm:$0xff] %vm418, %v873
  %983 = vst.msk [vmem:[%s971 + $0x58] sm:$0xff] %vm418, %v875
  %984 = vst.msk [vmem:[%s971 + $0x60] sm:$0xff] %vm418, %v878
  %985 = vst.msk [vmem:[%s971 + $0x68] sm:$0xff] %vm418, %v880
  %986 = vst.msk [vmem:[%s971 + $0x70] sm:$0xff] %vm418, %v883
  %987 = vst.msk [vmem:[%s971 + $0x78] sm:$0xff] %vm418, %v885
  %988 = vst.msk [vmem:[%s971 + $0x80] sm:$0xff] %vm418, %v888
  %989 = vst.msk [vmem:[%s971 + $0x88] sm:$0xff] %vm418, %v890
  %990 = vst.msk [vmem:[%s971 + $0x90] sm:$0xff] %vm418, %v893
  %991 = vst.msk [vmem:[%s971 + $0x98] sm:$0xff] %vm418, %v895
  %992 = vst.msk [vmem:[%s971 + $0xa0] sm:$0xff] %vm418, %v898
  %993 = vst.msk [vmem:[%s971 + $0xa8] sm:$0xff] %vm418, %v900
  %994 = vst.msk [vmem:[%s971 + $0xb0] sm:$0xff] %vm418, %v903
  %995 = vst.msk [vmem:[%s971 + $0xb8] sm:$0xff] %vm418, %v905
  %996 = vst.msk [vmem:[%s971 + $0xc0] sm:$0xff] %vm418, %v908
  %997 = vst.msk [vmem:[%s971 + $0xc8] sm:$0xff] %vm418, %v910
  %998 = vst.msk [vmem:[%s971 + $0xd0] sm:$0xff] %vm418, %v913
  %999 = vst.msk [vmem:[%s971 + $0xd8] sm:$0xff] %vm418, %v915
  %1000 = vst.msk [vmem:[%s971 + $0xe0] sm:$0xff] %vm418, %v918
  %1001 = vst.msk [vmem:[%s971 + $0xe8] sm:$0xff] %vm418, %v920
  %1002 = vst.msk [vmem:[%s971 + $0xf0] sm:$0xff] %vm418, %v923
  %1003 = vst.msk [vmem:[%s971 + $0xf8] sm:$0xff] %vm418, %v925
  %1004 = vst.msk [vmem:[%s971 + $0x100] sm:$0xff] %vm418, %v928
  %1005 = vst.msk [vmem:[%s971 + $0x108] sm:$0xff] %vm418, %v930
  %1006 = vst.msk [vmem:[%s971 + $0x110] sm:$0xff] %vm418, %v933
  %1007 = vst.msk [vmem:[%s971 + $0x118] sm:$0xff] %vm418, %v935
  %1008 = vst.msk [vmem:[%s971 + $0x120] sm:$0xff] %vm418, %v938
  %1009 = vst.msk [vmem:[%s971 + $0x128] sm:$0xff] %vm418, %v940
  %1010 = vst.msk [vmem:[%s971 + $0x130] sm:$0xff] %vm418, %v943
  %1011 = vst.msk [vmem:[%s971 + $0x138] sm:$0xff] %vm418, %v945
  %1012 = vst.msk [vmem:[%s971 + $0x140] sm:$0xff] %vm418, %v948
  %1013 = vst.msk [vmem:[%s971 + $0x148] sm:$0xff] %vm418, %v950
  %1014 = vst.msk [vmem:[%s971 + $0x150] sm:$0xff] %vm418, %v953
  %1015 = vst.msk [vmem:[%s971 + $0x158] sm:$0xff] %vm418, %v955
  %1016 = vst.msk [vmem:[%s971 + $0x160] sm:$0xff] %vm418, %v958
  %1017 = vst.msk [vmem:[%s971 + $0x168] sm:$0xff] %vm418, %v960
  %1018 = vst.msk [vmem:[%s971 + $0x170] sm:$0xff] %vm418, %v963
  %1019 = vst.msk [vmem:[%s971 + $0x178] sm:$0xff] %vm418, %v965
  %1020 = vst.msk [vmem:[%s971 + $0x180] sm:$0xff] %vm418, %v968
  %v1021 = vsel %vm418, %v848, 0.0
  %v1022 = vsel %vm418, %v850, 0.0
  %v1023 = vadd.f32 %v1021, %v1022
  %v1024 = vsel %vm418, %v853, 0.0
  %v1025 = vadd.f32 %v1023, %v1024
  %v1026 = vsel %vm418, %v855, 0.0
  %v1027 = vadd.f32 %v1025, %v1026
  %v1028 = vsel %vm418, %v858, 0.0
  %v1029 = vadd.f32 %v1027, %v1028
  %v1030 = vsel %vm418, %v860, 0.0
  %v1031 = vadd.f32 %v1029, %v1030
  %v1032 = vsel %vm418, %v863, 0.0
  %v1033 = vadd.f32 %v1031, %v1032
  %v1034 = vsel %vm418, %v865, 0.0
  %v1035 = vadd.f32 %v1033, %v1034
  %v1036 = vsel %vm418, %v868, 0.0
  %v1037 = vadd.f32 %v1035, %v1036
  %v1038 = vsel %vm418, %v870, 0.0
  %v1039 = vadd.f32 %v1037, %v1038
  %v1040 = vsel %vm418, %v873, 0.0
  %v1041 = vadd.f32 %v1039, %v1040
  %v1042 = vsel %vm418, %v875, 0.0
  %v1043 = vadd.f32 %v1041, %v1042
  %v1044 = vsel %vm418, %v878, 0.0
  %v1045 = vadd.f32 %v1043, %v1044
  %v1046 = vsel %vm418, %v880, 0.0
  %v1047 = vadd.f32 %v1045, %v1046
  %v1048 = vsel %vm418, %v883, 0.0
  %v1049 = vadd.f32 %v1047, %v1048
  %v1050 = vsel %vm418, %v885, 0.0
  %v1051 = vadd.f32 %v1049, %v1050
  %v1052 = vsel %vm418, %v888, 0.0
  %v1053 = vadd.f32 %v1051, %v1052
  %v1054 = vsel %vm418, %v890, 0.0
  %v1055 = vadd.f32 %v1053, %v1054
  %v1056 = vsel %vm418, %v893, 0.0
  %v1057 = vadd.f32 %v1055, %v1056
  %v1058 = vsel %vm418, %v895, 0.0
  %v1059 = vadd.f32 %v1057, %v1058
  %v1060 = vsel %vm418, %v898, 0.0
  %v1061 = vadd.f32 %v1059, %v1060
  %v1062 = vsel %vm418, %v900, 0.0
  %v1063 = vadd.f32 %v1061, %v1062
  %v1064 = vsel %vm418, %v903, 0.0
  %v1065 = vadd.f32 %v1063, %v1064
  %v1066 = vsel %vm418, %v905, 0.0
  %v1067 = vadd.f32 %v1065, %v1066
  %v1068 = vsel %vm418, %v908, 0.0
  %v1069 = vadd.f32 %v1067, %v1068
  %v1070 = vsel %vm418, %v910, 0.0
  %v1071 = vadd.f32 %v1069, %v1070
  %v1072 = vsel %vm418, %v913, 0.0
  %v1073 = vadd.f32 %v1071, %v1072
  %v1074 = vsel %vm418, %v915, 0.0
  %v1075 = vadd.f32 %v1073, %v1074
  %v1076 = vsel %vm418, %v918, 0.0
  %v1077 = vadd.f32 %v1075, %v1076
  %v1078 = vsel %vm418, %v920, 0.0
  %v1079 = vadd.f32 %v1077, %v1078
  %v1080 = vsel %vm418, %v923, 0.0
  %v1081 = vadd.f32 %v1079, %v1080
  %v1082 = vsel %vm418, %v925, 0.0
  %v1083 = vadd.f32 %v1081, %v1082
  %v1084 = vsel %vm418, %v928, 0.0
  %v1085 = vadd.f32 %v1083, %v1084
  %v1086 = vsel %vm418, %v930, 0.0
  %v1087 = vadd.f32 %v1085, %v1086
  %v1088 = vsel %vm418, %v933, 0.0
  %v1089 = vadd.f32 %v1087, %v1088
  %v1090 = vsel %vm418, %v935, 0.0
  %v1091 = vadd.f32 %v1089, %v1090
  %v1092 = vsel %vm418, %v938, 0.0
  %v1093 = vadd.f32 %v1091, %v1092
  %v1094 = vsel %vm418, %v940, 0.0
  %v1095 = vadd.f32 %v1093, %v1094
  %v1096 = vsel %vm418, %v943, 0.0
  %v1097 = vadd.f32 %v1095, %v1096
  %v1098 = vsel %vm418, %v945, 0.0
  %v1099 = vadd.f32 %v1097, %v1098
  %v1100 = vsel %vm418, %v948, 0.0
  %v1101 = vadd.f32 %v1099, %v1100
  %v1102 = vsel %vm418, %v950, 0.0
  %v1103 = vadd.f32 %v1101, %v1102
  %v1104 = vsel %vm418, %v953, 0.0
  %v1105 = vadd.f32 %v1103, %v1104
  %v1106 = vsel %vm418, %v955, 0.0
  %v1107 = vadd.f32 %v1105, %v1106
  %v1108 = vsel %vm418, %v958, 0.0
  %v1109 = vadd.f32 %v1107, %v1108
  %v1110 = vsel %vm418, %v960, 0.0
  %v1111 = vadd.f32 %v1109, %v1110
  %v1112 = vsel %vm418, %v963, 0.0
  %v1113 = vadd.f32 %v1111, %v1112
  %v1114 = vsel %vm418, %v965, 0.0
  %v1115 = vadd.f32 %v1113, %v1114
  %v1116 = vsel %vm418, %v968, 0.0
  %v1117 = vadd.f32 %v1115, %v1116
  %v1118 = vrot.slane %v1117, 4
  %v1119 = vadd.f32 %v1117, %v1118
  %v1120 = vrot.slane %v1119, 2
  %v1121 = vadd.f32 %v1119, %v1120
  %v1122 = vrot.slane %v1121, 1
  %v1123 = vadd.f32 %v1121, %v1122
  %v1124 = vadd.f32 %v571, %v1123
  %s1125 = scalar_lea.vmem %s0, 392
  %v1126 = vld [vmem:[%s1125] sm:$0xf]
  %v1127 = vld [vmem:[%s1125 + $0x4] sm:$0xf]
  %v1128 = vld [vmem:[%s1125 + $0x8] sm:$0xf]
  %v1129 = vld [vmem:[%s1125 + $0xc] sm:$0xf]
  %v1130 = vld [vmem:[%s1125 + $0x10] sm:$0xf]
  %v1131 = vld [vmem:[%s1125 + $0x14] sm:$0xf]
  %v1132 = vld [vmem:[%s1125 + $0x18] sm:$0xf]
  %v1133 = vld [vmem:[%s1125 + $0x1c] sm:$0xf]
  %v1134 = vld [vmem:[%s1125 + $0x20] sm:$0xf]
  %v1135 = vld [vmem:[%s1125 + $0x24] sm:$0xf]
  %v1136 = vld [vmem:[%s1125 + $0x28] sm:$0xf]
  %v1137 = vld [vmem:[%s1125 + $0x2c] sm:$0xf]
  %v1138 = vld [vmem:[%s1125 + $0x30] sm:$0xf]
  %v1139 = vld [vmem:[%s1125 + $0x34] sm:$0xf]
  %v1140 = vld [vmem:[%s1125 + $0x38] sm:$0xf]
  %v1141 = vld [vmem:[%s1125 + $0x3c] sm:$0xf]
  %v1142 = vld [vmem:[%s1125 + $0x40] sm:$0xf]
  %v1143 = vld [vmem:[%s1125 + $0x44] sm:$0xf]
  %v1144 = vld [vmem:[%s1125 + $0x48] sm:$0xf]
  %v1145 = vld [vmem:[%s1125 + $0x4c] sm:$0xf]
  %v1146 = vld [vmem:[%s1125 + $0x50] sm:$0xf]
  %v1147 = vld [vmem:[%s1125 + $0x54] sm:$0xf]
  %v1148 = vld [vmem:[%s1125 + $0x58] sm:$0xf]
  %v1149 = vld [vmem:[%s1125 + $0x5c] sm:$0xf]
  %v1150 = vld [vmem:[%s1125 + $0x60] sm:$0xf]
  %v1151 = vld [vmem:[%s1125 + $0x64] sm:$0xf]
  %v1152 = vld [vmem:[%s1125 + $0x68] sm:$0xf]
  %v1153 = vld [vmem:[%s1125 + $0x6c] sm:$0xf]
  %v1154 = vld [vmem:[%s1125 + $0x70] sm:$0xf]
  %v1155 = vld [vmem:[%s1125 + $0x74] sm:$0xf]
  %v1156 = vld [vmem:[%s1125 + $0x78] sm:$0xf]
  %v1157 = vld [vmem:[%s1125 + $0x7c] sm:$0xf]
  %v1158 = vld [vmem:[%s1125 + $0x80] sm:$0xf]
  %v1159 = vld [vmem:[%s1125 + $0x84] sm:$0xf]
  %v1160 = vld [vmem:[%s1125 + $0x88] sm:$0xf]
  %v1161 = vld [vmem:[%s1125 + $0x8c] sm:$0xf]
  %v1162 = vld [vmem:[%s1125 + $0x90] sm:$0xf]
  %v1163 = vld [vmem:[%s1125 + $0x94] sm:$0xf]
  %v1164 = vld [vmem:[%s1125 + $0x98] sm:$0xf]
  %v1165 = vld [vmem:[%s1125 + $0x9c] sm:$0xf]
  %v1166 = vld [vmem:[%s1125 + $0xa0] sm:$0xf]
  %v1167 = vld [vmem:[%s1125 + $0xa4] sm:$0xf]
  %v1168 = vld [vmem:[%s1125 + $0xa8] sm:$0xf]
  %v1169 = vld [vmem:[%s1125 + $0xac] sm:$0xf]
  %v1170 = vld [vmem:[%s1125 + $0xb0] sm:$0xf]
  %v1171 = vld [vmem:[%s1125 + $0xb4] sm:$0xf]
  %v1172 = vld [vmem:[%s1125 + $0xb8] sm:$0xf]
  %v1173 = vld [vmem:[%s1125 + $0xbc] sm:$0xf]
  %v1174 = vld [vmem:[%s1125 + $0xc0] sm:$0xf]
  %v1175 = vld [vmem:[%s1] sm:$0xf]
  %v1176 = vld [vmem:[%s1 + $0x4] sm:$0xf]
  %v1177 = vld [vmem:[%s1 + $0x8] sm:$0xf]
  %v1178 = vld [vmem:[%s1 + $0xc] sm:$0xf]
  %v1179 = vld [vmem:[%s1 + $0x10] sm:$0xf]
  %v1180 = vld [vmem:[%s1 + $0x14] sm:$0xf]
  %v1181 = vld [vmem:[%s1 + $0x18] sm:$0xf]
  %v1182 = vld [vmem:[%s1 + $0x1c] sm:$0xf]
  %v1183 = vld [vmem:[%s1 + $0x20] sm:$0xf]
  %v1184 = vld [vmem:[%s1 + $0x24] sm:$0xf]
  %v1185 = vld [vmem:[%s1 + $0x28] sm:$0xf]
  %v1186 = vld [vmem:[%s1 + $0x2c] sm:$0xf]
  %v1187 = vld [vmem:[%s1 + $0x30] sm:$0xf]
  %v1188 = vld [vmem:[%s1 + $0x34] sm:$0xf]
  %v1189 = vld [vmem:[%s1 + $0x38] sm:$0xf]
  %v1190 = vld [vmem:[%s1 + $0x3c] sm:$0xf]
  %v1191 = vld [vmem:[%s2] sm:$0x1]
  %v1193 = vperm.slane %v1191, 0
  %v1244 = vunpack.c.l.b16 %v1126
  %v1245 = vunpack.c.l.b16 %v1127
  %v1246 = vunpack.c.l.b16 %v1128
  %v1247 = vunpack.c.l.b16 %v1129
  %v1248 = vunpack.c.l.b16 %v1130
  %v1249 = vunpack.c.l.b16 %v1131
  %v1250 = vunpack.c.l.b16 %v1132
  %v1251 = vunpack.c.l.b16 %v1133
  %v1252 = vunpack.c.l.b16 %v1134
  %v1253 = vunpack.c.l.b16 %v1135
  %v1254 = vunpack.c.l.b16 %v1136
  %v1255 = vunpack.c.l.b16 %v1137
  %v1256 = vunpack.c.l.b16 %v1138
  %v1257 = vunpack.c.l.b16 %v1139
  %v1258 = vunpack.c.l.b16 %v1140
  %v1259 = vunpack.c.l.b16 %v1141
  %v1260 = vunpack.c.l.b16 %v1142
  %v1261 = vunpack.c.l.b16 %v1143
  %v1262 = vunpack.c.l.b16 %v1144
  %v1263 = vunpack.c.l.b16 %v1145
  %v1264 = vunpack.c.l.b16 %v1146
  %v1265 = vunpack.c.l.b16 %v1147
  %v1266 = vunpack.c.l.b16 %v1148
  %v1267 = vunpack.c.l.b16 %v1149
  %v1268 = vunpack.c.l.b16 %v1150
  %v1269 = vunpack.c.l.b16 %v1151
  %v1270 = vunpack.c.l.b16 %v1152
  %v1271 = vunpack.c.l.b16 %v1153
  %v1272 = vunpack.c.l.b16 %v1154
  %v1273 = vunpack.c.l.b16 %v1155
  %v1274 = vunpack.c.l.b16 %v1156
  %v1275 = vunpack.c.l.b16 %v1157
  %v1276 = vunpack.c.l.b16 %v1158
  %v1277 = vunpack.c.l.b16 %v1159
  %v1278 = vunpack.c.l.b16 %v1160
  %v1279 = vunpack.c.l.b16 %v1161
  %v1280 = vunpack.c.l.b16 %v1162
  %v1281 = vunpack.c.l.b16 %v1163
  %v1282 = vunpack.c.l.b16 %v1164
  %v1283 = vunpack.c.l.b16 %v1165
  %v1284 = vunpack.c.l.b16 %v1166
  %v1285 = vunpack.c.l.b16 %v1167
  %v1286 = vunpack.c.l.b16 %v1168
  %v1287 = vunpack.c.l.b16 %v1169
  %v1288 = vunpack.c.l.b16 %v1170
  %v1289 = vunpack.c.l.b16 %v1171
  %v1290 = vunpack.c.l.b16 %v1172
  %v1291 = vunpack.c.l.b16 %v1173
  %v1292 = vunpack.c.l.b16 %v1174
  %v1293 = vpack.c.b16 %v1245, %v1244
  %v1294 = vpack.c.b16 %v1247, %v1246
  %v1295 = vpack.c.b16 %v1249, %v1248
  %v1296 = vpack.c.b16 %v1251, %v1250
  %v1297 = vpack.c.b16 %v1253, %v1252
  %v1298 = vpack.c.b16 %v1255, %v1254
  %v1299 = vpack.c.b16 %v1257, %v1256
  %v1300 = vpack.c.b16 %v1259, %v1258
  %v1301 = vpack.c.b16 %v1261, %v1260
  %v1302 = vpack.c.b16 %v1263, %v1262
  %v1303 = vpack.c.b16 %v1265, %v1264
  %v1304 = vpack.c.b16 %v1267, %v1266
  %v1305 = vpack.c.b16 %v1269, %v1268
  %v1306 = vpack.c.b16 %v1271, %v1270
  %v1307 = vpack.c.b16 %v1273, %v1272
  %v1308 = vpack.c.b16 %v1275, %v1274
  %v1309 = vpack.c.b16 %v1277, %v1276
  %v1310 = vpack.c.b16 %v1279, %v1278
  %v1311 = vpack.c.b16 %v1281, %v1280
  %v1312 = vpack.c.b16 %v1283, %v1282
  %v1313 = vpack.c.b16 %v1285, %v1284
  %v1314 = vpack.c.b16 %v1287, %v1286
  %v1315 = vpack.c.b16 %v1289, %v1288
  %v1316 = vpack.c.b16 %v1291, %v1290
  %v1317 = vpack.c.b16 %v1292, %v1292
  %v1359 = vunpack.c.l.b16 %v1175
  %v1360 = vunpack.c.l.b16 %v1176
  %v1361 = vunpack.c.l.b16 %v1177
  %v1362 = vunpack.c.l.b16 %v1178
  %v1363 = vunpack.c.l.b16 %v1179
  %v1364 = vunpack.c.l.b16 %v1180
  %v1365 = vunpack.c.l.b16 %v1181
  %v1366 = vunpack.c.l.b16 %v1182
  %v1367 = vunpack.c.l.b16 %v1183
  %v1368 = vunpack.c.l.b16 %v1184
  %v1369 = vunpack.c.l.b16 %v1185
  %v1370 = vunpack.c.l.b16 %v1186
  %v1371 = vunpack.c.l.b16 %v1187
  %v1372 = vunpack.c.l.b16 %v1188
  %v1373 = vunpack.c.l.b16 %v1189
  %v1374 = vunpack.c.l.b16 %v1190
  %v1375 = vpack.c.b16 %v1360, %v1359
  %v1376 = vpack.c.b16 %v1362, %v1361
  %v1377 = vpack.c.b16 %v1364, %v1363
  %v1378 = vpack.c.b16 %v1366, %v1365
  %v1379 = vpack.c.b16 %v1368, %v1367
  %v1380 = vpack.c.b16 %v1370, %v1369
  %v1381 = vpack.c.b16 %v1372, %v1371
  %v1382 = vpack.c.b16 %v1374, %v1373
  %1391 = vmatpush.bf16.msra.mxu0 %v1382
  %1392 = vmatpush.bf16.msra.mxu0 %v1381
  %1393 = vmatpush.bf16.msra.mxu0 %v1380
  %1394 = vmatpush.bf16.msra.mxu0 %v1379
  %1395 = vmatpush.bf16.msra.mxu0 %v1378
  %1396 = vmatpush.bf16.msra.mxu0 %v1377
  %1397 = vmatpush.bf16.msra.mxu0 %v1376
  %1398 = vmatpush.bf16.msra.mxu0 %v1375
  %1399 = vmatmul.bf16.gmra.mxu0 %v1293
  %v1400 = vpop.f32.mrf.mxu0
  %v1401 = vadd.f32 %v1193, %v1400
  %v1402 = vpop.f32.mrf.mxu0
  %v1403 = vadd.f32 %v1193, %v1402
  %1404 = vmatmul.bf16.gmra.mxu0 %v1294
  %v1405 = vpop.f32.mrf.mxu0
  %v1406 = vadd.f32 %v1193, %v1405
  %v1407 = vpop.f32.mrf.mxu0
  %v1408 = vadd.f32 %v1193, %v1407
  %1409 = vmatmul.bf16.gmra.mxu0 %v1295
  %v1410 = vpop.f32.mrf.mxu0
  %v1411 = vadd.f32 %v1193, %v1410
  %v1412 = vpop.f32.mrf.mxu0
  %v1413 = vadd.f32 %v1193, %v1412
  %1414 = vmatmul.bf16.gmra.mxu0 %v1296
  %v1415 = vpop.f32.mrf.mxu0
  %v1416 = vadd.f32 %v1193, %v1415
  %v1417 = vpop.f32.mrf.mxu0
  %v1418 = vadd.f32 %v1193, %v1417
  %1419 = vmatmul.bf16.gmra.mxu0 %v1297
  %v1420 = vpop.f32.mrf.mxu0
  %v1421 = vadd.f32 %v1193, %v1420
  %v1422 = vpop.f32.mrf.mxu0
  %v1423 = vadd.f32 %v1193, %v1422
  %1424 = vmatmul.bf16.gmra.mxu0 %v1298
  %v1425 = vpop.f32.mrf.mxu0
  %v1426 = vadd.f32 %v1193, %v1425
  %v1427 = vpop.f32.mrf.mxu0
  %v1428 = vadd.f32 %v1193, %v1427
  %1429 = vmatmul.bf16.gmra.mxu0 %v1299
  %v1430 = vpop.f32.mrf.mxu0
  %v1431 = vadd.f32 %v1193, %v1430
  %v1432 = vpop.f32.mrf.mxu0
  %v1433 = vadd.f32 %v1193, %v1432
  %1434 = vmatmul.bf16.gmra.mxu0 %v1300
  %v1435 = vpop.f32.mrf.mxu0
  %v1436 = vadd.f32 %v1193, %v1435
  %v1437 = vpop.f32.mrf.mxu0
  %v1438 = vadd.f32 %v1193, %v1437
  %1439 = vmatmul.bf16.gmra.mxu0 %v1301
  %v1440 = vpop.f32.mrf.mxu0
  %v1441 = vadd.f32 %v1193, %v1440
  %v1442 = vpop.f32.mrf.mxu0
  %v1443 = vadd.f32 %v1193, %v1442
  %1444 = vmatmul.bf16.gmra.mxu0 %v1302
  %v1445 = vpop.f32.mrf.mxu0
  %v1446 = vadd.f32 %v1193, %v1445
  %v1447 = vpop.f32.mrf.mxu0
  %v1448 = vadd.f32 %v1193, %v1447
  %1449 = vmatmul.bf16.gmra.mxu0 %v1303
  %v1450 = vpop.f32.mrf.mxu0
  %v1451 = vadd.f32 %v1193, %v1450
  %v1452 = vpop.f32.mrf.mxu0
  %v1453 = vadd.f32 %v1193, %v1452
  %1454 = vmatmul.bf16.gmra.mxu0 %v1304
  %v1455 = vpop.f32.mrf.mxu0
  %v1456 = vadd.f32 %v1193, %v1455
  %v1457 = vpop.f32.mrf.mxu0
  %v1458 = vadd.f32 %v1193, %v1457
  %1459 = vmatmul.bf16.gmra.mxu0 %v1305
  %v1460 = vpop.f32.mrf.mxu0
  %v1461 = vadd.f32 %v1193, %v1460
  %v1462 = vpop.f32.mrf.mxu0
  %v1463 = vadd.f32 %v1193, %v1462
  %1464 = vmatmul.bf16.gmra.mxu0 %v1306
  %v1465 = vpop.f32.mrf.mxu0
  %v1466 = vadd.f32 %v1193, %v1465
  %v1467 = vpop.f32.mrf.mxu0
  %v1468 = vadd.f32 %v1193, %v1467
  %1469 = vmatmul.bf16.gmra.mxu0 %v1307
  %v1470 = vpop.f32.mrf.mxu0
  %v1471 = vadd.f32 %v1193, %v1470
  %v1472 = vpop.f32.mrf.mxu0
  %v1473 = vadd.f32 %v1193, %v1472
  %1474 = vmatmul.bf16.gmra.mxu0 %v1308
  %v1475 = vpop.f32.mrf.mxu0
  %v1476 = vadd.f32 %v1193, %v1475
  %v1477 = vpop.f32.mrf.mxu0
  %v1478 = vadd.f32 %v1193, %v1477
  %1479 = vmatmul.bf16.gmra.mxu0 %v1309
  %v1480 = vpop.f32.mrf.mxu0
  %v1481 = vadd.f32 %v1193, %v1480
  %v1482 = vpop.f32.mrf.mxu0
  %v1483 = vadd.f32 %v1193, %v1482
  %1484 = vmatmul.bf16.gmra.mxu0 %v1310
  %v1485 = vpop.f32.mrf.mxu0
  %v1486 = vadd.f32 %v1193, %v1485
  %v1487 = vpop.f32.mrf.mxu0
  %v1488 = vadd.f32 %v1193, %v1487
  %1489 = vmatmul.bf16.gmra.mxu0 %v1311
  %v1490 = vpop.f32.mrf.mxu0
  %v1491 = vadd.f32 %v1193, %v1490
  %v1492 = vpop.f32.mrf.mxu0
  %v1493 = vadd.f32 %v1193, %v1492
  %1494 = vmatmul.bf16.gmra.mxu0 %v1312
  %v1495 = vpop.f32.mrf.mxu0
  %v1496 = vadd.f32 %v1193, %v1495
  %v1497 = vpop.f32.mrf.mxu0
  %v1498 = vadd.f32 %v1193, %v1497
  %1499 = vmatmul.bf16.gmra.mxu0 %v1313
  %v1500 = vpop.f32.mrf.mxu0
  %v1501 = vadd.f32 %v1193, %v1500
  %v1502 = vpop.f32.mrf.mxu0
  %v1503 = vadd.f32 %v1193, %v1502
  %1504 = vmatmul.bf16.gmra.mxu0 %v1314
  %v1505 = vpop.f32.mrf.mxu0
  %v1506 = vadd.f32 %v1193, %v1505
  %v1507 = vpop.f32.mrf.mxu0
  %v1508 = vadd.f32 %v1193, %v1507
  %1509 = vmatmul.bf16.gmra.mxu0 %v1315
  %v1510 = vpop.f32.mrf.mxu0
  %v1511 = vadd.f32 %v1193, %v1510
  %v1512 = vpop.f32.mrf.mxu0
  %v1513 = vadd.f32 %v1193, %v1512
  %1514 = vmatmul.bf16.gmra.mxu0 %v1316
  %v1515 = vpop.f32.mrf.mxu0
  %v1516 = vadd.f32 %v1193, %v1515
  %v1517 = vpop.f32.mrf.mxu0
  %v1518 = vadd.f32 %v1193, %v1517
  %1519 = vmatmul.bf16.gmra.mxu0 %v1317
  %v1520 = vpop.f32.mrf.mxu0
  %v1521 = vadd.f32 %v1193, %v1520
  %v1522 = vpop.f32.mrf.mxu0
  %1523 = vdwg.mxu0
  %s1524 = scalar_lea.vmem [#allocation2], 784
  %1525 = vst.msk [vmem:[%s1524] sm:$0xff] %vm418, %v1401
  %1526 = vst.msk [vmem:[%s1524 + $0x8] sm:$0xff] %vm418, %v1403
  %1527 = vst.msk [vmem:[%s1524 + $0x10] sm:$0xff] %vm418, %v1406
  %1528 = vst.msk [vmem:[%s1524 + $0x18] sm:$0xff] %vm418, %v1408
  %1529 = vst.msk [vmem:[%s1524 + $0x20] sm:$0xff] %vm418, %v1411
  %1530 = vst.msk [vmem:[%s1524 + $0x28] sm:$0xff] %vm418, %v1413
  %1531 = vst.msk [vmem:[%s1524 + $0x30] sm:$0xff] %vm418, %v1416
  %1532 = vst.msk [vmem:[%s1524 + $0x38] sm:$0xff] %vm418, %v1418
  %1533 = vst.msk [vmem:[%s1524 + $0x40] sm:$0xff] %vm418, %v1421
  %1534 = vst.msk [vmem:[%s1524 + $0x48] sm:$0xff] %vm418, %v1423
  %1535 = vst.msk [vmem:[%s1524 + $0x50] sm:$0xff] %vm418, %v1426
  %1536 = vst.msk [vmem:[%s1524 + $0x58] sm:$0xff] %vm418, %v1428
  %1537 = vst.msk [vmem:[%s1524 + $0x60] sm:$0xff] %vm418, %v1431
  %1538 = vst.msk [vmem:[%s1524 + $0x68] sm:$0xff] %vm418, %v1433
  %1539 = vst.msk [vmem:[%s1524 + $0x70] sm:$0xff] %vm418, %v1436
  %1540 = vst.msk [vmem:[%s1524 + $0x78] sm:$0xff] %vm418, %v1438
  %1541 = vst.msk [vmem:[%s1524 + $0x80] sm:$0xff] %vm418, %v1441
  %1542 = vst.msk [vmem:[%s1524 + $0x88] sm:$0xff] %vm418, %v1443
  %1543 = vst.msk [vmem:[%s1524 + $0x90] sm:$0xff] %vm418, %v1446
  %1544 = vst.msk [vmem:[%s1524 + $0x98] sm:$0xff] %vm418, %v1448
  %1545 = vst.msk [vmem:[%s1524 + $0xa0] sm:$0xff] %vm418, %v1451
  %1546 = vst.msk [vmem:[%s1524 + $0xa8] sm:$0xff] %vm418, %v1453
  %1547 = vst.msk [vmem:[%s1524 + $0xb0] sm:$0xff] %vm418, %v1456
  %1548 = vst.msk [vmem:[%s1524 + $0xb8] sm:$0xff] %vm418, %v1458
  %1549 = vst.msk [vmem:[%s1524 + $0xc0] sm:$0xff] %vm418, %v1461
  %1550 = vst.msk [vmem:[%s1524 + $0xc8] sm:$0xff] %vm418, %v1463
  %1551 = vst.msk [vmem:[%s1524 + $0xd0] sm:$0xff] %vm418, %v1466
  %1552 = vst.msk [vmem:[%s1524 + $0xd8] sm:$0xff] %vm418, %v1468
  %1553 = vst.msk [vmem:[%s1524 + $0xe0] sm:$0xff] %vm418, %v1471
  %1554 = vst.msk [vmem:[%s1524 + $0xe8] sm:$0xff] %vm418, %v1473
  %1555 = vst.msk [vmem:[%s1524 + $0xf0] sm:$0xff] %vm418, %v1476
  %1556 = vst.msk [vmem:[%s1524 + $0xf8] sm:$0xff] %vm418, %v1478
  %1557 = vst.msk [vmem:[%s1524 + $0x100] sm:$0xff] %vm418, %v1481
  %1558 = vst.msk [vmem:[%s1524 + $0x108] sm:$0xff] %vm418, %v1483
  %1559 = vst.msk [vmem:[%s1524 + $0x110] sm:$0xff] %vm418, %v1486
  %1560 = vst.msk [vmem:[%s1524 + $0x118] sm:$0xff] %vm418, %v1488
  %1561 = vst.msk [vmem:[%s1524 + $0x120] sm:$0xff] %vm418, %v1491
  %1562 = vst.msk [vmem:[%s1524 + $0x128] sm:$0xff] %vm418, %v1493
  %1563 = vst.msk [vmem:[%s1524 + $0x130] sm:$0xff] %vm418, %v1496
  %1564 = vst.msk [vmem:[%s1524 + $0x138] sm:$0xff] %vm418, %v1498
  %1565 = vst.msk [vmem:[%s1524 + $0x140] sm:$0xff] %vm418, %v1501
  %1566 = vst.msk [vmem:[%s1524 + $0x148] sm:$0xff] %vm418, %v1503
  %1567 = vst.msk [vmem:[%s1524 + $0x150] sm:$0xff] %vm418, %v1506
  %1568 = vst.msk [vmem:[%s1524 + $0x158] sm:$0xff] %vm418, %v1508
  %1569 = vst.msk [vmem:[%s1524 + $0x160] sm:$0xff] %vm418, %v1511
  %1570 = vst.msk [vmem:[%s1524 + $0x168] sm:$0xff] %vm418, %v1513
  %1571 = vst.msk [vmem:[%s1524 + $0x170] sm:$0xff] %vm418, %v1516
  %1572 = vst.msk [vmem:[%s1524 + $0x178] sm:$0xff] %vm418, %v1518
  %1573 = vst.msk [vmem:[%s1524 + $0x180] sm:$0xff] %vm418, %v1521
  %v1574 = vsel %vm418, %v1401, 0.0
  %v1575 = vsel %vm418, %v1403, 0.0
  %v1576 = vadd.f32 %v1574, %v1575
  %v1577 = vsel %vm418, %v1406, 0.0
  %v1578 = vadd.f32 %v1576, %v1577
  %v1579 = vsel %vm418, %v1408, 0.0
  %v1580 = vadd.f32 %v1578, %v1579
  %v1581 = vsel %vm418, %v1411, 0.0
  %v1582 = vadd.f32 %v1580, %v1581
  %v1583 = vsel %vm418, %v1413, 0.0
  %v1584 = vadd.f32 %v1582, %v1583
  %v1585 = vsel %vm418, %v1416, 0.0
  %v1586 = vadd.f32 %v1584, %v1585
  %v1587 = vsel %vm418, %v1418, 0.0
  %v1588 = vadd.f32 %v1586, %v1587
  %v1589 = vsel %vm418, %v1421, 0.0
  %v1590 = vadd.f32 %v1588, %v1589
  %v1591 = vsel %vm418, %v1423, 0.0
  %v1592 = vadd.f32 %v1590, %v1591
  %v1593 = vsel %vm418, %v1426, 0.0
  %v1594 = vadd.f32 %v1592, %v1593
  %v1595 = vsel %vm418, %v1428, 0.0
  %v1596 = vadd.f32 %v1594, %v1595
  %v1597 = vsel %vm418, %v1431, 0.0
  %v1598 = vadd.f32 %v1596, %v1597
  %v1599 = vsel %vm418, %v1433, 0.0
  %v1600 = vadd.f32 %v1598, %v1599
  %v1601 = vsel %vm418, %v1436, 0.0
  %v1602 = vadd.f32 %v1600, %v1601
  %v1603 = vsel %vm418, %v1438, 0.0
  %v1604 = vadd.f32 %v1602, %v1603
  %v1605 = vsel %vm418, %v1441, 0.0
  %v1606 = vadd.f32 %v1604, %v1605
  %v1607 = vsel %vm418, %v1443, 0.0
  %v1608 = vadd.f32 %v1606, %v1607
  %v1609 = vsel %vm418, %v1446, 0.0
  %v1610 = vadd.f32 %v1608, %v1609
  %v1611 = vsel %vm418, %v1448, 0.0
  %v1612 = vadd.f32 %v1610, %v1611
  %v1613 = vsel %vm418, %v1451, 0.0
  %v1614 = vadd.f32 %v1612, %v1613
  %v1615 = vsel %vm418, %v1453, 0.0
  %v1616 = vadd.f32 %v1614, %v1615
  %v1617 = vsel %vm418, %v1456, 0.0
  %v1618 = vadd.f32 %v1616, %v1617
  %v1619 = vsel %vm418, %v1458, 0.0
  %v1620 = vadd.f32 %v1618, %v1619
  %v1621 = vsel %vm418, %v1461, 0.0
  %v1622 = vadd.f32 %v1620, %v1621
  %v1623 = vsel %vm418, %v1463, 0.0
  %v1624 = vadd.f32 %v1622, %v1623
  %v1625 = vsel %vm418, %v1466, 0.0
  %v1626 = vadd.f32 %v1624, %v1625
  %v1627 = vsel %vm418, %v1468, 0.0
  %v1628 = vadd.f32 %v1626, %v1627
  %v1629 = vsel %vm418, %v1471, 0.0
  %v1630 = vadd.f32 %v1628, %v1629
  %v1631 = vsel %vm418, %v1473, 0.0
  %v1632 = vadd.f32 %v1630, %v1631
  %v1633 = vsel %vm418, %v1476, 0.0
  %v1634 = vadd.f32 %v1632, %v1633
  %v1635 = vsel %vm418, %v1478, 0.0
  %v1636 = vadd.f32 %v1634, %v1635
  %v1637 = vsel %vm418, %v1481, 0.0
  %v1638 = vadd.f32 %v1636, %v1637
  %v1639 = vsel %vm418, %v1483, 0.0
  %v1640 = vadd.f32 %v1638, %v1639
  %v1641 = vsel %vm418, %v1486, 0.0
  %v1642 = vadd.f32 %v1640, %v1641
  %v1643 = vsel %vm418, %v1488, 0.0
  %v1644 = vadd.f32 %v1642, %v1643
  %v1645 = vsel %vm418, %v1491, 0.0
  %v1646 = vadd.f32 %v1644, %v1645
  %v1647 = vsel %vm418, %v1493, 0.0
  %v1648 = vadd.f32 %v1646, %v1647
  %v1649 = vsel %vm418, %v1496, 0.0
  %v1650 = vadd.f32 %v1648, %v1649
  %v1651 = vsel %vm418, %v1498, 0.0
  %v1652 = vadd.f32 %v1650, %v1651
  %v1653 = vsel %vm418, %v1501, 0.0
  %v1654 = vadd.f32 %v1652, %v1653
  %v1655 = vsel %vm418, %v1503, 0.0
  %v1656 = vadd.f32 %v1654, %v1655
  %v1657 = vsel %vm418, %v1506, 0.0
  %v1658 = vadd.f32 %v1656, %v1657
  %v1659 = vsel %vm418, %v1508, 0.0
  %v1660 = vadd.f32 %v1658, %v1659
  %v1661 = vsel %vm418, %v1511, 0.0
  %v1662 = vadd.f32 %v1660, %v1661
  %v1663 = vsel %vm418, %v1513, 0.0
  %v1664 = vadd.f32 %v1662, %v1663
  %v1665 = vsel %vm418, %v1516, 0.0
  %v1666 = vadd.f32 %v1664, %v1665
  %v1667 = vsel %vm418, %v1518, 0.0
  %v1668 = vadd.f32 %v1666, %v1667
  %v1669 = vsel %vm418, %v1521, 0.0
  %v1670 = vadd.f32 %v1668, %v1669
  %v1671 = vrot.slane %v1670, 4
  %v1672 = vadd.f32 %v1670, %v1671
  %v1673 = vrot.slane %v1672, 2
  %v1674 = vadd.f32 %v1672, %v1673
  %v1675 = vrot.slane %v1674, 1
  %v1676 = vadd.f32 %v1674, %v1675
  %v1677 = vadd.f32 %v1124, %v1676
  %s1678 = scalar_lea.vmem %s0, 588
  %v1679 = vld [vmem:[%s1678] sm:$0xf]
  %v1680 = vld [vmem:[%s1678 + $0x4] sm:$0xf]
  %v1681 = vld [vmem:[%s1678 + $0x8] sm:$0xf]
  %v1682 = vld [vmem:[%s1678 + $0xc] sm:$0xf]
  %v1683 = vld [vmem:[%s1678 + $0x10] sm:$0xf]
  %v1684 = vld [vmem:[%s1678 + $0x14] sm:$0xf]
  %v1685 = vld [vmem:[%s1678 + $0x18] sm:$0xf]
  %v1686 = vld [vmem:[%s1678 + $0x1c] sm:$0xf]
  %v1687 = vld [vmem:[%s1678 + $0x20] sm:$0xf]
  %v1688 = vld [vmem:[%s1678 + $0x24] sm:$0xf]
  %v1689 = vld [vmem:[%s1678 + $0x28] sm:$0xf]
  %v1690 = vld [vmem:[%s1678 + $0x2c] sm:$0xf]
  %v1691 = vld [vmem:[%s1678 + $0x30] sm:$0xf]
  %v1692 = vld [vmem:[%s1678 + $0x34] sm:$0xf]
  %v1693 = vld [vmem:[%s1678 + $0x38] sm:$0xf]
  %v1694 = vld [vmem:[%s1678 + $0x3c] sm:$0xf]
  %v1695 = vld [vmem:[%s1678 + $0x40] sm:$0xf]
  %v1696 = vld [vmem:[%s1678 + $0x44] sm:$0xf]
  %v1697 = vld [vmem:[%s1678 + $0x48] sm:$0xf]
  %v1698 = vld [vmem:[%s1678 + $0x4c] sm:$0xf]
  %v1699 = vld [vmem:[%s1678 + $0x50] sm:$0xf]
  %v1700 = vld [vmem:[%s1678 + $0x54] sm:$0xf]
  %v1701 = vld [vmem:[%s1678 + $0x58] sm:$0xf]
  %v1702 = vld [vmem:[%s1678 + $0x5c] sm:$0xf]
  %v1703 = vld [vmem:[%s1678 + $0x60] sm:$0xf]
  %v1704 = vld [vmem:[%s1678 + $0x64] sm:$0xf]
  %v1705 = vld [vmem:[%s1678 + $0x68] sm:$0xf]
  %v1706 = vld [vmem:[%s1678 + $0x6c] sm:$0xf]
  %v1707 = vld [vmem:[%s1678 + $0x70] sm:$0xf]
  %v1708 = vld [vmem:[%s1678 + $0x74] sm:$0xf]
  %v1709 = vld [vmem:[%s1678 + $0x78] sm:$0xf]
  %v1710 = vld [vmem:[%s1678 + $0x7c] sm:$0xf]
  %v1711 = vld [vmem:[%s1678 + $0x80] sm:$0xf]
  %v1712 = vld [vmem:[%s1678 + $0x84] sm:$0xf]
  %v1713 = vld [vmem:[%s1678 + $0x88] sm:$0xf]
  %v1714 = vld [vmem:[%s1678 + $0x8c] sm:$0xf]
  %v1715 = vld [vmem:[%s1678 + $0x90] sm:$0xf]
  %v1716 = vld [vmem:[%s1678 + $0x94] sm:$0xf]
  %v1717 = vld [vmem:[%s1678 + $0x98] sm:$0xf]
  %v1718 = vld [vmem:[%s1678 + $0x9c] sm:$0xf]
  %v1719 = vld [vmem:[%s1678 + $0xa0] sm:$0xf]
  %v1720 = vld [vmem:[%s1678 + $0xa4] sm:$0xf]
  %v1721 = vld [vmem:[%s1678 + $0xa8] sm:$0xf]
  %v1722 = vld [vmem:[%s1678 + $0xac] sm:$0xf]
  %v1723 = vld [vmem:[%s1678 + $0xb0] sm:$0xf]
  %v1724 = vld [vmem:[%s1678 + $0xb4] sm:$0xf]
  %v1725 = vld [vmem:[%s1678 + $0xb8] sm:$0xf]
  %v1726 = vld [vmem:[%s1678 + $0xbc] sm:$0xf]
  %v1727 = vld [vmem:[%s1678 + $0xc0] sm:$0xf]
  %v1728 = vld [vmem:[%s1] sm:$0xf]
  %v1729 = vld [vmem:[%s1 + $0x4] sm:$0xf]
  %v1730 = vld [vmem:[%s1 + $0x8] sm:$0xf]
  %v1731 = vld [vmem:[%s1 + $0xc] sm:$0xf]
  %v1732 = vld [vmem:[%s1 + $0x10] sm:$0xf]
  %v1733 = vld [vmem:[%s1 + $0x14] sm:$0xf]
  %v1734 = vld [vmem:[%s1 + $0x18] sm:$0xf]
  %v1735 = vld [vmem:[%s1 + $0x1c] sm:$0xf]
  %v1736 = vld [vmem:[%s1 + $0x20] sm:$0xf]
  %v1737 = vld [vmem:[%s1 + $0x24] sm:$0xf]
  %v1738 = vld [vmem:[%s1 + $0x28] sm:$0xf]
  %v1739 = vld [vmem:[%s1 + $0x2c] sm:$0xf]
  %v1740 = vld [vmem:[%s1 + $0x30] sm:$0xf]
  %v1741 = vld [vmem:[%s1 + $0x34] sm:$0xf]
  %v1742 = vld [vmem:[%s1 + $0x38] sm:$0xf]
  %v1743 = vld [vmem:[%s1 + $0x3c] sm:$0xf]
  %v1744 = vld [vmem:[%s2] sm:$0x1]
  %v1746 = vperm.slane %v1744, 0
  %v1797 = vunpack.c.l.b16 %v1679
  %v1798 = vunpack.c.l.b16 %v1680
  %v1799 = vunpack.c.l.b16 %v1681
  %v1800 = vunpack.c.l.b16 %v1682
  %v1801 = vunpack.c.l.b16 %v1683
  %v1802 = vunpack.c.l.b16 %v1684
  %v1803 = vunpack.c.l.b16 %v1685
  %v1804 = vunpack.c.l.b16 %v1686
  %v1805 = vunpack.c.l.b16 %v1687
  %v1806 = vunpack.c.l.b16 %v1688
  %v1807 = vunpack.c.l.b16 %v1689
  %v1808 = vunpack.c.l.b16 %v1690
  %v1809 = vunpack.c.l.b16 %v1691
  %v1810 = vunpack.c.l.b16 %v1692
  %v1811 = vunpack.c.l.b16 %v1693
  %v1812 = vunpack.c.l.b16 %v1694
  %v1813 = vunpack.c.l.b16 %v1695
  %v1814 = vunpack.c.l.b16 %v1696
  %v1815 = vunpack.c.l.b16 %v1697
  %v1816 = vunpack.c.l.b16 %v1698
  %v1817 = vunpack.c.l.b16 %v1699
  %v1818 = vunpack.c.l.b16 %v1700
  %v1819 = vunpack.c.l.b16 %v1701
  %v1820 = vunpack.c.l.b16 %v1702
  %v1821 = vunpack.c.l.b16 %v1703
  %v1822 = vunpack.c.l.b16 %v1704
  %v1823 = vunpack.c.l.b16 %v1705
  %v1824 = vunpack.c.l.b16 %v1706
  %v1825 = vunpack.c.l.b16 %v1707
  %v1826 = vunpack.c.l.b16 %v1708
  %v1827 = vunpack.c.l.b16 %v1709
  %v1828 = vunpack.c.l.b16 %v1710
  %v1829 = vunpack.c.l.b16 %v1711
  %v1830 = vunpack.c.l.b16 %v1712
  %v1831 = vunpack.c.l.b16 %v1713
  %v1832 = vunpack.c.l.b16 %v1714
  %v1833 = vunpack.c.l.b16 %v1715
  %v1834 = vunpack.c.l.b16 %v1716
  %v1835 = vunpack.c.l.b16 %v1717
  %v1836 = vunpack.c.l.b16 %v1718
  %v1837 = vunpack.c.l.b16 %v1719
  %v1838 = vunpack.c.l.b16 %v1720
  %v1839 = vunpack.c.l.b16 %v1721
  %v1840 = vunpack.c.l.b16 %v1722
  %v1841 = vunpack.c.l.b16 %v1723
  %v1842 = vunpack.c.l.b16 %v1724
  %v1843 = vunpack.c.l.b16 %v1725
  %v1844 = vunpack.c.l.b16 %v1726
  %v1845 = vunpack.c.l.b16 %v1727
  %v1846 = vpack.c.b16 %v1798, %v1797
  %v1847 = vpack.c.b16 %v1800, %v1799
  %v1848 = vpack.c.b16 %v1802, %v1801
  %v1849 = vpack.c.b16 %v1804, %v1803
  %v1850 = vpack.c.b16 %v1806, %v1805
  %v1851 = vpack.c.b16 %v1808, %v1807
  %v1852 = vpack.c.b16 %v1810, %v1809
  %v1853 = vpack.c.b16 %v1812, %v1811
  %v1854 = vpack.c.b16 %v1814, %v1813
  %v1855 = vpack.c.b16 %v1816, %v1815
  %v1856 = vpack.c.b16 %v1818, %v1817
  %v1857 = vpack.c.b16 %v1820, %v1819
  %v1858 = vpack.c.b16 %v1822, %v1821
  %v1859 = vpack.c.b16 %v1824, %v1823
  %v1860 = vpack.c.b16 %v1826, %v1825
  %v1861 = vpack.c.b16 %v1828, %v1827
  %v1862 = vpack.c.b16 %v1830, %v1829
  %v1863 = vpack.c.b16 %v1832, %v1831
  %v1864 = vpack.c.b16 %v1834, %v1833
  %v1865 = vpack.c.b16 %v1836, %v1835
  %v1866 = vpack.c.b16 %v1838, %v1837
  %v1867 = vpack.c.b16 %v1840, %v1839
  %v1868 = vpack.c.b16 %v1842, %v1841
  %v1869 = vpack.c.b16 %v1844, %v1843
  %v1870 = vpack.c.b16 %v1845, %v1845
  %v1912 = vunpack.c.l.b16 %v1728
  %v1913 = vunpack.c.l.b16 %v1729
  %v1914 = vunpack.c.l.b16 %v1730
  %v1915 = vunpack.c.l.b16 %v1731
  %v1916 = vunpack.c.l.b16 %v1732
  %v1917 = vunpack.c.l.b16 %v1733
  %v1918 = vunpack.c.l.b16 %v1734
  %v1919 = vunpack.c.l.b16 %v1735
  %v1920 = vunpack.c.l.b16 %v1736
  %v1921 = vunpack.c.l.b16 %v1737
  %v1922 = vunpack.c.l.b16 %v1738
  %v1923 = vunpack.c.l.b16 %v1739
  %v1924 = vunpack.c.l.b16 %v1740
  %v1925 = vunpack.c.l.b16 %v1741
  %v1926 = vunpack.c.l.b16 %v1742
  %v1927 = vunpack.c.l.b16 %v1743
  %v1928 = vpack.c.b16 %v1913, %v1912
  %v1929 = vpack.c.b16 %v1915, %v1914
  %v1930 = vpack.c.b16 %v1917, %v1916
  %v1931 = vpack.c.b16 %v1919, %v1918
  %v1932 = vpack.c.b16 %v1921, %v1920
  %v1933 = vpack.c.b16 %v1923, %v1922
  %v1934 = vpack.c.b16 %v1925, %v1924
  %v1935 = vpack.c.b16 %v1927, %v1926
  %1944 = vmatpush.bf16.msra.mxu0 %v1935
  %1945 = vmatpush.bf16.msra.mxu0 %v1934
  %1946 = vmatpush.bf16.msra.mxu0 %v1933
  %1947 = vmatpush.bf16.msra.mxu0 %v1932
  %1948 = vmatpush.bf16.msra.mxu0 %v1931
  %1949 = vmatpush.bf16.msra.mxu0 %v1930
  %1950 = vmatpush.bf16.msra.mxu0 %v1929
  %1951 = vmatpush.bf16.msra.mxu0 %v1928
  %1952 = vmatmul.bf16.gmra.mxu0 %v1846
  %v1953 = vpop.f32.mrf.mxu0
  %v1954 = vadd.f32 %v1746, %v1953
  %v1955 = vpop.f32.mrf.mxu0
  %v1956 = vadd.f32 %v1746, %v1955
  %1957 = vmatmul.bf16.gmra.mxu0 %v1847
  %v1958 = vpop.f32.mrf.mxu0
  %v1959 = vadd.f32 %v1746, %v1958
  %v1960 = vpop.f32.mrf.mxu0
  %v1961 = vadd.f32 %v1746, %v1960
  %1962 = vmatmul.bf16.gmra.mxu0 %v1848
  %v1963 = vpop.f32.mrf.mxu0
  %v1964 = vadd.f32 %v1746, %v1963
  %v1965 = vpop.f32.mrf.mxu0
  %v1966 = vadd.f32 %v1746, %v1965
  %1967 = vmatmul.bf16.gmra.mxu0 %v1849
  %v1968 = vpop.f32.mrf.mxu0
  %v1969 = vadd.f32 %v1746, %v1968
  %v1970 = vpop.f32.mrf.mxu0
  %v1971 = vadd.f32 %v1746, %v1970
  %1972 = vmatmul.bf16.gmra.mxu0 %v1850
  %v1973 = vpop.f32.mrf.mxu0
  %v1974 = vadd.f32 %v1746, %v1973
  %v1975 = vpop.f32.mrf.mxu0
  %v1976 = vadd.f32 %v1746, %v1975
  %1977 = vmatmul.bf16.gmra.mxu0 %v1851
  %v1978 = vpop.f32.mrf.mxu0
  %v1979 = vadd.f32 %v1746, %v1978
  %v1980 = vpop.f32.mrf.mxu0
  %v1981 = vadd.f32 %v1746, %v1980
  %1982 = vmatmul.bf16.gmra.mxu0 %v1852
  %v1983 = vpop.f32.mrf.mxu0
  %v1984 = vadd.f32 %v1746, %v1983
  %v1985 = vpop.f32.mrf.mxu0
  %v1986 = vadd.f32 %v1746, %v1985
  %1987 = vmatmul.bf16.gmra.mxu0 %v1853
  %v1988 = vpop.f32.mrf.mxu0
  %v1989 = vadd.f32 %v1746, %v1988
  %v1990 = vpop.f32.mrf.mxu0
  %v1991 = vadd.f32 %v1746, %v1990
  %1992 = vmatmul.bf16.gmra.mxu0 %v1854
  %v1993 = vpop.f32.mrf.mxu0
  %v1994 = vadd.f32 %v1746, %v1993
  %v1995 = vpop.f32.mrf.mxu0
  %v1996 = vadd.f32 %v1746, %v1995
  %1997 = vmatmul.bf16.gmra.mxu0 %v1855
  %v1998 = vpop.f32.mrf.mxu0
  %v1999 = vadd.f32 %v1746, %v1998
  %v2000 = vpop.f32.mrf.mxu0
  %v2001 = vadd.f32 %v1746, %v2000
  %2002 = vmatmul.bf16.gmra.mxu0 %v1856
  %v2003 = vpop.f32.mrf.mxu0
  %v2004 = vadd.f32 %v1746, %v2003
  %v2005 = vpop.f32.mrf.mxu0
  %v2006 = vadd.f32 %v1746, %v2005
  %2007 = vmatmul.bf16.gmra.mxu0 %v1857
  %v2008 = vpop.f32.mrf.mxu0
  %v2009 = vadd.f32 %v1746, %v2008
  %v2010 = vpop.f32.mrf.mxu0
  %v2011 = vadd.f32 %v1746, %v2010
  %2012 = vmatmul.bf16.gmra.mxu0 %v1858
  %v2013 = vpop.f32.mrf.mxu0
  %v2014 = vadd.f32 %v1746, %v2013
  %v2015 = vpop.f32.mrf.mxu0
  %v2016 = vadd.f32 %v1746, %v2015
  %2017 = vmatmul.bf16.gmra.mxu0 %v1859
  %v2018 = vpop.f32.mrf.mxu0
  %v2019 = vadd.f32 %v1746, %v2018
  %v2020 = vpop.f32.mrf.mxu0
  %v2021 = vadd.f32 %v1746, %v2020
  %2022 = vmatmul.bf16.gmra.mxu0 %v1860
  %v2023 = vpop.f32.mrf.mxu0
  %v2024 = vadd.f32 %v1746, %v2023
  %v2025 = vpop.f32.mrf.mxu0
  %v2026 = vadd.f32 %v1746, %v2025
  %2027 = vmatmul.bf16.gmra.mxu0 %v1861
  %v2028 = vpop.f32.mrf.mxu0
  %v2029 = vadd.f32 %v1746, %v2028
  %v2030 = vpop.f32.mrf.mxu0
  %v2031 = vadd.f32 %v1746, %v2030
  %2032 = vmatmul.bf16.gmra.mxu0 %v1862
  %v2033 = vpop.f32.mrf.mxu0
  %v2034 = vadd.f32 %v1746, %v2033
  %v2035 = vpop.f32.mrf.mxu0
  %v2036 = vadd.f32 %v1746, %v2035
  %2037 = vmatmul.bf16.gmra.mxu0 %v1863
  %v2038 = vpop.f32.mrf.mxu0
  %v2039 = vadd.f32 %v1746, %v2038
  %v2040 = vpop.f32.mrf.mxu0
  %v2041 = vadd.f32 %v1746, %v2040
  %2042 = vmatmul.bf16.gmra.mxu0 %v1864
  %v2043 = vpop.f32.mrf.mxu0
  %v2044 = vadd.f32 %v1746, %v2043
  %v2045 = vpop.f32.mrf.mxu0
  %v2046 = vadd.f32 %v1746, %v2045
  %2047 = vmatmul.bf16.gmra.mxu0 %v1865
  %v2048 = vpop.f32.mrf.mxu0
  %v2049 = vadd.f32 %v1746, %v2048
  %v2050 = vpop.f32.mrf.mxu0
  %v2051 = vadd.f32 %v1746, %v2050
  %2052 = vmatmul.bf16.gmra.mxu0 %v1866
  %v2053 = vpop.f32.mrf.mxu0
  %v2054 = vadd.f32 %v1746, %v2053
  %v2055 = vpop.f32.mrf.mxu0
  %v2056 = vadd.f32 %v1746, %v2055
  %2057 = vmatmul.bf16.gmra.mxu0 %v1867
  %v2058 = vpop.f32.mrf.mxu0
  %v2059 = vadd.f32 %v1746, %v2058
  %v2060 = vpop.f32.mrf.mxu0
  %v2061 = vadd.f32 %v1746, %v2060
  %2062 = vmatmul.bf16.gmra.mxu0 %v1868
  %v2063 = vpop.f32.mrf.mxu0
  %v2064 = vadd.f32 %v1746, %v2063
  %v2065 = vpop.f32.mrf.mxu0
  %v2066 = vadd.f32 %v1746, %v2065
  %2067 = vmatmul.bf16.gmra.mxu0 %v1869
  %v2068 = vpop.f32.mrf.mxu0
  %v2069 = vadd.f32 %v1746, %v2068
  %v2070 = vpop.f32.mrf.mxu0
  %v2071 = vadd.f32 %v1746, %v2070
  %2072 = vmatmul.bf16.gmra.mxu0 %v1870
  %v2073 = vpop.f32.mrf.mxu0
  %v2074 = vadd.f32 %v1746, %v2073
  %v2075 = vpop.f32.mrf.mxu0
  %2076 = vdwg.mxu0
  %s2077 = scalar_lea.vmem [#allocation2], 1176
  %2078 = vst.msk [vmem:[%s2077] sm:$0xff] %vm418, %v1954
  %2079 = vst.msk [vmem:[%s2077 + $0x8] sm:$0xff] %vm418, %v1956
  %2080 = vst.msk [vmem:[%s2077 + $0x10] sm:$0xff] %vm418, %v1959
  %2081 = vst.msk [vmem:[%s2077 + $0x18] sm:$0xff] %vm418, %v1961
  %2082 = vst.msk [vmem:[%s2077 + $0x20] sm:$0xff] %vm418, %v1964
  %2083 = vst.msk [vmem:[%s2077 + $0x28] sm:$0xff] %vm418, %v1966
  %2084 = vst.msk [vmem:[%s2077 + $0x30] sm:$0xff] %vm418, %v1969
  %2085 = vst.msk [vmem:[%s2077 + $0x38] sm:$0xff] %vm418, %v1971
  %2086 = vst.msk [vmem:[%s2077 + $0x40] sm:$0xff] %vm418, %v1974
  %2087 = vst.msk [vmem:[%s2077 + $0x48] sm:$0xff] %vm418, %v1976
  %2088 = vst.msk [vmem:[%s2077 + $0x50] sm:$0xff] %vm418, %v1979
  %2089 = vst.msk [vmem:[%s2077 + $0x58] sm:$0xff] %vm418, %v1981
  %2090 = vst.msk [vmem:[%s2077 + $0x60] sm:$0xff] %vm418, %v1984
  %2091 = vst.msk [vmem:[%s2077 + $0x68] sm:$0xff] %vm418, %v1986
  %2092 = vst.msk [vmem:[%s2077 + $0x70] sm:$0xff] %vm418, %v1989
  %2093 = vst.msk [vmem:[%s2077 + $0x78] sm:$0xff] %vm418, %v1991
  %2094 = vst.msk [vmem:[%s2077 + $0x80] sm:$0xff] %vm418, %v1994
  %2095 = vst.msk [vmem:[%s2077 + $0x88] sm:$0xff] %vm418, %v1996
  %2096 = vst.msk [vmem:[%s2077 + $0x90] sm:$0xff] %vm418, %v1999
  %2097 = vst.msk [vmem:[%s2077 + $0x98] sm:$0xff] %vm418, %v2001
  %2098 = vst.msk [vmem:[%s2077 + $0xa0] sm:$0xff] %vm418, %v2004
  %2099 = vst.msk [vmem:[%s2077 + $0xa8] sm:$0xff] %vm418, %v2006
  %2100 = vst.msk [vmem:[%s2077 + $0xb0] sm:$0xff] %vm418, %v2009
  %2101 = vst.msk [vmem:[%s2077 + $0xb8] sm:$0xff] %vm418, %v2011
  %2102 = vst.msk [vmem:[%s2077 + $0xc0] sm:$0xff] %vm418, %v2014
  %2103 = vst.msk [vmem:[%s2077 + $0xc8] sm:$0xff] %vm418, %v2016
  %2104 = vst.msk [vmem:[%s2077 + $0xd0] sm:$0xff] %vm418, %v2019
  %2105 = vst.msk [vmem:[%s2077 + $0xd8] sm:$0xff] %vm418, %v2021
  %2106 = vst.msk [vmem:[%s2077 + $0xe0] sm:$0xff] %vm418, %v2024
  %2107 = vst.msk [vmem:[%s2077 + $0xe8] sm:$0xff] %vm418, %v2026
  %2108 = vst.msk [vmem:[%s2077 + $0xf0] sm:$0xff] %vm418, %v2029
  %2109 = vst.msk [vmem:[%s2077 + $0xf8] sm:$0xff] %vm418, %v2031
  %2110 = vst.msk [vmem:[%s2077 + $0x100] sm:$0xff] %vm418, %v2034
  %2111 = vst.msk [vmem:[%s2077 + $0x108] sm:$0xff] %vm418, %v2036
  %2112 = vst.msk [vmem:[%s2077 + $0x110] sm:$0xff] %vm418, %v2039
  %2113 = vst.msk [vmem:[%s2077 + $0x118] sm:$0xff] %vm418, %v2041
  %2114 = vst.msk [vmem:[%s2077 + $0x120] sm:$0xff] %vm418, %v2044
  %2115 = vst.msk [vmem:[%s2077 + $0x128] sm:$0xff] %vm418, %v2046
  %2116 = vst.msk [vmem:[%s2077 + $0x130] sm:$0xff] %vm418, %v2049
  %2117 = vst.msk [vmem:[%s2077 + $0x138] sm:$0xff] %vm418, %v2051
  %2118 = vst.msk [vmem:[%s2077 + $0x140] sm:$0xff] %vm418, %v2054
  %2119 = vst.msk [vmem:[%s2077 + $0x148] sm:$0xff] %vm418, %v2056
  %2120 = vst.msk [vmem:[%s2077 + $0x150] sm:$0xff] %vm418, %v2059
  %2121 = vst.msk [vmem:[%s2077 + $0x158] sm:$0xff] %vm418, %v2061
  %2122 = vst.msk [vmem:[%s2077 + $0x160] sm:$0xff] %vm418, %v2064
  %2123 = vst.msk [vmem:[%s2077 + $0x168] sm:$0xff] %vm418, %v2066
  %2124 = vst.msk [vmem:[%s2077 + $0x170] sm:$0xff] %vm418, %v2069
  %2125 = vst.msk [vmem:[%s2077 + $0x178] sm:$0xff] %vm418, %v2071
  %2126 = vst.msk [vmem:[%s2077 + $0x180] sm:$0xff] %vm418, %v2074
  %v2127 = vsel %vm418, %v1954, 0.0
  %v2128 = vsel %vm418, %v1956, 0.0
  %v2129 = vadd.f32 %v2127, %v2128
  %v2130 = vsel %vm418, %v1959, 0.0
  %v2131 = vadd.f32 %v2129, %v2130
  %v2132 = vsel %vm418, %v1961, 0.0
  %v2133 = vadd.f32 %v2131, %v2132
  %v2134 = vsel %vm418, %v1964, 0.0
  %v2135 = vadd.f32 %v2133, %v2134
  %v2136 = vsel %vm418, %v1966, 0.0
  %v2137 = vadd.f32 %v2135, %v2136
  %v2138 = vsel %vm418, %v1969, 0.0
  %v2139 = vadd.f32 %v2137, %v2138
  %v2140 = vsel %vm418, %v1971, 0.0
  %v2141 = vadd.f32 %v2139, %v2140
  %v2142 = vsel %vm418, %v1974, 0.0
  %v2143 = vadd.f32 %v2141, %v2142
  %v2144 = vsel %vm418, %v1976, 0.0
  %v2145 = vadd.f32 %v2143, %v2144
  %v2146 = vsel %vm418, %v1979, 0.0
  %v2147 = vadd.f32 %v2145, %v2146
  %v2148 = vsel %vm418, %v1981, 0.0
  %v2149 = vadd.f32 %v2147, %v2148
  %v2150 = vsel %vm418, %v1984, 0.0
  %v2151 = vadd.f32 %v2149, %v2150
  %v2152 = vsel %vm418, %v1986, 0.0
  %v2153 = vadd.f32 %v2151, %v2152
  %v2154 = vsel %vm418, %v1989, 0.0
  %v2155 = vadd.f32 %v2153, %v2154
  %v2156 = vsel %vm418, %v1991, 0.0
  %v2157 = vadd.f32 %v2155, %v2156
  %v2158 = vsel %vm418, %v1994, 0.0
  %v2159 = vadd.f32 %v2157, %v2158
  %v2160 = vsel %vm418, %v1996, 0.0
  %v2161 = vadd.f32 %v2159, %v2160
  %v2162 = vsel %vm418, %v1999, 0.0
  %v2163 = vadd.f32 %v2161, %v2162
  %v2164 = vsel %vm418, %v2001, 0.0
  %v2165 = vadd.f32 %v2163, %v2164
  %v2166 = vsel %vm418, %v2004, 0.0
  %v2167 = vadd.f32 %v2165, %v2166
  %v2168 = vsel %vm418, %v2006, 0.0
  %v2169 = vadd.f32 %v2167, %v2168
  %v2170 = vsel %vm418, %v2009, 0.0
  %v2171 = vadd.f32 %v2169, %v2170
  %v2172 = vsel %vm418, %v2011, 0.0
  %v2173 = vadd.f32 %v2171, %v2172
  %v2174 = vsel %vm418, %v2014, 0.0
  %v2175 = vadd.f32 %v2173, %v2174
  %v2176 = vsel %vm418, %v2016, 0.0
  %v2177 = vadd.f32 %v2175, %v2176
  %v2178 = vsel %vm418, %v2019, 0.0
  %v2179 = vadd.f32 %v2177, %v2178
  %v2180 = vsel %vm418, %v2021, 0.0
  %v2181 = vadd.f32 %v2179, %v2180
  %v2182 = vsel %vm418, %v2024, 0.0
  %v2183 = vadd.f32 %v2181, %v2182
  %v2184 = vsel %vm418, %v2026, 0.0
  %v2185 = vadd.f32 %v2183, %v2184
  %v2186 = vsel %vm418, %v2029, 0.0
  %v2187 = vadd.f32 %v2185, %v2186
  %v2188 = vsel %vm418, %v2031, 0.0
  %v2189 = vadd.f32 %v2187, %v2188
  %v2190 = vsel %vm418, %v2034, 0.0
  %v2191 = vadd.f32 %v2189, %v2190
  %v2192 = vsel %vm418, %v2036, 0.0
  %v2193 = vadd.f32 %v2191, %v2192
  %v2194 = vsel %vm418, %v2039, 0.0
  %v2195 = vadd.f32 %v2193, %v2194
  %v2196 = vsel %vm418, %v2041, 0.0
  %v2197 = vadd.f32 %v2195, %v2196
  %v2198 = vsel %vm418, %v2044, 0.0
  %v2199 = vadd.f32 %v2197, %v2198
  %v2200 = vsel %vm418, %v2046, 0.0
  %v2201 = vadd.f32 %v2199, %v2200
  %v2202 = vsel %vm418, %v2049, 0.0
  %v2203 = vadd.f32 %v2201, %v2202
  %v2204 = vsel %vm418, %v2051, 0.0
  %v2205 = vadd.f32 %v2203, %v2204
  %v2206 = vsel %vm418, %v2054, 0.0
  %v2207 = vadd.f32 %v2205, %v2206
  %v2208 = vsel %vm418, %v2056, 0.0
  %v2209 = vadd.f32 %v2207, %v2208
  %v2210 = vsel %vm418, %v2059, 0.0
  %v2211 = vadd.f32 %v2209, %v2210
  %v2212 = vsel %vm418, %v2061, 0.0
  %v2213 = vadd.f32 %v2211, %v2212
  %v2214 = vsel %vm418, %v2064, 0.0
  %v2215 = vadd.f32 %v2213, %v2214
  %v2216 = vsel %vm418, %v2066, 0.0
  %v2217 = vadd.f32 %v2215, %v2216
  %v2218 = vsel %vm418, %v2069, 0.0
  %v2219 = vadd.f32 %v2217, %v2218
  %v2220 = vsel %vm418, %v2071, 0.0
  %v2221 = vadd.f32 %v2219, %v2220
  %v2222 = vsel %vm418, %v2074, 0.0
  %v2223 = vadd.f32 %v2221, %v2222
  %v2224 = vrot.slane %v2223, 4
  %v2225 = vadd.f32 %v2223, %v2224
  %v2226 = vrot.slane %v2225, 2
  %v2227 = vadd.f32 %v2225, %v2226
  %v2228 = vrot.slane %v2227, 1
  %v2229 = vadd.f32 %v2227, %v2228
  %v2230 = vadd.f32 %v1677, %v2229
  %v2231 = vmul.f32 %v2230, 0.0006377551
  %v2232 = vld [vmem:[#allocation2] sm:$0xff]
  %v2233 = vld [vmem:[#allocation2 + $0x8] sm:$0xff]
  %v2234 = vld [vmem:[#allocation2 + $0x10] sm:$0xff]
  %v2235 = vld [vmem:[#allocation2 + $0x18] sm:$0xff]
  %v2236 = vld [vmem:[#allocation2 + $0x20] sm:$0xff]
  %v2237 = vld [vmem:[#allocation2 + $0x28] sm:$0xff]
  %v2238 = vld [vmem:[#allocation2 + $0x30] sm:$0xff]
  %v2239 = vld [vmem:[#allocation2 + $0x38] sm:$0xff]
  %v2240 = vld [vmem:[#allocation2 + $0x40] sm:$0xff]
  %v2241 = vld [vmem:[#allocation2 + $0x48] sm:$0xff]
  %v2242 = vld [vmem:[#allocation2 + $0x50] sm:$0xff]
  %v2243 = vld [vmem:[#allocation2 + $0x58] sm:$0xff]
  %v2244 = vld [vmem:[#allocation2 + $0x60] sm:$0xff]
  %v2245 = vld [vmem:[#allocation2 + $0x68] sm:$0xff]
  %v2246 = vld [vmem:[#allocation2 + $0x70] sm:$0xff]
  %v2247 = vld [vmem:[#allocation2 + $0x78] sm:$0xff]
  %v2248 = vld [vmem:[#allocation2 + $0x80] sm:$0xff]
  %v2249 = vld [vmem:[#allocation2 + $0x88] sm:$0xff]
  %v2250 = vld [vmem:[#allocation2 + $0x90] sm:$0xff]
  %v2251 = vld [vmem:[#allocation2 + $0x98] sm:$0xff]
  %v2252 = vld [vmem:[#allocation2 + $0xa0] sm:$0xff]
  %v2253 = vld [vmem:[#allocation2 + $0xa8] sm:$0xff]
  %v2254 = vld [vmem:[#allocation2 + $0xb0] sm:$0xff]
  %v2255 = vld [vmem:[#allocation2 + $0xb8] sm:$0xff]
  %v2256 = vld [vmem:[#allocation2 + $0xc0] sm:$0xff]
  %v2257 = vld [vmem:[#allocation2 + $0xc8] sm:$0xff]
  %v2258 = vld [vmem:[#allocation2 + $0xd0] sm:$0xff]
  %v2259 = vld [vmem:[#allocation2 + $0xd8] sm:$0xff]
  %v2260 = vld [vmem:[#allocation2 + $0xe0] sm:$0xff]
  %v2261 = vld [vmem:[#allocation2 + $0xe8] sm:$0xff]
  %v2262 = vld [vmem:[#allocation2 + $0xf0] sm:$0xff]
  %v2263 = vld [vmem:[#allocation2 + $0xf8] sm:$0xff]
  %v2264 = vld [vmem:[#allocation2 + $0x100] sm:$0xff]
  %v2265 = vld [vmem:[#allocation2 + $0x108] sm:$0xff]
  %v2266 = vld [vmem:[#allocation2 + $0x110] sm:$0xff]
  %v2267 = vld [vmem:[#allocation2 + $0x118] sm:$0xff]
  %v2268 = vld [vmem:[#allocation2 + $0x120] sm:$0xff]
  %v2269 = vld [vmem:[#allocation2 + $0x128] sm:$0xff]
  %v2270 = vld [vmem:[#allocation2 + $0x130] sm:$0xff]
  %v2271 = vld [vmem:[#allocation2 + $0x138] sm:$0xff]
  %v2272 = vld [vmem:[#allocation2 + $0x140] sm:$0xff]
  %v2273 = vld [vmem:[#allocation2 + $0x148] sm:$0xff]
  %v2274 = vld [vmem:[#allocation2 + $0x150] sm:$0xff]
  %v2275 = vld [vmem:[#allocation2 + $0x158] sm:$0xff]
  %v2276 = vld [vmem:[#allocation2 + $0x160] sm:$0xff]
  %v2277 = vld [vmem:[#allocation2 + $0x168] sm:$0xff]
  %v2278 = vld [vmem:[#allocation2 + $0x170] sm:$0xff]
  %v2279 = vld [vmem:[#allocation2 + $0x178] sm:$0xff]
  %v2280 = vld [vmem:[#allocation2 + $0x180] sm:$0xff]
  %v2281 = vsub.f32 %v2232, %v2231
  %v2282 = vsub.f32 %v2233, %v2231
  %v2283 = vsub.f32 %v2234, %v2231
  %v2284 = vsub.f32 %v2235, %v2231
  %v2285 = vsub.f32 %v2236, %v2231
  %v2286 = vsub.f32 %v2237, %v2231
  %v2287 = vsub.f32 %v2238, %v2231
  %v2288 = vsub.f32 %v2239, %v2231
  %v2289 = vsub.f32 %v2240, %v2231
  %v2290 = vsub.f32 %v2241, %v2231
  %v2291 = vsub.f32 %v2242, %v2231
  %v2292 = vsub.f32 %v2243, %v2231
  %v2293 = vsub.f32 %v2244, %v2231
  %v2294 = vsub.f32 %v2245, %v2231
  %v2295 = vsub.f32 %v2246, %v2231
  %v2296 = vsub.f32 %v2247, %v2231
  %v2297 = vsub.f32 %v2248, %v2231
  %v2298 = vsub.f32 %v2249, %v2231
  %v2299 = vsub.f32 %v2250, %v2231
  %v2300 = vsub.f32 %v2251, %v2231
  %v2301 = vsub.f32 %v2252, %v2231
  %v2302 = vsub.f32 %v2253, %v2231
  %v2303 = vsub.f32 %v2254, %v2231
  %v2304 = vsub.f32 %v2255, %v2231
  %v2305 = vsub.f32 %v2256, %v2231
  %v2306 = vsub.f32 %v2257, %v2231
  %v2307 = vsub.f32 %v2258, %v2231
  %v2308 = vsub.f32 %v2259, %v2231
  %v2309 = vsub.f32 %v2260, %v2231
  %v2310 = vsub.f32 %v2261, %v2231
  %v2311 = vsub.f32 %v2262, %v2231
  %v2312 = vsub.f32 %v2263, %v2231
  %v2313 = vsub.f32 %v2264, %v2231
  %v2314 = vsub.f32 %v2265, %v2231
  %v2315 = vsub.f32 %v2266, %v2231
  %v2316 = vsub.f32 %v2267, %v2231
  %v2317 = vsub.f32 %v2268, %v2231
  %v2318 = vsub.f32 %v2269, %v2231
  %v2319 = vsub.f32 %v2270, %v2231
  %v2320 = vsub.f32 %v2271, %v2231
  %v2321 = vsub.f32 %v2272, %v2231
  %v2322 = vsub.f32 %v2273, %v2231
  %v2323 = vsub.f32 %v2274, %v2231
  %v2324 = vsub.f32 %v2275, %v2231
  %v2325 = vsub.f32 %v2276, %v2231
  %v2326 = vsub.f32 %v2277, %v2231
  %v2327 = vsub.f32 %v2278, %v2231
  %v2328 = vsub.f32 %v2279, %v2231
  %v2329 = vsub.f32 %v2280, %v2231
  %v2330 = vmul.f32 %v2281, %v2281
  %v2331 = vmul.f32 %v2282, %v2282
  %v2332 = vmul.f32 %v2283, %v2283
  %v2333 = vmul.f32 %v2284, %v2284
  %v2334 = vmul.f32 %v2285, %v2285
  %v2335 = vmul.f32 %v2286, %v2286
  %v2336 = vmul.f32 %v2287, %v2287
  %v2337 = vmul.f32 %v2288, %v2288
  %v2338 = vmul.f32 %v2289, %v2289
  %v2339 = vmul.f32 %v2290, %v2290
  %v2340 = vmul.f32 %v2291, %v2291
  %v2341 = vmul.f32 %v2292, %v2292
  %v2342 = vmul.f32 %v2293, %v2293
  %v2343 = vmul.f32 %v2294, %v2294
  %v2344 = vmul.f32 %v2295, %v2295
  %v2345 = vmul.f32 %v2296, %v2296
  %v2346 = vmul.f32 %v2297, %v2297
  %v2347 = vmul.f32 %v2298, %v2298
  %v2348 = vmul.f32 %v2299, %v2299
  %v2349 = vmul.f32 %v2300, %v2300
  %v2350 = vmul.f32 %v2301, %v2301
  %v2351 = vmul.f32 %v2302, %v2302
  %v2352 = vmul.f32 %v2303, %v2303
  %v2353 = vmul.f32 %v2304, %v2304
  %v2354 = vmul.f32 %v2305, %v2305
  %v2355 = vmul.f32 %v2306, %v2306
  %v2356 = vmul.f32 %v2307, %v2307
  %v2357 = vmul.f32 %v2308, %v2308
  %v2358 = vmul.f32 %v2309, %v2309
  %v2359 = vmul.f32 %v2310, %v2310
  %v2360 = vmul.f32 %v2311, %v2311
  %v2361 = vmul.f32 %v2312, %v2312
  %v2362 = vmul.f32 %v2313, %v2313
  %v2363 = vmul.f32 %v2314, %v2314
  %v2364 = vmul.f32 %v2315, %v2315
  %v2365 = vmul.f32 %v2316, %v2316
  %v2366 = vmul.f32 %v2317, %v2317
  %v2367 = vmul.f32 %v2318, %v2318
  %v2368 = vmul.f32 %v2319, %v2319
  %v2369 = vmul.f32 %v2320, %v2320
  %v2370 = vmul.f32 %v2321, %v2321
  %v2371 = vmul.f32 %v2322, %v2322
  %v2372 = vmul.f32 %v2323, %v2323
  %v2373 = vmul.f32 %v2324, %v2324
  %v2374 = vmul.f32 %v2325, %v2325
  %v2375 = vmul.f32 %v2326, %v2326
  %v2376 = vmul.f32 %v2327, %v2327
  %v2377 = vmul.f32 %v2328, %v2328
  %v2378 = vmul.f32 %v2329, %v2329
  %v2379 = vsel %vm418, %v2330, 0.0
  %v2380 = vsel %vm418, %v2331, 0.0
  %v2381 = vadd.f32 %v2379, %v2380
  %v2382 = vsel %vm418, %v2332, 0.0
  %v2383 = vadd.f32 %v2381, %v2382
  %v2384 = vsel %vm418, %v2333, 0.0
  %v2385 = vadd.f32 %v2383, %v2384
  %v2386 = vsel %vm418, %v2334, 0.0
  %v2387 = vadd.f32 %v2385, %v2386
  %v2388 = vsel %vm418, %v2335, 0.0
  %v2389 = vadd.f32 %v2387, %v2388
  %v2390 = vsel %vm418, %v2336, 0.0
  %v2391 = vadd.f32 %v2389, %v2390
  %v2392 = vsel %vm418, %v2337, 0.0
  %v2393 = vadd.f32 %v2391, %v2392
  %v2394 = vsel %vm418, %v2338, 0.0
  %v2395 = vadd.f32 %v2393, %v2394
  %v2396 = vsel %vm418, %v2339, 0.0
  %v2397 = vadd.f32 %v2395, %v2396
  %v2398 = vsel %vm418, %v2340, 0.0
  %v2399 = vadd.f32 %v2397, %v2398
  %v2400 = vsel %vm418, %v2341, 0.0
  %v2401 = vadd.f32 %v2399, %v2400
  %v2402 = vsel %vm418, %v2342, 0.0
  %v2403 = vadd.f32 %v2401, %v2402
  %v2404 = vsel %vm418, %v2343, 0.0
  %v2405 = vadd.f32 %v2403, %v2404
  %v2406 = vsel %vm418, %v2344, 0.0
  %v2407 = vadd.f32 %v2405, %v2406
  %v2408 = vsel %vm418, %v2345, 0.0
  %v2409 = vadd.f32 %v2407, %v2408
  %v2410 = vsel %vm418, %v2346, 0.0
  %v2411 = vadd.f32 %v2409, %v2410
  %v2412 = vsel %vm418, %v2347, 0.0
  %v2413 = vadd.f32 %v2411, %v2412
  %v2414 = vsel %vm418, %v2348, 0.0
  %v2415 = vadd.f32 %v2413, %v2414
  %v2416 = vsel %vm418, %v2349, 0.0
  %v2417 = vadd.f32 %v2415, %v2416
  %v2418 = vsel %vm418, %v2350, 0.0
  %v2419 = vadd.f32 %v2417, %v2418
  %v2420 = vsel %vm418, %v2351, 0.0
  %v2421 = vadd.f32 %v2419, %v2420
  %v2422 = vsel %vm418, %v2352, 0.0
  %v2423 = vadd.f32 %v2421, %v2422
  %v2424 = vsel %vm418, %v2353, 0.0
  %v2425 = vadd.f32 %v2423, %v2424
  %v2426 = vsel %vm418, %v2354, 0.0
  %v2427 = vadd.f32 %v2425, %v2426
  %v2428 = vsel %vm418, %v2355, 0.0
  %v2429 = vadd.f32 %v2427, %v2428
  %v2430 = vsel %vm418, %v2356, 0.0
  %v2431 = vadd.f32 %v2429, %v2430
  %v2432 = vsel %vm418, %v2357, 0.0
  %v2433 = vadd.f32 %v2431, %v2432
  %v2434 = vsel %vm418, %v2358, 0.0
  %v2435 = vadd.f32 %v2433, %v2434
  %v2436 = vsel %vm418, %v2359, 0.0
  %v2437 = vadd.f32 %v2435, %v2436
  %v2438 = vsel %vm418, %v2360, 0.0
  %v2439 = vadd.f32 %v2437, %v2438
  %v2440 = vsel %vm418, %v2361, 0.0
  %v2441 = vadd.f32 %v2439, %v2440
  %v2442 = vsel %vm418, %v2362, 0.0
  %v2443 = vadd.f32 %v2441, %v2442
  %v2444 = vsel %vm418, %v2363, 0.0
  %v2445 = vadd.f32 %v2443, %v2444
  %v2446 = vsel %vm418, %v2364, 0.0
  %v2447 = vadd.f32 %v2445, %v2446
  %v2448 = vsel %vm418, %v2365, 0.0
  %v2449 = vadd.f32 %v2447, %v2448
  %v2450 = vsel %vm418, %v2366, 0.0
  %v2451 = vadd.f32 %v2449, %v2450
  %v2452 = vsel %vm418, %v2367, 0.0
  %v2453 = vadd.f32 %v2451, %v2452
  %v2454 = vsel %vm418, %v2368, 0.0
  %v2455 = vadd.f32 %v2453, %v2454
  %v2456 = vsel %vm418, %v2369, 0.0
  %v2457 = vadd.f32 %v2455, %v2456
  %v2458 = vsel %vm418, %v2370, 0.0
  %v2459 = vadd.f32 %v2457, %v2458
  %v2460 = vsel %vm418, %v2371, 0.0
  %v2461 = vadd.f32 %v2459, %v2460
  %v2462 = vsel %vm418, %v2372, 0.0
  %v2463 = vadd.f32 %v2461, %v2462
  %v2464 = vsel %vm418, %v2373, 0.0
  %v2465 = vadd.f32 %v2463, %v2464
  %v2466 = vsel %vm418, %v2374, 0.0
  %v2467 = vadd.f32 %v2465, %v2466
  %v2468 = vsel %vm418, %v2375, 0.0
  %v2469 = vadd.f32 %v2467, %v2468
  %v2470 = vsel %vm418, %v2376, 0.0
  %v2471 = vadd.f32 %v2469, %v2470
  %v2472 = vsel %vm418, %v2377, 0.0
  %v2473 = vadd.f32 %v2471, %v2472
  %v2474 = vsel %vm418, %v2378, 0.0
  %v2475 = vadd.f32 %v2473, %v2474
  %v2476 = vrot.slane %v2475, 4
  %v2477 = vadd.f32 %v2475, %v2476
  %v2478 = vrot.slane %v2477, 2
  %v2479 = vadd.f32 %v2477, %v2478
  %v2480 = vrot.slane %v2479, 1
  %v2481 = vadd.f32 %v2479, %v2480
  %v2482 = vadd.f32 %v2481, 0.0
  %v2483 = vld [vmem:[%s971] sm:$0xff]
  %v2484 = vld [vmem:[%s971 + $0x8] sm:$0xff]
  %v2485 = vld [vmem:[%s971 + $0x10] sm:$0xff]
  %v2486 = vld [vmem:[%s971 + $0x18] sm:$0xff]
  %v2487 = vld [vmem:[%s971 + $0x20] sm:$0xff]
  %v2488 = vld [vmem:[%s971 + $0x28] sm:$0xff]
  %v2489 = vld [vmem:[%s971 + $0x30] sm:$0xff]
  %v2490 = vld [vmem:[%s971 + $0x38] sm:$0xff]
  %v2491 = vld [vmem:[%s971 + $0x40] sm:$0xff]
  %v2492 = vld [vmem:[%s971 + $0x48] sm:$0xff]
  %v2493 = vld [vmem:[%s971 + $0x50] sm:$0xff]
  %v2494 = vld [vmem:[%s971 + $0x58] sm:$0xff]
  %v2495 = vld [vmem:[%s971 + $0x60] sm:$0xff]
  %v2496 = vld [vmem:[%s971 + $0x68] sm:$0xff]
  %v2497 = vld [vmem:[%s971 + $0x70] sm:$0xff]
  %v2498 = vld [vmem:[%s971 + $0x78] sm:$0xff]
  %v2499 = vld [vmem:[%s971 + $0x80] sm:$0xff]
  %v2500 = vld [vmem:[%s971 + $0x88] sm:$0xff]
  %v2501 = vld [vmem:[%s971 + $0x90] sm:$0xff]
  %v2502 = vld [vmem:[%s971 + $0x98] sm:$0xff]
  %v2503 = vld [vmem:[%s971 + $0xa0] sm:$0xff]
  %v2504 = vld [vmem:[%s971 + $0xa8] sm:$0xff]
  %v2505 = vld [vmem:[%s971 + $0xb0] sm:$0xff]
  %v2506 = vld [vmem:[%s971 + $0xb8] sm:$0xff]
  %v2507 = vld [vmem:[%s971 + $0xc0] sm:$0xff]
  %v2508 = vld [vmem:[%s971 + $0xc8] sm:$0xff]
  %v2509 = vld [vmem:[%s971 + $0xd0] sm:$0xff]
  %v2510 = vld [vmem:[%s971 + $0xd8] sm:$0xff]
  %v2511 = vld [vmem:[%s971 + $0xe0] sm:$0xff]
  %v2512 = vld [vmem:[%s971 + $0xe8] sm:$0xff]
  %v2513 = vld [vmem:[%s971 + $0xf0] sm:$0xff]
  %v2514 = vld [vmem:[%s971 + $0xf8] sm:$0xff]
  %v2515 = vld [vmem:[%s971 + $0x100] sm:$0xff]
  %v2516 = vld [vmem:[%s971 + $0x108] sm:$0xff]
  %v2517 = vld [vmem:[%s971 + $0x110] sm:$0xff]
  %v2518 = vld [vmem:[%s971 + $0x118] sm:$0xff]
  %v2519 = vld [vmem:[%s971 + $0x120] sm:$0xff]
  %v2520 = vld [vmem:[%s971 + $0x128] sm:$0xff]
  %v2521 = vld [vmem:[%s971 + $0x130] sm:$0xff]
  %v2522 = vld [vmem:[%s971 + $0x138] sm:$0xff]
  %v2523 = vld [vmem:[%s971 + $0x140] sm:$0xff]
  %v2524 = vld [vmem:[%s971 + $0x148] sm:$0xff]
  %v2525 = vld [vmem:[%s971 + $0x150] sm:$0xff]
  %v2526 = vld [vmem:[%s971 + $0x158] sm:$0xff]
  %v2527 = vld [vmem:[%s971 + $0x160] sm:$0xff]
  %v2528 = vld [vmem:[%s971 + $0x168] sm:$0xff]
  %v2529 = vld [vmem:[%s971 + $0x170] sm:$0xff]
  %v2530 = vld [vmem:[%s971 + $0x178] sm:$0xff]
  %v2531 = vld [vmem:[%s971 + $0x180] sm:$0xff]
  %v2532 = vsub.f32 %v2483, %v2231
  %v2533 = vsub.f32 %v2484, %v2231
  %v2534 = vsub.f32 %v2485, %v2231
  %v2535 = vsub.f32 %v2486, %v2231
  %v2536 = vsub.f32 %v2487, %v2231
  %v2537 = vsub.f32 %v2488, %v2231
  %v2538 = vsub.f32 %v2489, %v2231
  %v2539 = vsub.f32 %v2490, %v2231
  %v2540 = vsub.f32 %v2491, %v2231
  %v2541 = vsub.f32 %v2492, %v2231
  %v2542 = vsub.f32 %v2493, %v2231
  %v2543 = vsub.f32 %v2494, %v2231
  %v2544 = vsub.f32 %v2495, %v2231
  %v2545 = vsub.f32 %v2496, %v2231
  %v2546 = vsub.f32 %v2497, %v2231
  %v2547 = vsub.f32 %v2498, %v2231
  %v2548 = vsub.f32 %v2499, %v2231
  %v2549 = vsub.f32 %v2500, %v2231
  %v2550 = vsub.f32 %v2501, %v2231
  %v2551 = vsub.f32 %v2502, %v2231
  %v2552 = vsub.f32 %v2503, %v2231
  %v2553 = vsub.f32 %v2504, %v2231
  %v2554 = vsub.f32 %v2505, %v2231
  %v2555 = vsub.f32 %v2506, %v2231
  %v2556 = vsub.f32 %v2507, %v2231
  %v2557 = vsub.f32 %v2508, %v2231
  %v2558 = vsub.f32 %v2509, %v2231
  %v2559 = vsub.f32 %v2510, %v2231
  %v2560 = vsub.f32 %v2511, %v2231
  %v2561 = vsub.f32 %v2512, %v2231
  %v2562 = vsub.f32 %v2513, %v2231
  %v2563 = vsub.f32 %v2514, %v2231
  %v2564 = vsub.f32 %v2515, %v2231
  %v2565 = vsub.f32 %v2516, %v2231
  %v2566 = vsub.f32 %v2517, %v2231
  %v2567 = vsub.f32 %v2518, %v2231
  %v2568 = vsub.f32 %v2519, %v2231
  %v2569 = vsub.f32 %v2520, %v2231
  %v2570 = vsub.f32 %v2521, %v2231
  %v2571 = vsub.f32 %v2522, %v2231
  %v2572 = vsub.f32 %v2523, %v2231
  %v2573 = vsub.f32 %v2524, %v2231
  %v2574 = vsub.f32 %v2525, %v2231
  %v2575 = vsub.f32 %v2526, %v2231
  %v2576 = vsub.f32 %v2527, %v2231
  %v2577 = vsub.f32 %v2528, %v2231
  %v2578 = vsub.f32 %v2529, %v2231
  %v2579 = vsub.f32 %v2530, %v2231
  %v2580 = vsub.f32 %v2531, %v2231
  %v2581 = vmul.f32 %v2532, %v2532
  %v2582 = vmul.f32 %v2533, %v2533
  %v2583 = vmul.f32 %v2534, %v2534
  %v2584 = vmul.f32 %v2535, %v2535
  %v2585 = vmul.f32 %v2536, %v2536
  %v2586 = vmul.f32 %v2537, %v2537
  %v2587 = vmul.f32 %v2538, %v2538
  %v2588 = vmul.f32 %v2539, %v2539
  %v2589 = vmul.f32 %v2540, %v2540
  %v2590 = vmul.f32 %v2541, %v2541
  %v2591 = vmul.f32 %v2542, %v2542
  %v2592 = vmul.f32 %v2543, %v2543
  %v2593 = vmul.f32 %v2544, %v2544
  %v2594 = vmul.f32 %v2545, %v2545
  %v2595 = vmul.f32 %v2546, %v2546
  %v2596 = vmul.f32 %v2547, %v2547
  %v2597 = vmul.f32 %v2548, %v2548
  %v2598 = vmul.f32 %v2549, %v2549
  %v2599 = vmul.f32 %v2550, %v2550
  %v2600 = vmul.f32 %v2551, %v2551
  %v2601 = vmul.f32 %v2552, %v2552
  %v2602 = vmul.f32 %v2553, %v2553
  %v2603 = vmul.f32 %v2554, %v2554
  %v2604 = vmul.f32 %v2555, %v2555
  %v2605 = vmul.f32 %v2556, %v2556
  %v2606 = vmul.f32 %v2557, %v2557
  %v2607 = vmul.f32 %v2558, %v2558
  %v2608 = vmul.f32 %v2559, %v2559
  %v2609 = vmul.f32 %v2560, %v2560
  %v2610 = vmul.f32 %v2561, %v2561
  %v2611 = vmul.f32 %v2562, %v2562
  %v2612 = vmul.f32 %v2563, %v2563
  %v2613 = vmul.f32 %v2564, %v2564
  %v2614 = vmul.f32 %v2565, %v2565
  %v2615 = vmul.f32 %v2566, %v2566
  %v2616 = vmul.f32 %v2567, %v2567
  %v2617 = vmul.f32 %v2568, %v2568
  %v2618 = vmul.f32 %v2569, %v2569
  %v2619 = vmul.f32 %v2570, %v2570
  %v2620 = vmul.f32 %v2571, %v2571
  %v2621 = vmul.f32 %v2572, %v2572
  %v2622 = vmul.f32 %v2573, %v2573
  %v2623 = vmul.f32 %v2574, %v2574
  %v2624 = vmul.f32 %v2575, %v2575
  %v2625 = vmul.f32 %v2576, %v2576
  %v2626 = vmul.f32 %v2577, %v2577
  %v2627 = vmul.f32 %v2578, %v2578
  %v2628 = vmul.f32 %v2579, %v2579
  %v2629 = vmul.f32 %v2580, %v2580
  %v2630 = vsel %vm418, %v2581, 0.0
  %v2631 = vsel %vm418, %v2582, 0.0
  %v2632 = vadd.f32 %v2630, %v2631
  %v2633 = vsel %vm418, %v2583, 0.0
  %v2634 = vadd.f32 %v2632, %v2633
  %v2635 = vsel %vm418, %v2584, 0.0
  %v2636 = vadd.f32 %v2634, %v2635
  %v2637 = vsel %vm418, %v2585, 0.0
  %v2638 = vadd.f32 %v2636, %v2637
  %v2639 = vsel %vm418, %v2586, 0.0
  %v2640 = vadd.f32 %v2638, %v2639
  %v2641 = vsel %vm418, %v2587, 0.0
  %v2642 = vadd.f32 %v2640, %v2641
  %v2643 = vsel %vm418, %v2588, 0.0
  %v2644 = vadd.f32 %v2642, %v2643
  %v2645 = vsel %vm418, %v2589, 0.0
  %v2646 = vadd.f32 %v2644, %v2645
  %v2647 = vsel %vm418, %v2590, 0.0
  %v2648 = vadd.f32 %v2646, %v2647
  %v2649 = vsel %vm418, %v2591, 0.0
  %v2650 = vadd.f32 %v2648, %v2649
  %v2651 = vsel %vm418, %v2592, 0.0
  %v2652 = vadd.f32 %v2650, %v2651
  %v2653 = vsel %vm418, %v2593, 0.0
  %v2654 = vadd.f32 %v2652, %v2653
  %v2655 = vsel %vm418, %v2594, 0.0
  %v2656 = vadd.f32 %v2654, %v2655
  %v2657 = vsel %vm418, %v2595, 0.0
  %v2658 = vadd.f32 %v2656, %v2657
  %v2659 = vsel %vm418, %v2596, 0.0
  %v2660 = vadd.f32 %v2658, %v2659
  %v2661 = vsel %vm418, %v2597, 0.0
  %v2662 = vadd.f32 %v2660, %v2661
  %v2663 = vsel %vm418, %v2598, 0.0
  %v2664 = vadd.f32 %v2662, %v2663
  %v2665 = vsel %vm418, %v2599, 0.0
  %v2666 = vadd.f32 %v2664, %v2665
  %v2667 = vsel %vm418, %v2600, 0.0
  %v2668 = vadd.f32 %v2666, %v2667
  %v2669 = vsel %vm418, %v2601, 0.0
  %v2670 = vadd.f32 %v2668, %v2669
  %v2671 = vsel %vm418, %v2602, 0.0
  %v2672 = vadd.f32 %v2670, %v2671
  %v2673 = vsel %vm418, %v2603, 0.0
  %v2674 = vadd.f32 %v2672, %v2673
  %v2675 = vsel %vm418, %v2604, 0.0
  %v2676 = vadd.f32 %v2674, %v2675
  %v2677 = vsel %vm418, %v2605, 0.0
  %v2678 = vadd.f32 %v2676, %v2677
  %v2679 = vsel %vm418, %v2606, 0.0
  %v2680 = vadd.f32 %v2678, %v2679
  %v2681 = vsel %vm418, %v2607, 0.0
  %v2682 = vadd.f32 %v2680, %v2681
  %v2683 = vsel %vm418, %v2608, 0.0
  %v2684 = vadd.f32 %v2682, %v2683
  %v2685 = vsel %vm418, %v2609, 0.0
  %v2686 = vadd.f32 %v2684, %v2685
  %v2687 = vsel %vm418, %v2610, 0.0
  %v2688 = vadd.f32 %v2686, %v2687
  %v2689 = vsel %vm418, %v2611, 0.0
  %v2690 = vadd.f32 %v2688, %v2689
  %v2691 = vsel %vm418, %v2612, 0.0
  %v2692 = vadd.f32 %v2690, %v2691
  %v2693 = vsel %vm418, %v2613, 0.0
  %v2694 = vadd.f32 %v2692, %v2693
  %v2695 = vsel %vm418, %v2614, 0.0
  %v2696 = vadd.f32 %v2694, %v2695
  %v2697 = vsel %vm418, %v2615, 0.0
  %v2698 = vadd.f32 %v2696, %v2697
  %v2699 = vsel %vm418, %v2616, 0.0
  %v2700 = vadd.f32 %v2698, %v2699
  %v2701 = vsel %vm418, %v2617, 0.0
  %v2702 = vadd.f32 %v2700, %v2701
  %v2703 = vsel %vm418, %v2618, 0.0
  %v2704 = vadd.f32 %v2702, %v2703
  %v2705 = vsel %vm418, %v2619, 0.0
  %v2706 = vadd.f32 %v2704, %v2705
  %v2707 = vsel %vm418, %v2620, 0.0
  %v2708 = vadd.f32 %v2706, %v2707
  %v2709 = vsel %vm418, %v2621, 0.0
  %v2710 = vadd.f32 %v2708, %v2709
  %v2711 = vsel %vm418, %v2622, 0.0
  %v2712 = vadd.f32 %v2710, %v2711
  %v2713 = vsel %vm418, %v2623, 0.0
  %v2714 = vadd.f32 %v2712, %v2713
  %v2715 = vsel %vm418, %v2624, 0.0
  %v2716 = vadd.f32 %v2714, %v2715
  %v2717 = vsel %vm418, %v2625, 0.0
  %v2718 = vadd.f32 %v2716, %v2717
  %v2719 = vsel %vm418, %v2626, 0.0
  %v2720 = vadd.f32 %v2718, %v2719
  %v2721 = vsel %vm418, %v2627, 0.0
  %v2722 = vadd.f32 %v2720, %v2721
  %v2723 = vsel %vm418, %v2628, 0.0
  %v2724 = vadd.f32 %v2722, %v2723
  %v2725 = vsel %vm418, %v2629, 0.0
  %v2726 = vadd.f32 %v2724, %v2725
  %v2727 = vrot.slane %v2726, 4
  %v2728 = vadd.f32 %v2726, %v2727
  %v2729 = vrot.slane %v2728, 2
  %v2730 = vadd.f32 %v2728, %v2729
  %v2731 = vrot.slane %v2730, 1
  %v2732 = vadd.f32 %v2730, %v2731
  %v2733 = vadd.f32 %v2482, %v2732
  %v2734 = vld [vmem:[%s1524] sm:$0xff]
  %v2735 = vld [vmem:[%s1524 + $0x8] sm:$0xff]
  %v2736 = vld [vmem:[%s1524 + $0x10] sm:$0xff]
  %v2737 = vld [vmem:[%s1524 + $0x18] sm:$0xff]
  %v2738 = vld [vmem:[%s1524 + $0x20] sm:$0xff]
  %v2739 = vld [vmem:[%s1524 + $0x28] sm:$0xff]
  %v2740 = vld [vmem:[%s1524 + $0x30] sm:$0xff]
  %v2741 = vld [vmem:[%s1524 + $0x38] sm:$0xff]
  %v2742 = vld [vmem:[%s1524 + $0x40] sm:$0xff]
  %v2743 = vld [vmem:[%s1524 + $0x48] sm:$0xff]
  %v2744 = vld [vmem:[%s1524 + $0x50] sm:$0xff]
  %v2745 = vld [vmem:[%s1524 + $0x58] sm:$0xff]
  %v2746 = vld [vmem:[%s1524 + $0x60] sm:$0xff]
  %v2747 = vld [vmem:[%s1524 + $0x68] sm:$0xff]
  %v2748 = vld [vmem:[%s1524 + $0x70] sm:$0xff]
  %v2749 = vld [vmem:[%s1524 + $0x78] sm:$0xff]
  %v2750 = vld [vmem:[%s1524 + $0x80] sm:$0xff]
  %v2751 = vld [vmem:[%s1524 + $0x88] sm:$0xff]
  %v2752 = vld [vmem:[%s1524 + $0x90] sm:$0xff]
  %v2753 = vld [vmem:[%s1524 + $0x98] sm:$0xff]
  %v2754 = vld [vmem:[%s1524 + $0xa0] sm:$0xff]
  %v2755 = vld [vmem:[%s1524 + $0xa8] sm:$0xff]
  %v2756 = vld [vmem:[%s1524 + $0xb0] sm:$0xff]
  %v2757 = vld [vmem:[%s1524 + $0xb8] sm:$0xff]
  %v2758 = vld [vmem:[%s1524 + $0xc0] sm:$0xff]
  %v2759 = vld [vmem:[%s1524 + $0xc8] sm:$0xff]
  %v2760 = vld [vmem:[%s1524 + $0xd0] sm:$0xff]
  %v2761 = vld [vmem:[%s1524 + $0xd8] sm:$0xff]
  %v2762 = vld [vmem:[%s1524 + $0xe0] sm:$0xff]
  %v2763 = vld [vmem:[%s1524 + $0xe8] sm:$0xff]
  %v2764 = vld [vmem:[%s1524 + $0xf0] sm:$0xff]
  %v2765 = vld [vmem:[%s1524 + $0xf8] sm:$0xff]
  %v2766 = vld [vmem:[%s1524 + $0x100] sm:$0xff]
  %v2767 = vld [vmem:[%s1524 + $0x108] sm:$0xff]
  %v2768 = vld [vmem:[%s1524 + $0x110] sm:$0xff]
  %v2769 = vld [vmem:[%s1524 + $0x118] sm:$0xff]
  %v2770 = vld [vmem:[%s1524 + $0x120] sm:$0xff]
  %v2771 = vld [vmem:[%s1524 + $0x128] sm:$0xff]
  %v2772 = vld [vmem:[%s1524 + $0x130] sm:$0xff]
  %v2773 = vld [vmem:[%s1524 + $0x138] sm:$0xff]
  %v2774 = vld [vmem:[%s1524 + $0x140] sm:$0xff]
  %v2775 = vld [vmem:[%s1524 + $0x148] sm:$0xff]
  %v2776 = vld [vmem:[%s1524 + $0x150] sm:$0xff]
  %v2777 = vld [vmem:[%s1524 + $0x158] sm:$0xff]
  %v2778 = vld [vmem:[%s1524 + $0x160] sm:$0xff]
  %v2779 = vld [vmem:[%s1524 + $0x168] sm:$0xff]
  %v2780 = vld [vmem:[%s1524 + $0x170] sm:$0xff]
  %v2781 = vld [vmem:[%s1524 + $0x178] sm:$0xff]
  %v2782 = vld [vmem:[%s1524 + $0x180] sm:$0xff]
  %v2783 = vsub.f32 %v2734, %v2231
  %v2784 = vsub.f32 %v2735, %v2231
  %v2785 = vsub.f32 %v2736, %v2231
  %v2786 = vsub.f32 %v2737, %v2231
  %v2787 = vsub.f32 %v2738, %v2231
  %v2788 = vsub.f32 %v2739, %v2231
  %v2789 = vsub.f32 %v2740, %v2231
  %v2790 = vsub.f32 %v2741, %v2231
  %v2791 = vsub.f32 %v2742, %v2231
  %v2792 = vsub.f32 %v2743, %v2231
  %v2793 = vsub.f32 %v2744, %v2231
  %v2794 = vsub.f32 %v2745, %v2231
  %v2795 = vsub.f32 %v2746, %v2231
  %v2796 = vsub.f32 %v2747, %v2231
  %v2797 = vsub.f32 %v2748, %v2231
  %v2798 = vsub.f32 %v2749, %v2231
  %v2799 = vsub.f32 %v2750, %v2231
  %v2800 = vsub.f32 %v2751, %v2231
  %v2801 = vsub.f32 %v2752, %v2231
  %v2802 = vsub.f32 %v2753, %v2231
  %v2803 = vsub.f32 %v2754, %v2231
  %v2804 = vsub.f32 %v2755, %v2231
  %v2805 = vsub.f32 %v2756, %v2231
  %v2806 = vsub.f32 %v2757, %v2231
  %v2807 = vsub.f32 %v2758, %v2231
  %v2808 = vsub.f32 %v2759, %v2231
  %v2809 = vsub.f32 %v2760, %v2231
  %v2810 = vsub.f32 %v2761, %v2231
  %v2811 = vsub.f32 %v2762, %v2231
  %v2812 = vsub.f32 %v2763, %v2231
  %v2813 = vsub.f32 %v2764, %v2231
  %v2814 = vsub.f32 %v2765, %v2231
  %v2815 = vsub.f32 %v2766, %v2231
  %v2816 = vsub.f32 %v2767, %v2231
  %v2817 = vsub.f32 %v2768, %v2231
  %v2818 = vsub.f32 %v2769, %v2231
  %v2819 = vsub.f32 %v2770, %v2231
  %v2820 = vsub.f32 %v2771, %v2231
  %v2821 = vsub.f32 %v2772, %v2231
  %v2822 = vsub.f32 %v2773, %v2231
  %v2823 = vsub.f32 %v2774, %v2231
  %v2824 = vsub.f32 %v2775, %v2231
  %v2825 = vsub.f32 %v2776, %v2231
  %v2826 = vsub.f32 %v2777, %v2231
  %v2827 = vsub.f32 %v2778, %v2231
  %v2828 = vsub.f32 %v2779, %v2231
  %v2829 = vsub.f32 %v2780, %v2231
  %v2830 = vsub.f32 %v2781, %v2231
  %v2831 = vsub.f32 %v2782, %v2231
  %v2832 = vmul.f32 %v2783, %v2783
  %v2833 = vmul.f32 %v2784, %v2784
  %v2834 = vmul.f32 %v2785, %v2785
  %v2835 = vmul.f32 %v2786, %v2786
  %v2836 = vmul.f32 %v2787, %v2787
  %v2837 = vmul.f32 %v2788, %v2788
  %v2838 = vmul.f32 %v2789, %v2789
  %v2839 = vmul.f32 %v2790, %v2790
  %v2840 = vmul.f32 %v2791, %v2791
  %v2841 = vmul.f32 %v2792, %v2792
  %v2842 = vmul.f32 %v2793, %v2793
  %v2843 = vmul.f32 %v2794, %v2794
  %v2844 = vmul.f32 %v2795, %v2795
  %v2845 = vmul.f32 %v2796, %v2796
  %v2846 = vmul.f32 %v2797, %v2797
  %v2847 = vmul.f32 %v2798, %v2798
  %v2848 = vmul.f32 %v2799, %v2799
  %v2849 = vmul.f32 %v2800, %v2800
  %v2850 = vmul.f32 %v2801, %v2801
  %v2851 = vmul.f32 %v2802, %v2802
  %v2852 = vmul.f32 %v2803, %v2803
  %v2853 = vmul.f32 %v2804, %v2804
  %v2854 = vmul.f32 %v2805, %v2805
  %v2855 = vmul.f32 %v2806, %v2806
  %v2856 = vmul.f32 %v2807, %v2807
  %v2857 = vmul.f32 %v2808, %v2808
  %v2858 = vmul.f32 %v2809, %v2809
  %v2859 = vmul.f32 %v2810, %v2810
  %v2860 = vmul.f32 %v2811, %v2811
  %v2861 = vmul.f32 %v2812, %v2812
  %v2862 = vmul.f32 %v2813, %v2813
  %v2863 = vmul.f32 %v2814, %v2814
  %v2864 = vmul.f32 %v2815, %v2815
  %v2865 = vmul.f32 %v2816, %v2816
  %v2866 = vmul.f32 %v2817, %v2817
  %v2867 = vmul.f32 %v2818, %v2818
  %v2868 = vmul.f32 %v2819, %v2819
  %v2869 = vmul.f32 %v2820, %v2820
  %v2870 = vmul.f32 %v2821, %v2821
  %v2871 = vmul.f32 %v2822, %v2822
  %v2872 = vmul.f32 %v2823, %v2823
  %v2873 = vmul.f32 %v2824, %v2824
  %v2874 = vmul.f32 %v2825, %v2825
  %v2875 = vmul.f32 %v2826, %v2826
  %v2876 = vmul.f32 %v2827, %v2827
  %v2877 = vmul.f32 %v2828, %v2828
  %v2878 = vmul.f32 %v2829, %v2829
  %v2879 = vmul.f32 %v2830, %v2830
  %v2880 = vmul.f32 %v2831, %v2831
  %v2881 = vsel %vm418, %v2832, 0.0
  %v2882 = vsel %vm418, %v2833, 0.0
  %v2883 = vadd.f32 %v2881, %v2882
  %v2884 = vsel %vm418, %v2834, 0.0
  %v2885 = vadd.f32 %v2883, %v2884
  %v2886 = vsel %vm418, %v2835, 0.0
  %v2887 = vadd.f32 %v2885, %v2886
  %v2888 = vsel %vm418, %v2836, 0.0
  %v2889 = vadd.f32 %v2887, %v2888
  %v2890 = vsel %vm418, %v2837, 0.0
  %v2891 = vadd.f32 %v2889, %v2890
  %v2892 = vsel %vm418, %v2838, 0.0
  %v2893 = vadd.f32 %v2891, %v2892
  %v2894 = vsel %vm418, %v2839, 0.0
  %v2895 = vadd.f32 %v2893, %v2894
  %v2896 = vsel %vm418, %v2840, 0.0
  %v2897 = vadd.f32 %v2895, %v2896
  %v2898 = vsel %vm418, %v2841, 0.0
  %v2899 = vadd.f32 %v2897, %v2898
  %v2900 = vsel %vm418, %v2842, 0.0
  %v2901 = vadd.f32 %v2899, %v2900
  %v2902 = vsel %vm418, %v2843, 0.0
  %v2903 = vadd.f32 %v2901, %v2902
  %v2904 = vsel %vm418, %v2844, 0.0
  %v2905 = vadd.f32 %v2903, %v2904
  %v2906 = vsel %vm418, %v2845, 0.0
  %v2907 = vadd.f32 %v2905, %v2906
  %v2908 = vsel %vm418, %v2846, 0.0
  %v2909 = vadd.f32 %v2907, %v2908
  %v2910 = vsel %vm418, %v2847, 0.0
  %v2911 = vadd.f32 %v2909, %v2910
  %v2912 = vsel %vm418, %v2848, 0.0
  %v2913 = vadd.f32 %v2911, %v2912
  %v2914 = vsel %vm418, %v2849, 0.0
  %v2915 = vadd.f32 %v2913, %v2914
  %v2916 = vsel %vm418, %v2850, 0.0
  %v2917 = vadd.f32 %v2915, %v2916
  %v2918 = vsel %vm418, %v2851, 0.0
  %v2919 = vadd.f32 %v2917, %v2918
  %v2920 = vsel %vm418, %v2852, 0.0
  %v2921 = vadd.f32 %v2919, %v2920
  %v2922 = vsel %vm418, %v2853, 0.0
  %v2923 = vadd.f32 %v2921, %v2922
  %v2924 = vsel %vm418, %v2854, 0.0
  %v2925 = vadd.f32 %v2923, %v2924
  %v2926 = vsel %vm418, %v2855, 0.0
  %v2927 = vadd.f32 %v2925, %v2926
  %v2928 = vsel %vm418, %v2856, 0.0
  %v2929 = vadd.f32 %v2927, %v2928
  %v2930 = vsel %vm418, %v2857, 0.0
  %v2931 = vadd.f32 %v2929, %v2930
  %v2932 = vsel %vm418, %v2858, 0.0
  %v2933 = vadd.f32 %v2931, %v2932
  %v2934 = vsel %vm418, %v2859, 0.0
  %v2935 = vadd.f32 %v2933, %v2934
  %v2936 = vsel %vm418, %v2860, 0.0
  %v2937 = vadd.f32 %v2935, %v2936
  %v2938 = vsel %vm418, %v2861, 0.0
  %v2939 = vadd.f32 %v2937, %v2938
  %v2940 = vsel %vm418, %v2862, 0.0
  %v2941 = vadd.f32 %v2939, %v2940
  %v2942 = vsel %vm418, %v2863, 0.0
  %v2943 = vadd.f32 %v2941, %v2942
  %v2944 = vsel %vm418, %v2864, 0.0
  %v2945 = vadd.f32 %v2943, %v2944
  %v2946 = vsel %vm418, %v2865, 0.0
  %v2947 = vadd.f32 %v2945, %v2946
  %v2948 = vsel %vm418, %v2866, 0.0
  %v2949 = vadd.f32 %v2947, %v2948
  %v2950 = vsel %vm418, %v2867, 0.0
  %v2951 = vadd.f32 %v2949, %v2950
  %v2952 = vsel %vm418, %v2868, 0.0
  %v2953 = vadd.f32 %v2951, %v2952
  %v2954 = vsel %vm418, %v2869, 0.0
  %v2955 = vadd.f32 %v2953, %v2954
  %v2956 = vsel %vm418, %v2870, 0.0
  %v2957 = vadd.f32 %v2955, %v2956
  %v2958 = vsel %vm418, %v2871, 0.0
  %v2959 = vadd.f32 %v2957, %v2958
  %v2960 = vsel %vm418, %v2872, 0.0
  %v2961 = vadd.f32 %v2959, %v2960
  %v2962 = vsel %vm418, %v2873, 0.0
  %v2963 = vadd.f32 %v2961, %v2962
  %v2964 = vsel %vm418, %v2874, 0.0
  %v2965 = vadd.f32 %v2963, %v2964
  %v2966 = vsel %vm418, %v2875, 0.0
  %v2967 = vadd.f32 %v2965, %v2966
  %v2968 = vsel %vm418, %v2876, 0.0
  %v2969 = vadd.f32 %v2967, %v2968
  %v2970 = vsel %vm418, %v2877, 0.0
  %v2971 = vadd.f32 %v2969, %v2970
  %v2972 = vsel %vm418, %v2878, 0.0
  %v2973 = vadd.f32 %v2971, %v2972
  %v2974 = vsel %vm418, %v2879, 0.0
  %v2975 = vadd.f32 %v2973, %v2974
  %v2976 = vsel %vm418, %v2880, 0.0
  %v2977 = vadd.f32 %v2975, %v2976
  %v2978 = vrot.slane %v2977, 4
  %v2979 = vadd.f32 %v2977, %v2978
  %v2980 = vrot.slane %v2979, 2
  %v2981 = vadd.f32 %v2979, %v2980
  %v2982 = vrot.slane %v2981, 1
  %v2983 = vadd.f32 %v2981, %v2982
  %v2984 = vadd.f32 %v2733, %v2983
  %v2985 = vld [vmem:[%s2077] sm:$0xff]
  %v2986 = vld [vmem:[%s2077 + $0x8] sm:$0xff]
  %v2987 = vld [vmem:[%s2077 + $0x10] sm:$0xff]
  %v2988 = vld [vmem:[%s2077 + $0x18] sm:$0xff]
  %v2989 = vld [vmem:[%s2077 + $0x20] sm:$0xff]
  %v2990 = vld [vmem:[%s2077 + $0x28] sm:$0xff]
  %v2991 = vld [vmem:[%s2077 + $0x30] sm:$0xff]
  %v2992 = vld [vmem:[%s2077 + $0x38] sm:$0xff]
  %v2993 = vld [vmem:[%s2077 + $0x40] sm:$0xff]
  %v2994 = vld [vmem:[%s2077 + $0x48] sm:$0xff]
  %v2995 = vld [vmem:[%s2077 + $0x50] sm:$0xff]
  %v2996 = vld [vmem:[%s2077 + $0x58] sm:$0xff]
  %v2997 = vld [vmem:[%s2077 + $0x60] sm:$0xff]
  %v2998 = vld [vmem:[%s2077 + $0x68] sm:$0xff]
  %v2999 = vld [vmem:[%s2077 + $0x70] sm:$0xff]
  %v3000 = vld [vmem:[%s2077 + $0x78] sm:$0xff]
  %v3001 = vld [vmem:[%s2077 + $0x80] sm:$0xff]
  %v3002 = vld [vmem:[%s2077 + $0x88] sm:$0xff]
  %v3003 = vld [vmem:[%s2077 + $0x90] sm:$0xff]
  %v3004 = vld [vmem:[%s2077 + $0x98] sm:$0xff]
  %v3005 = vld [vmem:[%s2077 + $0xa0] sm:$0xff]
  %v3006 = vld [vmem:[%s2077 + $0xa8] sm:$0xff]
  %v3007 = vld [vmem:[%s2077 + $0xb0] sm:$0xff]
  %v3008 = vld [vmem:[%s2077 + $0xb8] sm:$0xff]
  %v3009 = vld [vmem:[%s2077 + $0xc0] sm:$0xff]
  %v3010 = vld [vmem:[%s2077 + $0xc8] sm:$0xff]
  %v3011 = vld [vmem:[%s2077 + $0xd0] sm:$0xff]
  %v3012 = vld [vmem:[%s2077 + $0xd8] sm:$0xff]
  %v3013 = vld [vmem:[%s2077 + $0xe0] sm:$0xff]
  %v3014 = vld [vmem:[%s2077 + $0xe8] sm:$0xff]
  %v3015 = vld [vmem:[%s2077 + $0xf0] sm:$0xff]
  %v3016 = vld [vmem:[%s2077 + $0xf8] sm:$0xff]
  %v3017 = vld [vmem:[%s2077 + $0x100] sm:$0xff]
  %v3018 = vld [vmem:[%s2077 + $0x108] sm:$0xff]
  %v3019 = vld [vmem:[%s2077 + $0x110] sm:$0xff]
  %v3020 = vld [vmem:[%s2077 + $0x118] sm:$0xff]
  %v3021 = vld [vmem:[%s2077 + $0x120] sm:$0xff]
  %v3022 = vld [vmem:[%s2077 + $0x128] sm:$0xff]
  %v3023 = vld [vmem:[%s2077 + $0x130] sm:$0xff]
  %v3024 = vld [vmem:[%s2077 + $0x138] sm:$0xff]
  %v3025 = vld [vmem:[%s2077 + $0x140] sm:$0xff]
  %v3026 = vld [vmem:[%s2077 + $0x148] sm:$0xff]
  %v3027 = vld [vmem:[%s2077 + $0x150] sm:$0xff]
  %v3028 = vld [vmem:[%s2077 + $0x158] sm:$0xff]
  %v3029 = vld [vmem:[%s2077 + $0x160] sm:$0xff]
  %v3030 = vld [vmem:[%s2077 + $0x168] sm:$0xff]
  %v3031 = vld [vmem:[%s2077 + $0x170] sm:$0xff]
  %v3032 = vld [vmem:[%s2077 + $0x178] sm:$0xff]
  %v3033 = vld [vmem:[%s2077 + $0x180] sm:$0xff]
  %v3034 = vsub.f32 %v2985, %v2231
  %v3035 = vsub.f32 %v2986, %v2231
  %v3036 = vsub.f32 %v2987, %v2231
  %v3037 = vsub.f32 %v2988, %v2231
  %v3038 = vsub.f32 %v2989, %v2231
  %v3039 = vsub.f32 %v2990, %v2231
  %v3040 = vsub.f32 %v2991, %v2231
  %v3041 = vsub.f32 %v2992, %v2231
  %v3042 = vsub.f32 %v2993, %v2231
  %v3043 = vsub.f32 %v2994, %v2231
  %v3044 = vsub.f32 %v2995, %v2231
  %v3045 = vsub.f32 %v2996, %v2231
  %v3046 = vsub.f32 %v2997, %v2231
  %v3047 = vsub.f32 %v2998, %v2231
  %v3048 = vsub.f32 %v2999, %v2231
  %v3049 = vsub.f32 %v3000, %v2231
  %v3050 = vsub.f32 %v3001, %v2231
  %v3051 = vsub.f32 %v3002, %v2231
  %v3052 = vsub.f32 %v3003, %v2231
  %v3053 = vsub.f32 %v3004, %v2231
  %v3054 = vsub.f32 %v3005, %v2231
  %v3055 = vsub.f32 %v3006, %v2231
  %v3056 = vsub.f32 %v3007, %v2231
  %v3057 = vsub.f32 %v3008, %v2231
  %v3058 = vsub.f32 %v3009, %v2231
  %v3059 = vsub.f32 %v3010, %v2231
  %v3060 = vsub.f32 %v3011, %v2231
  %v3061 = vsub.f32 %v3012, %v2231
  %v3062 = vsub.f32 %v3013, %v2231
  %v3063 = vsub.f32 %v3014, %v2231
  %v3064 = vsub.f32 %v3015, %v2231
  %v3065 = vsub.f32 %v3016, %v2231
  %v3066 = vsub.f32 %v3017, %v2231
  %v3067 = vsub.f32 %v3018, %v2231
  %v3068 = vsub.f32 %v3019, %v2231
  %v3069 = vsub.f32 %v3020, %v2231
  %v3070 = vsub.f32 %v3021, %v2231
  %v3071 = vsub.f32 %v3022, %v2231
  %v3072 = vsub.f32 %v3023, %v2231
  %v3073 = vsub.f32 %v3024, %v2231
  %v3074 = vsub.f32 %v3025, %v2231
  %v3075 = vsub.f32 %v3026, %v2231
  %v3076 = vsub.f32 %v3027, %v2231
  %v3077 = vsub.f32 %v3028, %v2231
  %v3078 = vsub.f32 %v3029, %v2231
  %v3079 = vsub.f32 %v3030, %v2231
  %v3080 = vsub.f32 %v3031, %v2231
  %v3081 = vsub.f32 %v3032, %v2231
  %v3082 = vsub.f32 %v3033, %v2231
  %v3083 = vmul.f32 %v3034, %v3034
  %v3084 = vmul.f32 %v3035, %v3035
  %v3085 = vmul.f32 %v3036, %v3036
  %v3086 = vmul.f32 %v3037, %v3037
  %v3087 = vmul.f32 %v3038, %v3038
  %v3088 = vmul.f32 %v3039, %v3039
  %v3089 = vmul.f32 %v3040, %v3040
  %v3090 = vmul.f32 %v3041, %v3041
  %v3091 = vmul.f32 %v3042, %v3042
  %v3092 = vmul.f32 %v3043, %v3043
  %v3093 = vmul.f32 %v3044, %v3044
  %v3094 = vmul.f32 %v3045, %v3045
  %v3095 = vmul.f32 %v3046, %v3046
  %v3096 = vmul.f32 %v3047, %v3047
  %v3097 = vmul.f32 %v3048, %v3048
  %v3098 = vmul.f32 %v3049, %v3049
  %v3099 = vmul.f32 %v3050, %v3050
  %v3100 = vmul.f32 %v3051, %v3051
  %v3101 = vmul.f32 %v3052, %v3052
  %v3102 = vmul.f32 %v3053, %v3053
  %v3103 = vmul.f32 %v3054, %v3054
  %v3104 = vmul.f32 %v3055, %v3055
  %v3105 = vmul.f32 %v3056, %v3056
  %v3106 = vmul.f32 %v3057, %v3057
  %v3107 = vmul.f32 %v3058, %v3058
  %v3108 = vmul.f32 %v3059, %v3059
  %v3109 = vmul.f32 %v3060, %v3060
  %v3110 = vmul.f32 %v3061, %v3061
  %v3111 = vmul.f32 %v3062, %v3062
  %v3112 = vmul.f32 %v3063, %v3063
  %v3113 = vmul.f32 %v3064, %v3064
  %v3114 = vmul.f32 %v3065, %v3065
  %v3115 = vmul.f32 %v3066, %v3066
  %v3116 = vmul.f32 %v3067, %v3067
  %v3117 = vmul.f32 %v3068, %v3068
  %v3118 = vmul.f32 %v3069, %v3069
  %v3119 = vmul.f32 %v3070, %v3070
  %v3120 = vmul.f32 %v3071, %v3071
  %v3121 = vmul.f32 %v3072, %v3072
  %v3122 = vmul.f32 %v3073, %v3073
  %v3123 = vmul.f32 %v3074, %v3074
  %v3124 = vmul.f32 %v3075, %v3075
  %v3125 = vmul.f32 %v3076, %v3076
  %v3126 = vmul.f32 %v3077, %v3077
  %v3127 = vmul.f32 %v3078, %v3078
  %v3128 = vmul.f32 %v3079, %v3079
  %v3129 = vmul.f32 %v3080, %v3080
  %v3130 = vmul.f32 %v3081, %v3081
  %v3131 = vmul.f32 %v3082, %v3082
  %v3132 = vsel %vm418, %v3083, 0.0
  %v3133 = vsel %vm418, %v3084, 0.0
  %v3134 = vadd.f32 %v3132, %v3133
  %v3135 = vsel %vm418, %v3085, 0.0
  %v3136 = vadd.f32 %v3134, %v3135
  %v3137 = vsel %vm418, %v3086, 0.0
  %v3138 = vadd.f32 %v3136, %v3137
  %v3139 = vsel %vm418, %v3087, 0.0
  %v3140 = vadd.f32 %v3138, %v3139
  %v3141 = vsel %vm418, %v3088, 0.0
  %v3142 = vadd.f32 %v3140, %v3141
  %v3143 = vsel %vm418, %v3089, 0.0
  %v3144 = vadd.f32 %v3142, %v3143
  %v3145 = vsel %vm418, %v3090, 0.0
  %v3146 = vadd.f32 %v3144, %v3145
  %v3147 = vsel %vm418, %v3091, 0.0
  %v3148 = vadd.f32 %v3146, %v3147
  %v3149 = vsel %vm418, %v3092, 0.0
  %v3150 = vadd.f32 %v3148, %v3149
  %v3151 = vsel %vm418, %v3093, 0.0
  %v3152 = vadd.f32 %v3150, %v3151
  %v3153 = vsel %vm418, %v3094, 0.0
  %v3154 = vadd.f32 %v3152, %v3153
  %v3155 = vsel %vm418, %v3095, 0.0
  %v3156 = vadd.f32 %v3154, %v3155
  %v3157 = vsel %vm418, %v3096, 0.0
  %v3158 = vadd.f32 %v3156, %v3157
  %v3159 = vsel %vm418, %v3097, 0.0
  %v3160 = vadd.f32 %v3158, %v3159
  %v3161 = vsel %vm418, %v3098, 0.0
  %v3162 = vadd.f32 %v3160, %v3161
  %v3163 = vsel %vm418, %v3099, 0.0
  %v3164 = vadd.f32 %v3162, %v3163
  %v3165 = vsel %vm418, %v3100, 0.0
  %v3166 = vadd.f32 %v3164, %v3165
  %v3167 = vsel %vm418, %v3101, 0.0
  %v3168 = vadd.f32 %v3166, %v3167
  %v3169 = vsel %vm418, %v3102, 0.0
  %v3170 = vadd.f32 %v3168, %v3169
  %v3171 = vsel %vm418, %v3103, 0.0
  %v3172 = vadd.f32 %v3170, %v3171
  %v3173 = vsel %vm418, %v3104, 0.0
  %v3174 = vadd.f32 %v3172, %v3173
  %v3175 = vsel %vm418, %v3105, 0.0
  %v3176 = vadd.f32 %v3174, %v3175
  %v3177 = vsel %vm418, %v3106, 0.0
  %v3178 = vadd.f32 %v3176, %v3177
  %v3179 = vsel %vm418, %v3107, 0.0
  %v3180 = vadd.f32 %v3178, %v3179
  %v3181 = vsel %vm418, %v3108, 0.0
  %v3182 = vadd.f32 %v3180, %v3181
  %v3183 = vsel %vm418, %v3109, 0.0
  %v3184 = vadd.f32 %v3182, %v3183
  %v3185 = vsel %vm418, %v3110, 0.0
  %v3186 = vadd.f32 %v3184, %v3185
  %v3187 = vsel %vm418, %v3111, 0.0
  %v3188 = vadd.f32 %v3186, %v3187
  %v3189 = vsel %vm418, %v3112, 0.0
  %v3190 = vadd.f32 %v3188, %v3189
  %v3191 = vsel %vm418, %v3113, 0.0
  %v3192 = vadd.f32 %v3190, %v3191
  %v3193 = vsel %vm418, %v3114, 0.0
  %v3194 = vadd.f32 %v3192, %v3193
  %v3195 = vsel %vm418, %v3115, 0.0
  %v3196 = vadd.f32 %v3194, %v3195
  %v3197 = vsel %vm418, %v3116, 0.0
  %v3198 = vadd.f32 %v3196, %v3197
  %v3199 = vsel %vm418, %v3117, 0.0
  %v3200 = vadd.f32 %v3198, %v3199
  %v3201 = vsel %vm418, %v3118, 0.0
  %v3202 = vadd.f32 %v3200, %v3201
  %v3203 = vsel %vm418, %v3119, 0.0
  %v3204 = vadd.f32 %v3202, %v3203
  %v3205 = vsel %vm418, %v3120, 0.0
  %v3206 = vadd.f32 %v3204, %v3205
  %v3207 = vsel %vm418, %v3121, 0.0
  %v3208 = vadd.f32 %v3206, %v3207
  %v3209 = vsel %vm418, %v3122, 0.0
  %v3210 = vadd.f32 %v3208, %v3209
  %v3211 = vsel %vm418, %v3123, 0.0
  %v3212 = vadd.f32 %v3210, %v3211
  %v3213 = vsel %vm418, %v3124, 0.0
  %v3214 = vadd.f32 %v3212, %v3213
  %v3215 = vsel %vm418, %v3125, 0.0
  %v3216 = vadd.f32 %v3214, %v3215
  %v3217 = vsel %vm418, %v3126, 0.0
  %v3218 = vadd.f32 %v3216, %v3217
  %v3219 = vsel %vm418, %v3127, 0.0
  %v3220 = vadd.f32 %v3218, %v3219
  %v3221 = vsel %vm418, %v3128, 0.0
  %v3222 = vadd.f32 %v3220, %v3221
  %v3223 = vsel %vm418, %v3129, 0.0
  %v3224 = vadd.f32 %v3222, %v3223
  %v3225 = vsel %vm418, %v3130, 0.0
  %v3226 = vadd.f32 %v3224, %v3225
  %v3227 = vsel %vm418, %v3131, 0.0
  %v3228 = vadd.f32 %v3226, %v3227
  %v3229 = vrot.slane %v3228, 4
  %v3230 = vadd.f32 %v3228, %v3229
  %v3231 = vrot.slane %v3230, 2
  %v3232 = vadd.f32 %v3230, %v3231
  %v3233 = vrot.slane %v3232, 1
  %v3234 = vadd.f32 %v3232, %v3233
  %v3235 = vadd.f32 %v2984, %v3234
  %v3236 = vmul.f32 %v3235, 0.0006377551
  %v3237 = vld [vmem:[%s3] sm:$0x1]
  %v3238 = vadd.f32 %v3236, 1e-05
  %v3239 = vrsqrt.pop %v3238
  %v3240 = vmul.f32 %v3239, %v3238
  %v3241 = vmul.f32 %v3240, %v3239
  %v3242 = vmul.f32 0.5, %v3241
  %v3243 = vsub.f32 1.5, %v3242
  %v3244 = vmul.f32 %v3239, %v3243
  %vm3245 = vweird.f32 %v3238
  %vm3246 = vweird.f32 %v3239
  %vm3247 = vmor %vm3245, %vm3246
  %v3248 = vsel %vm3247, %v3239, %v3244
  %v3249 = vmul.f32 %v3237, %v3248
  %v3250 = vld [vmem:[%s4] sm:$0x1]
  %v3251 = vmul.f32 %v2231, %v3249
  %v3252 = vsub.f32 %v3250, %v3251
  %v3254 = vperm.slane %v3249, 0
  %v3256 = vmul.f32 %v2232, %v3254
  %v3257 = vmul.f32 %v2233, %v3254
  %v3258 = vmul.f32 %v2234, %v3254
  %v3259 = vmul.f32 %v2235, %v3254
  %v3260 = vmul.f32 %v2236, %v3254
  %v3261 = vmul.f32 %v2237, %v3254
  %v3262 = vmul.f32 %v2238, %v3254
  %v3263 = vmul.f32 %v2239, %v3254
  %v3264 = vmul.f32 %v2240, %v3254
  %v3265 = vmul.f32 %v2241, %v3254
  %v3266 = vmul.f32 %v2242, %v3254
  %v3267 = vmul.f32 %v2243, %v3254
  %v3268 = vmul.f32 %v2244, %v3254
  %v3269 = vmul.f32 %v2245, %v3254
  %v3270 = vmul.f32 %v2246, %v3254
  %v3271 = vmul.f32 %v2247, %v3254
  %v3272 = vmul.f32 %v2248, %v3254
  %v3273 = vmul.f32 %v2249, %v3254
  %v3274 = vmul.f32 %v2250, %v3254
  %v3275 = vmul.f32 %v2251, %v3254
  %v3276 = vmul.f32 %v2252, %v3254
  %v3277 = vmul.f32 %v2253, %v3254
  %v3278 = vmul.f32 %v2254, %v3254
  %v3279 = vmul.f32 %v2255, %v3254
  %v3280 = vmul.f32 %v2256, %v3254
  %v3281 = vmul.f32 %v2257, %v3254
  %v3282 = vmul.f32 %v2258, %v3254
  %v3283 = vmul.f32 %v2259, %v3254
  %v3284 = vmul.f32 %v2260, %v3254
  %v3285 = vmul.f32 %v2261, %v3254
  %v3286 = vmul.f32 %v2262, %v3254
  %v3287 = vmul.f32 %v2263, %v3254
  %v3288 = vmul.f32 %v2264, %v3254
  %v3289 = vmul.f32 %v2265, %v3254
  %v3290 = vmul.f32 %v2266, %v3254
  %v3291 = vmul.f32 %v2267, %v3254
  %v3292 = vmul.f32 %v2268, %v3254
  %v3293 = vmul.f32 %v2269, %v3254
  %v3294 = vmul.f32 %v2270, %v3254
  %v3295 = vmul.f32 %v2271, %v3254
  %v3296 = vmul.f32 %v2272, %v3254
  %v3297 = vmul.f32 %v2273, %v3254
  %v3298 = vmul.f32 %v2274, %v3254
  %v3299 = vmul.f32 %v2275, %v3254
  %v3300 = vmul.f32 %v2276, %v3254
  %v3301 = vmul.f32 %v2277, %v3254
  %v3302 = vmul.f32 %v2278, %v3254
  %v3303 = vmul.f32 %v2279, %v3254
  %v3304 = vmul.f32 %v2280, %v3254
  %v3306 = vperm.slane %v3252, 0
  %v3308 = vadd.f32 %v3256, %v3306
  %v3309 = vadd.f32 %v3257, %v3306
  %v3310 = vadd.f32 %v3258, %v3306
  %v3311 = vadd.f32 %v3259, %v3306
  %v3312 = vadd.f32 %v3260, %v3306
  %v3313 = vadd.f32 %v3261, %v3306
  %v3314 = vadd.f32 %v3262, %v3306
  %v3315 = vadd.f32 %v3263, %v3306
  %v3316 = vadd.f32 %v3264, %v3306
  %v3317 = vadd.f32 %v3265, %v3306
  %v3318 = vadd.f32 %v3266, %v3306
  %v3319 = vadd.f32 %v3267, %v3306
  %v3320 = vadd.f32 %v3268, %v3306
  %v3321 = vadd.f32 %v3269, %v3306
  %v3322 = vadd.f32 %v3270, %v3306
  %v3323 = vadd.f32 %v3271, %v3306
  %v3324 = vadd.f32 %v3272, %v3306
  %v3325 = vadd.f32 %v3273, %v3306
  %v3326 = vadd.f32 %v3274, %v3306
  %v3327 = vadd.f32 %v3275, %v3306
  %v3328 = vadd.f32 %v3276, %v3306
  %v3329 = vadd.f32 %v3277, %v3306
  %v3330 = vadd.f32 %v3278, %v3306
  %v3331 = vadd.f32 %v3279, %v3306
  %v3332 = vadd.f32 %v3280, %v3306
  %v3333 = vadd.f32 %v3281, %v3306
  %v3334 = vadd.f32 %v3282, %v3306
  %v3335 = vadd.f32 %v3283, %v3306
  %v3336 = vadd.f32 %v3284, %v3306
  %v3337 = vadd.f32 %v3285, %v3306
  %v3338 = vadd.f32 %v3286, %v3306
  %v3339 = vadd.f32 %v3287, %v3306
  %v3340 = vadd.f32 %v3288, %v3306
  %v3341 = vadd.f32 %v3289, %v3306
  %v3342 = vadd.f32 %v3290, %v3306
  %v3343 = vadd.f32 %v3291, %v3306
  %v3344 = vadd.f32 %v3292, %v3306
  %v3345 = vadd.f32 %v3293, %v3306
  %v3346 = vadd.f32 %v3294, %v3306
  %v3347 = vadd.f32 %v3295, %v3306
  %v3348 = vadd.f32 %v3296, %v3306
  %v3349 = vadd.f32 %v3297, %v3306
  %v3350 = vadd.f32 %v3298, %v3306
  %v3351 = vadd.f32 %v3299, %v3306
  %v3352 = vadd.f32 %v3300, %v3306
  %v3353 = vadd.f32 %v3301, %v3306
  %v3354 = vadd.f32 %v3302, %v3306
  %v3355 = vadd.f32 %v3303, %v3306
  %v3356 = vadd.f32 %v3304, %v3306
  %v3357 = vmax.f32 %v3308, 0.0
  %v3358 = vmax.f32 %v3309, 0.0
  %v3359 = vmax.f32 %v3310, 0.0
  %v3360 = vmax.f32 %v3311, 0.0
  %v3361 = vmax.f32 %v3312, 0.0
  %v3362 = vmax.f32 %v3313, 0.0
  %v3363 = vmax.f32 %v3314, 0.0
  %v3364 = vmax.f32 %v3315, 0.0
  %v3365 = vmax.f32 %v3316, 0.0
  %v3366 = vmax.f32 %v3317, 0.0
  %v3367 = vmax.f32 %v3318, 0.0
  %v3368 = vmax.f32 %v3319, 0.0
  %v3369 = vmax.f32 %v3320, 0.0
  %v3370 = vmax.f32 %v3321, 0.0
  %v3371 = vmax.f32 %v3322, 0.0
  %v3372 = vmax.f32 %v3323, 0.0
  %v3373 = vmax.f32 %v3324, 0.0
  %v3374 = vmax.f32 %v3325, 0.0
  %v3375 = vmax.f32 %v3326, 0.0
  %v3376 = vmax.f32 %v3327, 0.0
  %v3377 = vmax.f32 %v3328, 0.0
  %v3378 = vmax.f32 %v3329, 0.0
  %v3379 = vmax.f32 %v3330, 0.0
  %v3380 = vmax.f32 %v3331, 0.0
  %v3381 = vmax.f32 %v3332, 0.0
  %v3382 = vmax.f32 %v3333, 0.0
  %v3383 = vmax.f32 %v3334, 0.0
  %v3384 = vmax.f32 %v3335, 0.0
  %v3385 = vmax.f32 %v3336, 0.0
  %v3386 = vmax.f32 %v3337, 0.0
  %v3387 = vmax.f32 %v3338, 0.0
  %v3388 = vmax.f32 %v3339, 0.0
  %v3389 = vmax.f32 %v3340, 0.0
  %v3390 = vmax.f32 %v3341, 0.0
  %v3391 = vmax.f32 %v3342, 0.0
  %v3392 = vmax.f32 %v3343, 0.0
  %v3393 = vmax.f32 %v3344, 0.0
  %v3394 = vmax.f32 %v3345, 0.0
  %v3395 = vmax.f32 %v3346, 0.0
  %v3396 = vmax.f32 %v3347, 0.0
  %v3397 = vmax.f32 %v3348, 0.0
  %v3398 = vmax.f32 %v3349, 0.0
  %v3399 = vmax.f32 %v3350, 0.0
  %v3400 = vmax.f32 %v3351, 0.0
  %v3401 = vmax.f32 %v3352, 0.0
  %v3402 = vmax.f32 %v3353, 0.0
  %v3403 = vmax.f32 %v3354, 0.0
  %v3404 = vmax.f32 %v3355, 0.0
  %v3405 = vmax.f32 %v3356, 0.0
  %v3406 = vmul.f32 %v2483, %v3254
  %v3407 = vmul.f32 %v2484, %v3254
  %v3408 = vmul.f32 %v2485, %v3254
  %v3409 = vmul.f32 %v2486, %v3254
  %v3410 = vmul.f32 %v2487, %v3254
  %v3411 = vmul.f32 %v2488, %v3254
  %v3412 = vmul.f32 %v2489, %v3254
  %v3413 = vmul.f32 %v2490, %v3254
  %v3414 = vmul.f32 %v2491, %v3254
  %v3415 = vmul.f32 %v2492, %v3254
  %v3416 = vmul.f32 %v2493, %v3254
  %v3417 = vmul.f32 %v2494, %v3254
  %v3418 = vmul.f32 %v2495, %v3254
  %v3419 = vmul.f32 %v2496, %v3254
  %v3420 = vmul.f32 %v2497, %v3254
  %v3421 = vmul.f32 %v2498, %v3254
  %v3422 = vmul.f32 %v2499, %v3254
  %v3423 = vmul.f32 %v2500, %v3254
  %v3424 = vmul.f32 %v2501, %v3254
  %v3425 = vmul.f32 %v2502, %v3254
  %v3426 = vmul.f32 %v2503, %v3254
  %v3427 = vmul.f32 %v2504, %v3254
  %v3428 = vmul.f32 %v2505, %v3254
  %v3429 = vmul.f32 %v2506, %v3254
  %v3430 = vmul.f32 %v2507, %v3254
  %v3431 = vmul.f32 %v2508, %v3254
  %v3432 = vmul.f32 %v2509, %v3254
  %v3433 = vmul.f32 %v2510, %v3254
  %v3434 = vmul.f32 %v2511, %v3254
  %v3435 = vmul.f32 %v2512, %v3254
  %v3436 = vmul.f32 %v2513, %v3254
  %v3437 = vmul.f32 %v2514, %v3254
  %v3438 = vmul.f32 %v2515, %v3254
  %v3439 = vmul.f32 %v2516, %v3254
  %v3440 = vmul.f32 %v2517, %v3254
  %v3441 = vmul.f32 %v2518, %v3254
  %v3442 = vmul.f32 %v2519, %v3254
  %v3443 = vmul.f32 %v2520, %v3254
  %v3444 = vmul.f32 %v2521, %v3254
  %v3445 = vmul.f32 %v2522, %v3254
  %v3446 = vmul.f32 %v2523, %v3254
  %v3447 = vmul.f32 %v2524, %v3254
  %v3448 = vmul.f32 %v2525, %v3254
  %v3449 = vmul.f32 %v2526, %v3254
  %v3450 = vmul.f32 %v2527, %v3254
  %v3451 = vmul.f32 %v2528, %v3254
  %v3452 = vmul.f32 %v2529, %v3254
  %v3453 = vmul.f32 %v2530, %v3254
  %v3454 = vmul.f32 %v2531, %v3254
  %v3455 = vadd.f32 %v3406, %v3306
  %v3456 = vadd.f32 %v3407, %v3306
  %v3457 = vadd.f32 %v3408, %v3306
  %v3458 = vadd.f32 %v3409, %v3306
  %v3459 = vadd.f32 %v3410, %v3306
  %v3460 = vadd.f32 %v3411, %v3306
  %v3461 = vadd.f32 %v3412, %v3306
  %v3462 = vadd.f32 %v3413, %v3306
  %v3463 = vadd.f32 %v3414, %v3306
  %v3464 = vadd.f32 %v3415, %v3306
  %v3465 = vadd.f32 %v3416, %v3306
  %v3466 = vadd.f32 %v3417, %v3306
  %v3467 = vadd.f32 %v3418, %v3306
  %v3468 = vadd.f32 %v3419, %v3306
  %v3469 = vadd.f32 %v3420, %v3306
  %v3470 = vadd.f32 %v3421, %v3306
  %v3471 = vadd.f32 %v3422, %v3306
  %v3472 = vadd.f32 %v3423, %v3306
  %v3473 = vadd.f32 %v3424, %v3306
  %v3474 = vadd.f32 %v3425, %v3306
  %v3475 = vadd.f32 %v3426, %v3306
  %v3476 = vadd.f32 %v3427, %v3306
  %v3477 = vadd.f32 %v3428, %v3306
  %v3478 = vadd.f32 %v3429, %v3306
  %v3479 = vadd.f32 %v3430, %v3306
  %v3480 = vadd.f32 %v3431, %v3306
  %v3481 = vadd.f32 %v3432, %v3306
  %v3482 = vadd.f32 %v3433, %v3306
  %v3483 = vadd.f32 %v3434, %v3306
  %v3484 = vadd.f32 %v3435, %v3306
  %v3485 = vadd.f32 %v3436, %v3306
  %v3486 = vadd.f32 %v3437, %v3306
  %v3487 = vadd.f32 %v3438, %v3306
  %v3488 = vadd.f32 %v3439, %v3306
  %v3489 = vadd.f32 %v3440, %v3306
  %v3490 = vadd.f32 %v3441, %v3306
  %v3491 = vadd.f32 %v3442, %v3306
  %v3492 = vadd.f32 %v3443, %v3306
  %v3493 = vadd.f32 %v3444, %v3306
  %v3494 = vadd.f32 %v3445, %v3306
  %v3495 = vadd.f32 %v3446, %v3306
  %v3496 = vadd.f32 %v3447, %v3306
  %v3497 = vadd.f32 %v3448, %v3306
  %v3498 = vadd.f32 %v3449, %v3306
  %v3499 = vadd.f32 %v3450, %v3306
  %v3500 = vadd.f32 %v3451, %v3306
  %v3501 = vadd.f32 %v3452, %v3306
  %v3502 = vadd.f32 %v3453, %v3306
  %v3503 = vadd.f32 %v3454, %v3306
  %v3504 = vmax.f32 %v3455, 0.0
  %v3505 = vmax.f32 %v3456, 0.0
  %v3506 = vmax.f32 %v3457, 0.0
  %v3507 = vmax.f32 %v3458, 0.0
  %v3508 = vmax.f32 %v3459, 0.0
  %v3509 = vmax.f32 %v3460, 0.0
  %v3510 = vmax.f32 %v3461, 0.0
  %v3511 = vmax.f32 %v3462, 0.0
  %v3512 = vmax.f32 %v3463, 0.0
  %v3513 = vmax.f32 %v3464, 0.0
  %v3514 = vmax.f32 %v3465, 0.0
  %v3515 = vmax.f32 %v3466, 0.0
  %v3516 = vmax.f32 %v3467, 0.0
  %v3517 = vmax.f32 %v3468, 0.0
  %v3518 = vmax.f32 %v3469, 0.0
  %v3519 = vmax.f32 %v3470, 0.0
  %v3520 = vmax.f32 %v3471, 0.0
  %v3521 = vmax.f32 %v3472, 0.0
  %v3522 = vmax.f32 %v3473, 0.0
  %v3523 = vmax.f32 %v3474, 0.0
  %v3524 = vmax.f32 %v3475, 0.0
  %v3525 = vmax.f32 %v3476, 0.0
  %v3526 = vmax.f32 %v3477, 0.0
  %v3527 = vmax.f32 %v3478, 0.0
  %v3528 = vmax.f32 %v3479, 0.0
  %v3529 = vmax.f32 %v3480, 0.0
  %v3530 = vmax.f32 %v3481, 0.0
  %v3531 = vmax.f32 %v3482, 0.0
  %v3532 = vmax.f32 %v3483, 0.0
  %v3533 = vmax.f32 %v3484, 0.0
  %v3534 = vmax.f32 %v3485, 0.0
  %v3535 = vmax.f32 %v3486, 0.0
  %v3536 = vmax.f32 %v3487, 0.0
  %v3537 = vmax.f32 %v3488, 0.0
  %v3538 = vmax.f32 %v3489, 0.0
  %v3539 = vmax.f32 %v3490, 0.0
  %v3540 = vmax.f32 %v3491, 0.0
  %v3541 = vmax.f32 %v3492, 0.0
  %v3542 = vmax.f32 %v3493, 0.0
  %v3543 = vmax.f32 %v3494, 0.0
  %v3544 = vmax.f32 %v3495, 0.0
  %v3545 = vmax.f32 %v3496, 0.0
  %v3546 = vmax.f32 %v3497, 0.0
  %v3547 = vmax.f32 %v3498, 0.0
  %v3548 = vmax.f32 %v3499, 0.0
  %v3549 = vmax.f32 %v3500, 0.0
  %v3550 = vmax.f32 %v3501, 0.0
  %v3551 = vmax.f32 %v3502, 0.0
  %v3552 = vmax.f32 %v3503, 0.0
  %v3553 = vmul.f32 %v2734, %v3254
  %v3554 = vmul.f32 %v2735, %v3254
  %v3555 = vmul.f32 %v2736, %v3254
  %v3556 = vmul.f32 %v2737, %v3254
  %v3557 = vmul.f32 %v2738, %v3254
  %v3558 = vmul.f32 %v2739, %v3254
  %v3559 = vmul.f32 %v2740, %v3254
  %v3560 = vmul.f32 %v2741, %v3254
  %v3561 = vmul.f32 %v2742, %v3254
  %v3562 = vmul.f32 %v2743, %v3254
  %v3563 = vmul.f32 %v2744, %v3254
  %v3564 = vmul.f32 %v2745, %v3254
  %v3565 = vmul.f32 %v2746, %v3254
  %v3566 = vmul.f32 %v2747, %v3254
  %v3567 = vmul.f32 %v2748, %v3254
  %v3568 = vmul.f32 %v2749, %v3254
  %v3569 = vmul.f32 %v2750, %v3254
  %v3570 = vmul.f32 %v2751, %v3254
  %v3571 = vmul.f32 %v2752, %v3254
  %v3572 = vmul.f32 %v2753, %v3254
  %v3573 = vmul.f32 %v2754, %v3254
  %v3574 = vmul.f32 %v2755, %v3254
  %v3575 = vmul.f32 %v2756, %v3254
  %v3576 = vmul.f32 %v2757, %v3254
  %v3577 = vmul.f32 %v2758, %v3254
  %v3578 = vmul.f32 %v2759, %v3254
  %v3579 = vmul.f32 %v2760, %v3254
  %v3580 = vmul.f32 %v2761, %v3254
  %v3581 = vmul.f32 %v2762, %v3254
  %v3582 = vmul.f32 %v2763, %v3254
  %v3583 = vmul.f32 %v2764, %v3254
  %v3584 = vmul.f32 %v2765, %v3254
  %v3585 = vmul.f32 %v2766, %v3254
  %v3586 = vmul.f32 %v2767, %v3254
  %v3587 = vmul.f32 %v2768, %v3254
  %v3588 = vmul.f32 %v2769, %v3254
  %v3589 = vmul.f32 %v2770, %v3254
  %v3590 = vmul.f32 %v2771, %v3254
  %v3591 = vmul.f32 %v2772, %v3254
  %v3592 = vmul.f32 %v2773, %v3254
  %v3593 = vmul.f32 %v2774, %v3254
  %v3594 = vmul.f32 %v2775, %v3254
  %v3595 = vmul.f32 %v2776, %v3254
  %v3596 = vmul.f32 %v2777, %v3254
  %v3597 = vmul.f32 %v2778, %v3254
  %v3598 = vmul.f32 %v2779, %v3254
  %v3599 = vmul.f32 %v2780, %v3254
  %v3600 = vmul.f32 %v2781, %v3254
  %v3601 = vmul.f32 %v2782, %v3254
  %v3602 = vadd.f32 %v3553, %v3306
  %v3603 = vadd.f32 %v3554, %v3306
  %v3604 = vadd.f32 %v3555, %v3306
  %v3605 = vadd.f32 %v3556, %v3306
  %v3606 = vadd.f32 %v3557, %v3306
  %v3607 = vadd.f32 %v3558, %v3306
  %v3608 = vadd.f32 %v3559, %v3306
  %v3609 = vadd.f32 %v3560, %v3306
  %v3610 = vadd.f32 %v3561, %v3306
  %v3611 = vadd.f32 %v3562, %v3306
  %v3612 = vadd.f32 %v3563, %v3306
  %v3613 = vadd.f32 %v3564, %v3306
  %v3614 = vadd.f32 %v3565, %v3306
  %v3615 = vadd.f32 %v3566, %v3306
  %v3616 = vadd.f32 %v3567, %v3306
  %v3617 = vadd.f32 %v3568, %v3306
  %v3618 = vadd.f32 %v3569, %v3306
  %v3619 = vadd.f32 %v3570, %v3306
  %v3620 = vadd.f32 %v3571, %v3306
  %v3621 = vadd.f32 %v3572, %v3306
  %v3622 = vadd.f32 %v3573, %v3306
  %v3623 = vadd.f32 %v3574, %v3306
  %v3624 = vadd.f32 %v3575, %v3306
  %v3625 = vadd.f32 %v3576, %v3306
  %v3626 = vadd.f32 %v3577, %v3306
  %v3627 = vadd.f32 %v3578, %v3306
  %v3628 = vadd.f32 %v3579, %v3306
  %v3629 = vadd.f32 %v3580, %v3306
  %v3630 = vadd.f32 %v3581, %v3306
  %v3631 = vadd.f32 %v3582, %v3306
  %v3632 = vadd.f32 %v3583, %v3306
  %v3633 = vadd.f32 %v3584, %v3306
  %v3634 = vadd.f32 %v3585, %v3306
  %v3635 = vadd.f32 %v3586, %v3306
  %v3636 = vadd.f32 %v3587, %v3306
  %v3637 = vadd.f32 %v3588, %v3306
  %v3638 = vadd.f32 %v3589, %v3306
  %v3639 = vadd.f32 %v3590, %v3306
  %v3640 = vadd.f32 %v3591, %v3306
  %v3641 = vadd.f32 %v3592, %v3306
  %v3642 = vadd.f32 %v3593, %v3306
  %v3643 = vadd.f32 %v3594, %v3306
  %v3644 = vadd.f32 %v3595, %v3306
  %v3645 = vadd.f32 %v3596, %v3306
  %v3646 = vadd.f32 %v3597, %v3306
  %v3647 = vadd.f32 %v3598, %v3306
  %v3648 = vadd.f32 %v3599, %v3306
  %v3649 = vadd.f32 %v3600, %v3306
  %v3650 = vadd.f32 %v3601, %v3306
  %v3651 = vmax.f32 %v3602, 0.0
  %v3652 = vmax.f32 %v3603, 0.0
  %v3653 = vmax.f32 %v3604, 0.0
  %v3654 = vmax.f32 %v3605, 0.0
  %v3655 = vmax.f32 %v3606, 0.0
  %v3656 = vmax.f32 %v3607, 0.0
  %v3657 = vmax.f32 %v3608, 0.0
  %v3658 = vmax.f32 %v3609, 0.0
  %v3659 = vmax.f32 %v3610, 0.0
  %v3660 = vmax.f32 %v3611, 0.0
  %v3661 = vmax.f32 %v3612, 0.0
  %v3662 = vmax.f32 %v3613, 0.0
  %v3663 = vmax.f32 %v3614, 0.0
  %v3664 = vmax.f32 %v3615, 0.0
  %v3665 = vmax.f32 %v3616, 0.0
  %v3666 = vmax.f32 %v3617, 0.0
  %v3667 = vmax.f32 %v3618, 0.0
  %v3668 = vmax.f32 %v3619, 0.0
  %v3669 = vmax.f32 %v3620, 0.0
  %v3670 = vmax.f32 %v3621, 0.0
  %v3671 = vmax.f32 %v3622, 0.0
  %v3672 = vmax.f32 %v3623, 0.0
  %v3673 = vmax.f32 %v3624, 0.0
  %v3674 = vmax.f32 %v3625, 0.0
  %v3675 = vmax.f32 %v3626, 0.0
  %v3676 = vmax.f32 %v3627, 0.0
  %v3677 = vmax.f32 %v3628, 0.0
  %v3678 = vmax.f32 %v3629, 0.0
  %v3679 = vmax.f32 %v3630, 0.0
  %v3680 = vmax.f32 %v3631, 0.0
  %v3681 = vmax.f32 %v3632, 0.0
  %v3682 = vmax.f32 %v3633, 0.0
  %v3683 = vmax.f32 %v3634, 0.0
  %v3684 = vmax.f32 %v3635, 0.0
  %v3685 = vmax.f32 %v3636, 0.0
  %v3686 = vmax.f32 %v3637, 0.0
  %v3687 = vmax.f32 %v3638, 0.0
  %v3688 = vmax.f32 %v3639, 0.0
  %v3689 = vmax.f32 %v3640, 0.0
  %v3690 = vmax.f32 %v3641, 0.0
  %v3691 = vmax.f32 %v3642, 0.0
  %v3692 = vmax.f32 %v3643, 0.0
  %v3693 = vmax.f32 %v3644, 0.0
  %v3694 = vmax.f32 %v3645, 0.0
  %v3695 = vmax.f32 %v3646, 0.0
  %v3696 = vmax.f32 %v3647, 0.0
  %v3697 = vmax.f32 %v3648, 0.0
  %v3698 = vmax.f32 %v3649, 0.0
  %v3699 = vmax.f32 %v3650, 0.0
  %v3700 = vmul.f32 %v2985, %v3254
  %v3701 = vmul.f32 %v2986, %v3254
  %v3702 = vmul.f32 %v2987, %v3254
  %v3703 = vmul.f32 %v2988, %v3254
  %v3704 = vmul.f32 %v2989, %v3254
  %v3705 = vmul.f32 %v2990, %v3254
  %v3706 = vmul.f32 %v2991, %v3254
  %v3707 = vmul.f32 %v2992, %v3254
  %v3708 = vmul.f32 %v2993, %v3254
  %v3709 = vmul.f32 %v2994, %v3254
  %v3710 = vmul.f32 %v2995, %v3254
  %v3711 = vmul.f32 %v2996, %v3254
  %v3712 = vmul.f32 %v2997, %v3254
  %v3713 = vmul.f32 %v2998, %v3254
  %v3714 = vmul.f32 %v2999, %v3254
  %v3715 = vmul.f32 %v3000, %v3254
  %v3716 = vmul.f32 %v3001, %v3254
  %v3717 = vmul.f32 %v3002, %v3254
  %v3718 = vmul.f32 %v3003, %v3254
  %v3719 = vmul.f32 %v3004, %v3254
  %v3720 = vmul.f32 %v3005, %v3254
  %v3721 = vmul.f32 %v3006, %v3254
  %v3722 = vmul.f32 %v3007, %v3254
  %v3723 = vmul.f32 %v3008, %v3254
  %v3724 = vmul.f32 %v3009, %v3254
  %v3725 = vmul.f32 %v3010, %v3254
  %v3726 = vmul.f32 %v3011, %v3254
  %v3727 = vmul.f32 %v3012, %v3254
  %v3728 = vmul.f32 %v3013, %v3254
  %v3729 = vmul.f32 %v3014, %v3254
  %v3730 = vmul.f32 %v3015, %v3254
  %v3731 = vmul.f32 %v3016, %v3254
  %v3732 = vmul.f32 %v3017, %v3254
  %v3733 = vmul.f32 %v3018, %v3254
  %v3734 = vmul.f32 %v3019, %v3254
  %v3735 = vmul.f32 %v3020, %v3254
  %v3736 = vmul.f32 %v3021, %v3254
  %v3737 = vmul.f32 %v3022, %v3254
  %v3738 = vmul.f32 %v3023, %v3254
  %v3739 = vmul.f32 %v3024, %v3254
  %v3740 = vmul.f32 %v3025, %v3254
  %v3741 = vmul.f32 %v3026, %v3254
  %v3742 = vmul.f32 %v3027, %v3254
  %v3743 = vmul.f32 %v3028, %v3254
  %v3744 = vmul.f32 %v3029, %v3254
  %v3745 = vmul.f32 %v3030, %v3254
  %v3746 = vmul.f32 %v3031, %v3254
  %v3747 = vmul.f32 %v3032, %v3254
  %v3748 = vmul.f32 %v3033, %v3254
  %v3749 = vadd.f32 %v3700, %v3306
  %v3750 = vadd.f32 %v3701, %v3306
  %v3751 = vadd.f32 %v3702, %v3306
  %v3752 = vadd.f32 %v3703, %v3306
  %v3753 = vadd.f32 %v3704, %v3306
  %v3754 = vadd.f32 %v3705, %v3306
  %v3755 = vadd.f32 %v3706, %v3306
  %v3756 = vadd.f32 %v3707, %v3306
  %v3757 = vadd.f32 %v3708, %v3306
  %v3758 = vadd.f32 %v3709, %v3306
  %v3759 = vadd.f32 %v3710, %v3306
  %v3760 = vadd.f32 %v3711, %v3306
  %v3761 = vadd.f32 %v3712, %v3306
  %v3762 = vadd.f32 %v3713, %v3306
  %v3763 = vadd.f32 %v3714, %v3306
  %v3764 = vadd.f32 %v3715, %v3306
  %v3765 = vadd.f32 %v3716, %v3306
  %v3766 = vadd.f32 %v3717, %v3306
  %v3767 = vadd.f32 %v3718, %v3306
  %v3768 = vadd.f32 %v3719, %v3306
  %v3769 = vadd.f32 %v3720, %v3306
  %v3770 = vadd.f32 %v3721, %v3306
  %v3771 = vadd.f32 %v3722, %v3306
  %v3772 = vadd.f32 %v3723, %v3306
  %v3773 = vadd.f32 %v3724, %v3306
  %v3774 = vadd.f32 %v3725, %v3306
  %v3775 = vadd.f32 %v3726, %v3306
  %v3776 = vadd.f32 %v3727, %v3306
  %v3777 = vadd.f32 %v3728, %v3306
  %v3778 = vadd.f32 %v3729, %v3306
  %v3779 = vadd.f32 %v3730, %v3306
  %v3780 = vadd.f32 %v3731, %v3306
  %v3781 = vadd.f32 %v3732, %v3306
  %v3782 = vadd.f32 %v3733, %v3306
  %v3783 = vadd.f32 %v3734, %v3306
  %v3784 = vadd.f32 %v3735, %v3306
  %v3785 = vadd.f32 %v3736, %v3306
  %v3786 = vadd.f32 %v3737, %v3306
  %v3787 = vadd.f32 %v3738, %v3306
  %v3788 = vadd.f32 %v3739, %v3306
  %v3789 = vadd.f32 %v3740, %v3306
  %v3790 = vadd.f32 %v3741, %v3306
  %v3791 = vadd.f32 %v3742, %v3306
  %v3792 = vadd.f32 %v3743, %v3306
  %v3793 = vadd.f32 %v3744, %v3306
  %v3794 = vadd.f32 %v3745, %v3306
  %v3795 = vadd.f32 %v3746, %v3306
  %v3796 = vadd.f32 %v3747, %v3306
  %v3797 = vadd.f32 %v3748, %v3306
  %v3798 = vmax.f32 %v3749, 0.0
  %v3799 = vmax.f32 %v3750, 0.0
  %v3800 = vmax.f32 %v3751, 0.0
  %v3801 = vmax.f32 %v3752, 0.0
  %v3802 = vmax.f32 %v3753, 0.0
  %v3803 = vmax.f32 %v3754, 0.0
  %v3804 = vmax.f32 %v3755, 0.0
  %v3805 = vmax.f32 %v3756, 0.0
  %v3806 = vmax.f32 %v3757, 0.0
  %v3807 = vmax.f32 %v3758, 0.0
  %v3808 = vmax.f32 %v3759, 0.0
  %v3809 = vmax.f32 %v3760, 0.0
  %v3810 = vmax.f32 %v3761, 0.0
  %v3811 = vmax.f32 %v3762, 0.0
  %v3812 = vmax.f32 %v3763, 0.0
  %v3813 = vmax.f32 %v3764, 0.0
  %v3814 = vmax.f32 %v3765, 0.0
  %v3815 = vmax.f32 %v3766, 0.0
  %v3816 = vmax.f32 %v3767, 0.0
  %v3817 = vmax.f32 %v3768, 0.0
  %v3818 = vmax.f32 %v3769, 0.0
  %v3819 = vmax.f32 %v3770, 0.0
  %v3820 = vmax.f32 %v3771, 0.0
  %v3821 = vmax.f32 %v3772, 0.0
  %v3822 = vmax.f32 %v3773, 0.0
  %v3823 = vmax.f32 %v3774, 0.0
  %v3824 = vmax.f32 %v3775, 0.0
  %v3825 = vmax.f32 %v3776, 0.0
  %v3826 = vmax.f32 %v3777, 0.0
  %v3827 = vmax.f32 %v3778, 0.0
  %v3828 = vmax.f32 %v3779, 0.0
  %v3829 = vmax.f32 %v3780, 0.0
  %v3830 = vmax.f32 %v3781, 0.0
  %v3831 = vmax.f32 %v3782, 0.0
  %v3832 = vmax.f32 %v3783, 0.0
  %v3833 = vmax.f32 %v3784, 0.0
  %v3834 = vmax.f32 %v3785, 0.0
  %v3835 = vmax.f32 %v3786, 0.0
  %v3836 = vmax.f32 %v3787, 0.0
  %v3837 = vmax.f32 %v3788, 0.0
  %v3838 = vmax.f32 %v3789, 0.0
  %v3839 = vmax.f32 %v3790, 0.0
  %v3840 = vmax.f32 %v3791, 0.0
  %v3841 = vmax.f32 %v3792, 0.0
  %v3842 = vmax.f32 %v3793, 0.0
  %v3843 = vmax.f32 %v3794, 0.0
  %v3844 = vmax.f32 %v3795, 0.0
  %v3845 = vmax.f32 %v3796, 0.0
  %v3846 = vmax.f32 %v3797, 0.0
  %v3847 = vmax.f32 %v3357, %v3504
  %v3848 = vmax.f32 %v3358, %v3505
  %v3849 = vmax.f32 %v3359, %v3506
  %v3850 = vmax.f32 %v3360, %v3507
  %v3851 = vmax.f32 %v3361, %v3508
  %v3852 = vmax.f32 %v3362, %v3509
  %v3853 = vmax.f32 %v3363, %v3510
  %v3854 = vmax.f32 %v3364, %v3511
  %v3855 = vmax.f32 %v3365, %v3512
  %v3856 = vmax.f32 %v3366, %v3513
  %v3857 = vmax.f32 %v3367, %v3514
  %v3858 = vmax.f32 %v3368, %v3515
  %v3859 = vmax.f32 %v3369, %v3516
  %v3860 = vmax.f32 %v3370, %v3517
  %v3861 = vmax.f32 %v3371, %v3518
  %v3862 = vmax.f32 %v3372, %v3519
  %v3863 = vmax.f32 %v3373, %v3520
  %v3864 = vmax.f32 %v3374, %v3521
  %v3865 = vmax.f32 %v3375, %v3522
  %v3866 = vmax.f32 %v3376, %v3523
  %v3867 = vmax.f32 %v3377, %v3524
  %v3868 = vmax.f32 %v3378, %v3525
  %v3869 = vmax.f32 %v3379, %v3526
  %v3870 = vmax.f32 %v3380, %v3527
  %v3871 = vmax.f32 %v3381, %v3528
  %v3872 = vmax.f32 %v3382, %v3529
  %v3873 = vmax.f32 %v3383, %v3530
  %v3874 = vmax.f32 %v3384, %v3531
  %v3875 = vmax.f32 %v3385, %v3532
  %v3876 = vmax.f32 %v3386, %v3533
  %v3877 = vmax.f32 %v3387, %v3534
  %v3878 = vmax.f32 %v3388, %v3535
  %v3879 = vmax.f32 %v3389, %v3536
  %v3880 = vmax.f32 %v3390, %v3537
  %v3881 = vmax.f32 %v3391, %v3538
  %v3882 = vmax.f32 %v3392, %v3539
  %v3883 = vmax.f32 %v3393, %v3540
  %v3884 = vmax.f32 %v3394, %v3541
  %v3885 = vmax.f32 %v3395, %v3542
  %v3886 = vmax.f32 %v3396, %v3543
  %v3887 = vmax.f32 %v3397, %v3544
  %v3888 = vmax.f32 %v3398, %v3545
  %v3889 = vmax.f32 %v3399, %v3546
  %v3890 = vmax.f32 %v3400, %v3547
  %v3891 = vmax.f32 %v3401, %v3548
  %v3892 = vmax.f32 %v3402, %v3549
  %v3893 = vmax.f32 %v3403, %v3550
  %v3894 = vmax.f32 %v3404, %v3551
  %v3895 = vmax.f32 %v3405, %v3552
  %v3896 = vmax.f32 %v3651, %v3798
  %v3897 = vmax.f32 %v3652, %v3799
  %v3898 = vmax.f32 %v3653, %v3800
  %v3899 = vmax.f32 %v3654, %v3801
  %v3900 = vmax.f32 %v3655, %v3802
  %v3901 = vmax.f32 %v3656, %v3803
  %v3902 = vmax.f32 %v3657, %v3804
  %v3903 = vmax.f32 %v3658, %v3805
  %v3904 = vmax.f32 %v3659, %v3806
  %v3905 = vmax.f32 %v3660, %v3807
  %v3906 = vmax.f32 %v3661, %v3808
  %v3907 = vmax.f32 %v3662, %v3809
  %v3908 = vmax.f32 %v3663, %v3810
  %v3909 = vmax.f32 %v3664, %v3811
  %v3910 = vmax.f32 %v3665, %v3812
  %v3911 = vmax.f32 %v3666, %v3813
  %v3912 = vmax.f32 %v3667, %v3814
  %v3913 = vmax.f32 %v3668, %v3815
  %v3914 = vmax.f32 %v3669, %v3816
  %v3915 = vmax.f32 %v3670, %v3817
  %v3916 = vmax.f32 %v3671, %v3818
  %v3917 = vmax.f32 %v3672, %v3819
  %v3918 = vmax.f32 %v3673, %v3820
  %v3919 = vmax.f32 %v3674, %v3821
  %v3920 = vmax.f32 %v3675, %v3822
  %v3921 = vmax.f32 %v3676, %v3823
  %v3922 = vmax.f32 %v3677, %v3824
  %v3923 = vmax.f32 %v3678, %v3825
  %v3924 = vmax.f32 %v3679, %v3826
  %v3925 = vmax.f32 %v3680, %v3827
  %v3926 = vmax.f32 %v3681, %v3828
  %v3927 = vmax.f32 %v3682, %v3829
  %v3928 = vmax.f32 %v3683, %v3830
  %v3929 = vmax.f32 %v3684, %v3831
  %v3930 = vmax.f32 %v3685, %v3832
  %v3931 = vmax.f32 %v3686, %v3833
  %v3932 = vmax.f32 %v3687, %v3834
  %v3933 = vmax.f32 %v3688, %v3835
  %v3934 = vmax.f32 %v3689, %v3836
  %v3935 = vmax.f32 %v3690, %v3837
  %v3936 = vmax.f32 %v3691, %v3838
  %v3937 = vmax.f32 %v3692, %v3839
  %v3938 = vmax.f32 %v3693, %v3840
  %v3939 = vmax.f32 %v3694, %v3841
  %v3940 = vmax.f32 %v3695, %v3842
  %v3941 = vmax.f32 %v3696, %v3843
  %v3942 = vmax.f32 %v3697, %v3844
  %v3943 = vmax.f32 %v3698, %v3845
  %v3944 = vmax.f32 %v3699, %v3846
  %v3945 = vmax.f32 %v3847, %v3896
  %v3946 = vmax.f32 %v3848, %v3897
  %v3947 = vmax.f32 %v3849, %v3898
  %v3948 = vmax.f32 %v3850, %v3899
  %v3949 = vmax.f32 %v3851, %v3900
  %v3950 = vmax.f32 %v3852, %v3901
  %v3951 = vmax.f32 %v3853, %v3902
  %v3952 = vmax.f32 %v3854, %v3903
  %v3953 = vmax.f32 %v3855, %v3904
  %v3954 = vmax.f32 %v3856, %v3905
  %v3955 = vmax.f32 %v3857, %v3906
  %v3956 = vmax.f32 %v3858, %v3907
  %v3957 = vmax.f32 %v3859, %v3908
  %v3958 = vmax.f32 %v3860, %v3909
  %v3959 = vmax.f32 %v3861, %v3910
  %v3960 = vmax.f32 %v3862, %v3911
  %v3961 = vmax.f32 %v3863, %v3912
  %v3962 = vmax.f32 %v3864, %v3913
  %v3963 = vmax.f32 %v3865, %v3914
  %v3964 = vmax.f32 %v3866, %v3915
  %v3965 = vmax.f32 %v3867, %v3916
  %v3966 = vmax.f32 %v3868, %v3917
  %v3967 = vmax.f32 %v3869, %v3918
  %v3968 = vmax.f32 %v3870, %v3919
  %v3969 = vmax.f32 %v3871, %v3920
  %v3970 = vmax.f32 %v3872, %v3921
  %v3971 = vmax.f32 %v3873, %v3922
  %v3972 = vmax.f32 %v3874, %v3923
  %v3973 = vmax.f32 %v3875, %v3924
  %v3974 = vmax.f32 %v3876, %v3925
  %v3975 = vmax.f32 %v3877, %v3926
  %v3976 = vmax.f32 %v3878, %v3927
  %v3977 = vmax.f32 %v3879, %v3928
  %v3978 = vmax.f32 %v3880, %v3929
  %v3979 = vmax.f32 %v3881, %v3930
  %v3980 = vmax.f32 %v3882, %v3931
  %v3981 = vmax.f32 %v3883, %v3932
  %v3982 = vmax.f32 %v3884, %v3933
  %v3983 = vmax.f32 %v3885, %v3934
  %v3984 = vmax.f32 %v3886, %v3935
  %v3985 = vmax.f32 %v3887, %v3936
  %v3986 = vmax.f32 %v3888, %v3937
  %v3987 = vmax.f32 %v3889, %v3938
  %v3988 = vmax.f32 %v3890, %v3939
  %v3989 = vmax.f32 %v3891, %v3940
  %v3990 = vmax.f32 %v3892, %v3941
  %v3991 = vmax.f32 %v3893, %v3942
  %v3992 = vmax.f32 %v3894, %v3943
  %v3993 = vmax.f32 %v3895, %v3944
  %3994 = vst.msk [vmem:[%s5] sm:$0xff] %vm418, %v3945
  %3995 = vst.msk [vmem:[%s5 + $0x8] sm:$0xff] %vm418, %v3946
  %3996 = vst.msk [vmem:[%s5 + $0x10] sm:$0xff] %vm418, %v3947
  %3997 = vst.msk [vmem:[%s5 + $0x18] sm:$0xff] %vm418, %v3948
  %3998 = vst.msk [vmem:[%s5 + $0x20] sm:$0xff] %vm418, %v3949
  %3999 = vst.msk [vmem:[%s5 + $0x28] sm:$0xff] %vm418, %v3950
  %4000 = vst.msk [vmem:[%s5 + $0x30] sm:$0xff] %vm418, %v3951
  %4001 = vst.msk [vmem:[%s5 + $0x38] sm:$0xff] %vm418, %v3952
  %4002 = vst.msk [vmem:[%s5 + $0x40] sm:$0xff] %vm418, %v3953
  %4003 = vst.msk [vmem:[%s5 + $0x48] sm:$0xff] %vm418, %v3954
  %4004 = vst.msk [vmem:[%s5 + $0x50] sm:$0xff] %vm418, %v3955
  %4005 = vst.msk [vmem:[%s5 + $0x58] sm:$0xff] %vm418, %v3956
  %4006 = vst.msk [vmem:[%s5 + $0x60] sm:$0xff] %vm418, %v3957
  %4007 = vst.msk [vmem:[%s5 + $0x68] sm:$0xff] %vm418, %v3958
  %4008 = vst.msk [vmem:[%s5 + $0x70] sm:$0xff] %vm418, %v3959
  %4009 = vst.msk [vmem:[%s5 + $0x78] sm:$0xff] %vm418, %v3960
  %4010 = vst.msk [vmem:[%s5 + $0x80] sm:$0xff] %vm418, %v3961
  %4011 = vst.msk [vmem:[%s5 + $0x88] sm:$0xff] %vm418, %v3962
  %4012 = vst.msk [vmem:[%s5 + $0x90] sm:$0xff] %vm418, %v3963
  %4013 = vst.msk [vmem:[%s5 + $0x98] sm:$0xff] %vm418, %v3964
  %4014 = vst.msk [vmem:[%s5 + $0xa0] sm:$0xff] %vm418, %v3965
  %4015 = vst.msk [vmem:[%s5 + $0xa8] sm:$0xff] %vm418, %v3966
  %4016 = vst.msk [vmem:[%s5 + $0xb0] sm:$0xff] %vm418, %v3967
  %4017 = vst.msk [vmem:[%s5 + $0xb8] sm:$0xff] %vm418, %v3968
  %4018 = vst.msk [vmem:[%s5 + $0xc0] sm:$0xff] %vm418, %v3969
  %4019 = vst.msk [vmem:[%s5 + $0xc8] sm:$0xff] %vm418, %v3970
  %4020 = vst.msk [vmem:[%s5 + $0xd0] sm:$0xff] %vm418, %v3971
  %4021 = vst.msk [vmem:[%s5 + $0xd8] sm:$0xff] %vm418, %v3972
  %4022 = vst.msk [vmem:[%s5 + $0xe0] sm:$0xff] %vm418, %v3973
  %4023 = vst.msk [vmem:[%s5 + $0xe8] sm:$0xff] %vm418, %v3974
  %4024 = vst.msk [vmem:[%s5 + $0xf0] sm:$0xff] %vm418, %v3975
  %4025 = vst.msk [vmem:[%s5 + $0xf8] sm:$0xff] %vm418, %v3976
  %4026 = vst.msk [vmem:[%s5 + $0x100] sm:$0xff] %vm418, %v3977
  %4027 = vst.msk [vmem:[%s5 + $0x108] sm:$0xff] %vm418, %v3978
  %4028 = vst.msk [vmem:[%s5 + $0x110] sm:$0xff] %vm418, %v3979
  %4029 = vst.msk [vmem:[%s5 + $0x118] sm:$0xff] %vm418, %v3980
  %4030 = vst.msk [vmem:[%s5 + $0x120] sm:$0xff] %vm418, %v3981
  %4031 = vst.msk [vmem:[%s5 + $0x128] sm:$0xff] %vm418, %v3982
  %4032 = vst.msk [vmem:[%s5 + $0x130] sm:$0xff] %vm418, %v3983
  %4033 = vst.msk [vmem:[%s5 + $0x138] sm:$0xff] %vm418, %v3984
  %4034 = vst.msk [vmem:[%s5 + $0x140] sm:$0xff] %vm418, %v3985
  %4035 = vst.msk [vmem:[%s5 + $0x148] sm:$0xff] %vm418, %v3986
  %4036 = vst.msk [vmem:[%s5 + $0x150] sm:$0xff] %vm418, %v3987
  %4037 = vst.msk [vmem:[%s5 + $0x158] sm:$0xff] %vm418, %v3988
  %4038 = vst.msk [vmem:[%s5 + $0x160] sm:$0xff] %vm418, %v3989
  %4039 = vst.msk [vmem:[%s5 + $0x168] sm:$0xff] %vm418, %v3990
  %4040 = vst.msk [vmem:[%s5 + $0x170] sm:$0xff] %vm418, %v3991
  %4041 = vst.msk [vmem:[%s5 + $0x178] sm:$0xff] %vm418, %v3992
  %4042 = vst.msk [vmem:[%s5 + $0x180] sm:$0xff] %vm418, %v3993
  // Predicated region
  $region22: #{lenet_forward.3} parent=0 // pred_check
    _
  $region23: #{lenet_forward.3} parent=0 // pred_check_branch
    %4044 = sbr.rel (0) target = $region25
  $region24: #{lenet_forward.3} parent=0 // pred_region
    _
  $region25: #{lenet_forward.3} parent=0 // pred_fallthru
    _
  // Predicated region
  $region26: #{lenet_forward.3} parent=0 // pred_check
    _
  $region27: #{lenet_forward.3} parent=0 // pred_check_branch
    %4046 = sbr.rel (0) target = $region29
  $region28: #{lenet_forward.3} parent=0 // pred_region
    _
  $region29: #{lenet_forward.3} parent=0 // pred_fallthru
    _

// kernel: lenet_forward.4
$region0: #{lenet_forward.4}
  #allocation0 [shape = 'u32[]', space=smem, size = 0x4, offset = 0x4, fixed_abs, tag = 'smem constant byte address 0x4 - core index']
  #allocation1 [shape = 'u32[72,128]{1,0:T(1,128)}', space=vmem, size = 0x9000, scoped, tag = 'internal scratch']
  #allocation2 [shape = 'f32[4,50,16]{2,1,0:T(8,128)}', space=vmem, size = 0x1c000, scoped, tag = 'scratch operand']
  %s0 = inlined_call_operand.vmem [shape: bf16[4,50,256], index: 0, kind: input, shape index: {}]
  %s1 = inlined_call_operand.vmem [shape: bf16[256,16], index: 1, kind: input, shape index: {}]
  %s2 = inlined_call_operand.vmem [shape: f32[1,16], index: 2, kind: input, shape index: {}]
  %s3 = inlined_call_operand.vmem [shape: f32[1,16], index: 3, kind: input, shape index: {}]
  %s4 = inlined_call_operand.vmem [shape: f32[1,16], index: 4, kind: input, shape index: {}]
  %s5 = inlined_call_operand.vmem [shape: f32[50,16], index: 5, kind: output, shape index: {}]
  %s6 = sld [smem:[#allocation0]]
  $region30: #{lenet_forward.4} parent=0
    _
  %s8 = ssub.s32 1, %s6
  %s9 = scalar_select 0, %s8, %s6
  // Predicated region
  $region2: #{lenet_forward.4} parent=0 // pred_check
    _
  $region3: #{lenet_forward.4} parent=0 // pred_check_branch
    %11 = sbr.rel (0) target = $region5
  $region4: #{lenet_forward.4} parent=0 // pred_region
    _
  $region5: #{lenet_forward.4} parent=0 // pred_fallthru
    _
  // Predicated region
  $region6: #{lenet_forward.4} parent=0 // pred_check
    _
  $region7: #{lenet_forward.4} parent=0 // pred_check_branch
    %13 = sbr.rel (0) target = $region9
  $region8: #{lenet_forward.4} parent=0 // pred_region
    _
  $region9: #{lenet_forward.4} parent=0 // pred_fallthru
    _
  // Predicated region
  $region10: #{lenet_forward.4} parent=0 // pred_check
    _
  $region11: #{lenet_forward.4} parent=0 // pred_check_branch
    %15 = sbr.rel (0) target = $region13
  $region12: #{lenet_forward.4} parent=0 // pred_region
    _
  $region13: #{lenet_forward.4} parent=0 // pred_fallthru
    _
  // Predicated region
  $region14: #{lenet_forward.4} parent=0 // pred_check
    _
  $region15: #{lenet_forward.4} parent=0 // pred_check_branch
    %17 = sbr.rel (0) target = $region17
  $region16: #{lenet_forward.4} parent=0 // pred_region
    _
  $region17: #{lenet_forward.4} parent=0 // pred_fallthru
    _
  // Predicated region
  $region18: #{lenet_forward.4} parent=0 // pred_check
    _
  $region19: #{lenet_forward.4} parent=0 // pred_check_branch
    %19 = sbr.rel (0) target = $region21
  $region20: #{lenet_forward.4} parent=0 // pred_region
    _
  $region21: #{lenet_forward.4} parent=0 // pred_fallthru
    _
  %v20 = vld [vmem:[%s0] sm:$0xff]
  %v21 = vld [vmem:[%s0 + $0x8] sm:$0xff]
  %v22 = vld [vmem:[%s0 + $0x10] sm:$0xff]
  %v23 = vld [vmem:[%s0 + $0x18] sm:$0xff]
  %v24 = vld [vmem:[%s0 + $0x20] sm:$0xff]
  %v25 = vld [vmem:[%s0 + $0x28] sm:$0xff]
  %v26 = vld [vmem:[%s0 + $0x30] sm:$0x11]
  %v27 = vld [vmem:[%s1] sm:$0xf]
  %v28 = vld [vmem:[%s1 + $0x4] sm:$0xf]
  %v29 = vld [vmem:[%s1 + $0x8] sm:$0xf]
  %v30 = vld [vmem:[%s1 + $0xc] sm:$0xf]
  %v31 = vld [vmem:[%s1 + $0x10] sm:$0xf]
  %v32 = vld [vmem:[%s1 + $0x14] sm:$0xf]
  %v33 = vld [vmem:[%s1 + $0x18] sm:$0xf]
  %v34 = vld [vmem:[%s1 + $0x1c] sm:$0xf]
  %v35 = vld [vmem:[%s1 + $0x20] sm:$0xf]
  %v36 = vld [vmem:[%s1 + $0x24] sm:$0xf]
  %v37 = vld [vmem:[%s1 + $0x28] sm:$0xf]
  %v38 = vld [vmem:[%s1 + $0x2c] sm:$0xf]
  %v39 = vld [vmem:[%s1 + $0x30] sm:$0xf]
  %v40 = vld [vmem:[%s1 + $0x34] sm:$0xf]
  %v41 = vld [vmem:[%s1 + $0x38] sm:$0xf]
  %v42 = vld [vmem:[%s1 + $0x3c] sm:$0xf]
  %v43 = vld [vmem:[%s1 + $0x40] sm:$0xf]
  %v44 = vld [vmem:[%s1 + $0x44] sm:$0xf]
  %v45 = vld [vmem:[%s1 + $0x48] sm:$0xf]
  %v46 = vld [vmem:[%s1 + $0x4c] sm:$0xf]
  %v47 = vld [vmem:[%s1 + $0x50] sm:$0xf]
  %v48 = vld [vmem:[%s1 + $0x54] sm:$0xf]
  %v49 = vld [vmem:[%s1 + $0x58] sm:$0xf]
  %v50 = vld [vmem:[%s1 + $0x5c] sm:$0xf]
  %v51 = vld [vmem:[%s1 + $0x60] sm:$0xf]
  %v52 = vld [vmem:[%s1 + $0x64] sm:$0xf]
  %v53 = vld [vmem:[%s1 + $0x68] sm:$0xf]
  %v54 = vld [vmem:[%s1 + $0x6c] sm:$0xf]
  %v55 = vld [vmem:[%s1 + $0x70] sm:$0xf]
  %v56 = vld [vmem:[%s1 + $0x74] sm:$0xf]
  %v57 = vld [vmem:[%s1 + $0x78] sm:$0xf]
  %v58 = vld [vmem:[%s1 + $0x7c] sm:$0xf]
  %v59 = vld [vmem:[%s2] sm:$0x1]
  %v61 = vperm.slane %v59, 0
  %v70 = vunpack.c.l.b16 %v20
  %v71 = vunpack.c.h.b16 %v20
  %v72 = vunpack.c.l.b16 %v21
  %v73 = vunpack.c.h.b16 %v21
  %v74 = vunpack.c.l.b16 %v22
  %v75 = vunpack.c.h.b16 %v22
  %v76 = vunpack.c.l.b16 %v23
  %v77 = vunpack.c.h.b16 %v23
  %v78 = vunpack.c.l.b16 %v24
  %v79 = vunpack.c.h.b16 %v24
  %v80 = vunpack.c.l.b16 %v25
  %v81 = vunpack.c.h.b16 %v25
  %v82 = vunpack.c.l.b16 %v26
  %v83 = vunpack.c.h.b16 %v26
  %v84 = vpack.c.b16 %v72, %v70
  %v85 = vpack.c.b16 %v73, %v71
  %v86 = vpack.c.b16 %v76, %v74
  %v87 = vpack.c.b16 %v77, %v75
  %v88 = vpack.c.b16 %v80, %v78
  %v89 = vpack.c.b16 %v81, %v79
  %v90 = vpack.c.b16 %v82, %v82
  %v91 = vpack.c.b16 %v83, %v83
  %v132 = vunpack.c.l.b16 %v27
  %v133 = vunpack.c.l.b16 %v28
  %v134 = vunpack.c.l.b16 %v29
  %v135 = vunpack.c.l.b16 %v30
  %v136 = vunpack.c.l.b16 %v31
  %v137 = vunpack.c.l.b16 %v32
  %v138 = vunpack.c.l.b16 %v33
  %v139 = vunpack.c.l.b16 %v34
  %v140 = vunpack.c.l.b16 %v35
  %v141 = vunpack.c.l.b16 %v36
  %v142 = vunpack.c.l.b16 %v37
  %v143 = vunpack.c.l.b16 %v38
  %v144 = vunpack.c.l.b16 %v39
  %v145 = vunpack.c.l.b16 %v40
  %v146 = vunpack.c.l.b16 %v41
  %v147 = vunpack.c.l.b16 %v42
  %v148 = vunpack.c.l.b16 %v43
  %v149 = vunpack.c.l.b16 %v44
  %v150 = vunpack.c.l.b16 %v45
  %v151 = vunpack.c.l.b16 %v46
  %v152 = vunpack.c.l.b16 %v47
  %v153 = vunpack.c.l.b16 %v48
  %v154 = vunpack.c.l.b16 %v49
  %v155 = vunpack.c.l.b16 %v50
  %v156 = vunpack.c.l.b16 %v51
  %v157 = vunpack.c.l.b16 %v52
  %v158 = vunpack.c.l.b16 %v53
  %v159 = vunpack.c.l.b16 %v54
  %v160 = vunpack.c.l.b16 %v55
  %v161 = vunpack.c.l.b16 %v56
  %v162 = vunpack.c.l.b16 %v57
  %v163 = vunpack.c.l.b16 %v58
  %v164 = vpack.c.b16 %v133, %v132
  %v165 = vpack.c.b16 %v135, %v134
  %v166 = vpack.c.b16 %v137, %v136
  %v167 = vpack.c.b16 %v139, %v138
  %v168 = vpack.c.b16 %v141, %v140
  %v169 = vpack.c.b16 %v143, %v142
  %v170 = vpack.c.b16 %v145, %v144
  %v171 = vpack.c.b16 %v147, %v146
  %v172 = vpack.c.b16 %v149, %v148
  %v173 = vpack.c.b16 %v151, %v150
  %v174 = vpack.c.b16 %v153, %v152
  %v175 = vpack.c.b16 %v155, %v154
  %v176 = vpack.c.b16 %v157, %v156
  %v177 = vpack.c.b16 %v159, %v158
  %v178 = vpack.c.b16 %v161, %v160
  %v179 = vpack.c.b16 %v163, %v162
  %196 = vmatpush.bf16.msra.mxu0 %v171
  %197 = vmatpush.bf16.msra.mxu0 %v170
  %198 = vmatpush.bf16.msra.mxu0 %v169
  %199 = vmatpush.bf16.msra.mxu0 %v168
  %200 = vmatpush.bf16.msra.mxu0 %v167
  %201 = vmatpush.bf16.msra.mxu0 %v166
  %202 = vmatpush.bf16.msra.mxu0 %v165
  %203 = vmatpush.bf16.msra.mxu0 %v164
  %204 = vmatmul.bf16.gmra.mxu0 %v84
  %v205 = vpop.f32.mrf.mxu0
  %v206 = vadd.f32 %v61, %v205
  %v207 = vpop.f32.mrf.mxu0
  %v208 = vadd.f32 %v61, %v207
  %209 = vmatmul.bf16.gmra.mxu0 %v86
  %v210 = vpop.f32.mrf.mxu0
  %v211 = vadd.f32 %v61, %v210
  %v212 = vpop.f32.mrf.mxu0
  %v213 = vadd.f32 %v61, %v212
  %214 = vmatmul.bf16.gmra.mxu0 %v88
  %v215 = vpop.f32.mrf.mxu0
  %v216 = vadd.f32 %v61, %v215
  %v217 = vpop.f32.mrf.mxu0
  %v218 = vadd.f32 %v61, %v217
  %219 = vmatmul.bf16.gmra.mxu0 %v90
  %v220 = vpop.f32.mrf.mxu0
  %v221 = vadd.f32 %v61, %v220
  %v222 = vpop.f32.mrf.mxu0
  %223 = vdwg.mxu0
  %224 = vmatpush.bf16.msra.mxu0 %v179
  %225 = vmatpush.bf16.msra.mxu0 %v178
  %226 = vmatpush.bf16.msra.mxu0 %v177
  %227 = vmatpush.bf16.msra.mxu0 %v176
  %228 = vmatpush.bf16.msra.mxu0 %v175
  %229 = vmatpush.bf16.msra.mxu0 %v174
  %230 = vmatpush.bf16.msra.mxu0 %v173
  %231 = vmatpush.bf16.msra.mxu0 %v172
  %232 = vmatmul.bf16.gmra.mxu0 %v85
  %v233 = vpop.f32.mrf.mxu0
  %v234 = vadd.f32 %v206, %v233
  %v235 = vpop.f32.mrf.mxu0
  %v236 = vadd.f32 %v208, %v235
  %237 = vmatmul.bf16.gmra.mxu0 %v87
  %v238 = vpop.f32.mrf.mxu0
  %v239 = vadd.f32 %v211, %v238
  %v240 = vpop.f32.mrf.mxu0
  %v241 = vadd.f32 %v213, %v240
  %242 = vmatmul.bf16.gmra.mxu0 %v89
  %v243 = vpop.f32.mrf.mxu0
  %v244 = vadd.f32 %v216, %v243
  %v245 = vpop.f32.mrf.mxu0
  %v246 = vadd.f32 %v218, %v245
  %247 = vmatmul.bf16.gmra.mxu0 %v91
  %v248 = vpop.f32.mrf.mxu0
  %v249 = vadd.f32 %v221, %v248
  %v250 = vpop.f32.mrf.mxu0
  %251 = vdwg.mxu0
  %vm252 = vcmask 130048
  %253 = vst.msk [vmem:[#allocation2] sm:$0xff] %vm252, %v234
  %254 = vst.msk [vmem:[#allocation2 + $0x8] sm:$0xff] %vm252, %v236
  %255 = vst.msk [vmem:[#allocation2 + $0x10] sm:$0xff] %vm252, %v239
  %256 = vst.msk [vmem:[#allocation2 + $0x18] sm:$0xff] %vm252, %v241
  %257 = vst.msk [vmem:[#allocation2 + $0x20] sm:$0xff] %vm252, %v244
  %258 = vst.msk [vmem:[#allocation2 + $0x28] sm:$0xff] %vm252, %v246
  %vm259 = vcmask 123904
  %260 = vst.msk [vmem:[#allocation2 + $0x30] sm:$0x3] %vm259, %v249
  %v261 = vsel %vm252, %v234, 0.0
  %v262 = vsel %vm252, %v236, 0.0
  %v263 = vadd.f32 %v261, %v262
  %v264 = vsel %vm252, %v239, 0.0
  %v265 = vadd.f32 %v263, %v264
  %v266 = vsel %vm252, %v241, 0.0
  %v267 = vadd.f32 %v265, %v266
  %v268 = vsel %vm252, %v244, 0.0
  %v269 = vadd.f32 %v267, %v268
  %v270 = vsel %vm252, %v246, 0.0
  %v271 = vadd.f32 %v269, %v270
  %v272 = vsel %vm259, %v249, 0.0
  %v273 = vadd.f32 %v271, %v272
  %v274 = vrot.slane %v273, 4
  %v275 = vadd.f32 %v273, %v274
  %v276 = vrot.slane %v275, 2
  %v277 = vadd.f32 %v275, %v276
  %v278 = vrot.slane %v277, 1
  %v279 = vadd.f32 %v277, %v278
  %v280 = vadd.f32 %v279, 0.0
  %s281 = scalar_lea.vmem %s0, 56
  %v282 = vld [vmem:[%s281] sm:$0xff]
  %v283 = vld [vmem:[%s281 + $0x8] sm:$0xff]
  %v284 = vld [vmem:[%s281 + $0x10] sm:$0xff]
  %v285 = vld [vmem:[%s281 + $0x18] sm:$0xff]
  %v286 = vld [vmem:[%s281 + $0x20] sm:$0xff]
  %v287 = vld [vmem:[%s281 + $0x28] sm:$0xff]
  %v288 = vld [vmem:[%s281 + $0x30] sm:$0x11]
  %v289 = vld [vmem:[%s1] sm:$0xf]
  %v290 = vld [vmem:[%s1 + $0x4] sm:$0xf]
  %v291 = vld [vmem:[%s1 + $0x8] sm:$0xf]
  %v292 = vld [vmem:[%s1 + $0xc] sm:$0xf]
  %v293 = vld [vmem:[%s1 + $0x10] sm:$0xf]
  %v294 = vld [vmem:[%s1 + $0x14] sm:$0xf]
  %v295 = vld [vmem:[%s1 + $0x18] sm:$0xf]
  %v296 = vld [vmem:[%s1 + $0x1c] sm:$0xf]
  %v297 = vld [vmem:[%s1 + $0x20] sm:$0xf]
  %v298 = vld [vmem:[%s1 + $0x24] sm:$0xf]
  %v299 = vld [vmem:[%s1 + $0x28] sm:$0xf]
  %v300 = vld [vmem:[%s1 + $0x2c] sm:$0xf]
  %v301 = vld [vmem:[%s1 + $0x30] sm:$0xf]
  %v302 = vld [vmem:[%s1 + $0x34] sm:$0xf]
  %v303 = vld [vmem:[%s1 + $0x38] sm:$0xf]
  %v304 = vld [vmem:[%s1 + $0x3c] sm:$0xf]
  %v305 = vld [vmem:[%s1 + $0x40] sm:$0xf]
  %v306 = vld [vmem:[%s1 + $0x44] sm:$0xf]
  %v307 = vld [vmem:[%s1 + $0x48] sm:$0xf]
  %v308 = vld [vmem:[%s1 + $0x4c] sm:$0xf]
  %v309 = vld [vmem:[%s1 + $0x50] sm:$0xf]
  %v310 = vld [vmem:[%s1 + $0x54] sm:$0xf]
  %v311 = vld [vmem:[%s1 + $0x58] sm:$0xf]
  %v312 = vld [vmem:[%s1 + $0x5c] sm:$0xf]
  %v313 = vld [vmem:[%s1 + $0x60] sm:$0xf]
  %v314 = vld [vmem:[%s1 + $0x64] sm:$0xf]
  %v315 = vld [vmem:[%s1 + $0x68] sm:$0xf]
  %v316 = vld [vmem:[%s1 + $0x6c] sm:$0xf]
  %v317 = vld [vmem:[%s1 + $0x70] sm:$0xf]
  %v318 = vld [vmem:[%s1 + $0x74] sm:$0xf]
  %v319 = vld [vmem:[%s1 + $0x78] sm:$0xf]
  %v320 = vld [vmem:[%s1 + $0x7c] sm:$0xf]
  %v321 = vld [vmem:[%s2] sm:$0x1]
  %v323 = vperm.slane %v321, 0
  %v332 = vunpack.c.l.b16 %v282
  %v333 = vunpack.c.h.b16 %v282
  %v334 = vunpack.c.l.b16 %v283
  %v335 = vunpack.c.h.b16 %v283
  %v336 = vunpack.c.l.b16 %v284
  %v337 = vunpack.c.h.b16 %v284
  %v338 = vunpack.c.l.b16 %v285
  %v339 = vunpack.c.h.b16 %v285
  %v340 = vunpack.c.l.b16 %v286
  %v341 = vunpack.c.h.b16 %v286
  %v342 = vunpack.c.l.b16 %v287
  %v343 = vunpack.c.h.b16 %v287
  %v344 = vunpack.c.l.b16 %v288
  %v345 = vunpack.c.h.b16 %v288
  %v346 = vpack.c.b16 %v334, %v332
  %v347 = vpack.c.b16 %v335, %v333
  %v348 = vpack.c.b16 %v338, %v336
  %v349 = vpack.c.b16 %v339, %v337
  %v350 = vpack.c.b16 %v342, %v340
  %v351 = vpack.c.b16 %v343, %v341
  %v352 = vpack.c.b16 %v344, %v344
  %v353 = vpack.c.b16 %v345, %v345
  %v394 = vunpack.c.l.b16 %v289
  %v395 = vunpack.c.l.b16 %v290
  %v396 = vunpack.c.l.b16 %v291
  %v397 = vunpack.c.l.b16 %v292
  %v398 = vunpack.c.l.b16 %v293
  %v399 = vunpack.c.l.b16 %v294
  %v400 = vunpack.c.l.b16 %v295
  %v401 = vunpack.c.l.b16 %v296
  %v402 = vunpack.c.l.b16 %v297
  %v403 = vunpack.c.l.b16 %v298
  %v404 = vunpack.c.l.b16 %v299
  %v405 = vunpack.c.l.b16 %v300
  %v406 = vunpack.c.l.b16 %v301
  %v407 = vunpack.c.l.b16 %v302
  %v408 = vunpack.c.l.b16 %v303
  %v409 = vunpack.c.l.b16 %v304
  %v410 = vunpack.c.l.b16 %v305
  %v411 = vunpack.c.l.b16 %v306
  %v412 = vunpack.c.l.b16 %v307
  %v413 = vunpack.c.l.b16 %v308
  %v414 = vunpack.c.l.b16 %v309
  %v415 = vunpack.c.l.b16 %v310
  %v416 = vunpack.c.l.b16 %v311
  %v417 = vunpack.c.l.b16 %v312
  %v418 = vunpack.c.l.b16 %v313
  %v419 = vunpack.c.l.b16 %v314
  %v420 = vunpack.c.l.b16 %v315
  %v421 = vunpack.c.l.b16 %v316
  %v422 = vunpack.c.l.b16 %v317
  %v423 = vunpack.c.l.b16 %v318
  %v424 = vunpack.c.l.b16 %v319
  %v425 = vunpack.c.l.b16 %v320
  %v426 = vpack.c.b16 %v395, %v394
  %v427 = vpack.c.b16 %v397, %v396
  %v428 = vpack.c.b16 %v399, %v398
  %v429 = vpack.c.b16 %v401, %v400
  %v430 = vpack.c.b16 %v403, %v402
  %v431 = vpack.c.b16 %v405, %v404
  %v432 = vpack.c.b16 %v407, %v406
  %v433 = vpack.c.b16 %v409, %v408
  %v434 = vpack.c.b16 %v411, %v410
  %v435 = vpack.c.b16 %v413, %v412
  %v436 = vpack.c.b16 %v415, %v414
  %v437 = vpack.c.b16 %v417, %v416
  %v438 = vpack.c.b16 %v419, %v418
  %v439 = vpack.c.b16 %v421, %v420
  %v440 = vpack.c.b16 %v423, %v422
  %v441 = vpack.c.b16 %v425, %v424
  %458 = vmatpush.bf16.msra.mxu0 %v433
  %459 = vmatpush.bf16.msra.mxu0 %v432
  %460 = vmatpush.bf16.msra.mxu0 %v431
  %461 = vmatpush.bf16.msra.mxu0 %v430
  %462 = vmatpush.bf16.msra.mxu0 %v429
  %463 = vmatpush.bf16.msra.mxu0 %v428
  %464 = vmatpush.bf16.msra.mxu0 %v427
  %465 = vmatpush.bf16.msra.mxu0 %v426
  %466 = vmatmul.bf16.gmra.mxu0 %v346
  %v467 = vpop.f32.mrf.mxu0
  %v468 = vadd.f32 %v323, %v467
  %v469 = vpop.f32.mrf.mxu0
  %v470 = vadd.f32 %v323, %v469
  %471 = vmatmul.bf16.gmra.mxu0 %v348
  %v472 = vpop.f32.mrf.mxu0
  %v473 = vadd.f32 %v323, %v472
  %v474 = vpop.f32.mrf.mxu0
  %v475 = vadd.f32 %v323, %v474
  %476 = vmatmul.bf16.gmra.mxu0 %v350
  %v477 = vpop.f32.mrf.mxu0
  %v478 = vadd.f32 %v323, %v477
  %v479 = vpop.f32.mrf.mxu0
  %v480 = vadd.f32 %v323, %v479
  %481 = vmatmul.bf16.gmra.mxu0 %v352
  %v482 = vpop.f32.mrf.mxu0
  %v483 = vadd.f32 %v323, %v482
  %v484 = vpop.f32.mrf.mxu0
  %485 = vdwg.mxu0
  %486 = vmatpush.bf16.msra.mxu0 %v441
  %487 = vmatpush.bf16.msra.mxu0 %v440
  %488 = vmatpush.bf16.msra.mxu0 %v439
  %489 = vmatpush.bf16.msra.mxu0 %v438
  %490 = vmatpush.bf16.msra.mxu0 %v437
  %491 = vmatpush.bf16.msra.mxu0 %v436
  %492 = vmatpush.bf16.msra.mxu0 %v435
  %493 = vmatpush.bf16.msra.mxu0 %v434
  %494 = vmatmul.bf16.gmra.mxu0 %v347
  %v495 = vpop.f32.mrf.mxu0
  %v496 = vadd.f32 %v468, %v495
  %v497 = vpop.f32.mrf.mxu0
  %v498 = vadd.f32 %v470, %v497
  %499 = vmatmul.bf16.gmra.mxu0 %v349
  %v500 = vpop.f32.mrf.mxu0
  %v501 = vadd.f32 %v473, %v500
  %v502 = vpop.f32.mrf.mxu0
  %v503 = vadd.f32 %v475, %v502
  %504 = vmatmul.bf16.gmra.mxu0 %v351
  %v505 = vpop.f32.mrf.mxu0
  %v506 = vadd.f32 %v478, %v505
  %v507 = vpop.f32.mrf.mxu0
  %v508 = vadd.f32 %v480, %v507
  %509 = vmatmul.bf16.gmra.mxu0 %v353
  %v510 = vpop.f32.mrf.mxu0
  %v511 = vadd.f32 %v483, %v510
  %v512 = vpop.f32.mrf.mxu0
  %513 = vdwg.mxu0
  %s514 = scalar_lea.vmem [#allocation2], 56
  %515 = vst.msk [vmem:[%s514] sm:$0xff] %vm252, %v496
  %516 = vst.msk [vmem:[%s514 + $0x8] sm:$0xff] %vm252, %v498
  %517 = vst.msk [vmem:[%s514 + $0x10] sm:$0xff] %vm252, %v501
  %518 = vst.msk [vmem:[%s514 + $0x18] sm:$0xff] %vm252, %v503
  %519 = vst.msk [vmem:[%s514 + $0x20] sm:$0xff] %vm252, %v506
  %520 = vst.msk [vmem:[%s514 + $0x28] sm:$0xff] %vm252, %v508
  %521 = vst.msk [vmem:[%s514 + $0x30] sm:$0x3] %vm259, %v511
  %v522 = vsel %vm252, %v496, 0.0
  %v523 = vsel %vm252, %v498, 0.0
  %v524 = vadd.f32 %v522, %v523
  %v525 = vsel %vm252, %v501, 0.0
  %v526 = vadd.f32 %v524, %v525
  %v527 = vsel %vm252, %v503, 0.0
  %v528 = vadd.f32 %v526, %v527
  %v529 = vsel %vm252, %v506, 0.0
  %v530 = vadd.f32 %v528, %v529
  %v531 = vsel %vm252, %v508, 0.0
  %v532 = vadd.f32 %v530, %v531
  %v533 = vsel %vm259, %v511, 0.0
  %v534 = vadd.f32 %v532, %v533
  %v535 = vrot.slane %v534, 4
  %v536 = vadd.f32 %v534, %v535
  %v537 = vrot.slane %v536, 2
  %v538 = vadd.f32 %v536, %v537
  %v539 = vrot.slane %v538, 1
  %v540 = vadd.f32 %v538, %v539
  %v541 = vadd.f32 %v280, %v540
  %s542 = scalar_lea.vmem %s0, 112
  %v543 = vld [vmem:[%s542] sm:$0xff]
  %v544 = vld [vmem:[%s542 + $0x8] sm:$0xff]
  %v545 = vld [vmem:[%s542 + $0x10] sm:$0xff]
  %v546 = vld [vmem:[%s542 + $0x18] sm:$0xff]
  %v547 = vld [vmem:[%s542 + $0x20] sm:$0xff]
  %v548 = vld [vmem:[%s542 + $0x28] sm:$0xff]
  %v549 = vld [vmem:[%s542 + $0x30] sm:$0x11]
  %v550 = vld [vmem:[%s1] sm:$0xf]
  %v551 = vld [vmem:[%s1 + $0x4] sm:$0xf]
  %v552 = vld [vmem:[%s1 + $0x8] sm:$0xf]
  %v553 = vld [vmem:[%s1 + $0xc] sm:$0xf]
  %v554 = vld [vmem:[%s1 + $0x10] sm:$0xf]
  %v555 = vld [vmem:[%s1 + $0x14] sm:$0xf]
  %v556 = vld [vmem:[%s1 + $0x18] sm:$0xf]
  %v557 = vld [vmem:[%s1 + $0x1c] sm:$0xf]
  %v558 = vld [vmem:[%s1 + $0x20] sm:$0xf]
  %v559 = vld [vmem:[%s1 + $0x24] sm:$0xf]
  %v560 = vld [vmem:[%s1 + $0x28] sm:$0xf]
  %v561 = vld [vmem:[%s1 + $0x2c] sm:$0xf]
  %v562 = vld [vmem:[%s1 + $0x30] sm:$0xf]
  %v563 = vld [vmem:[%s1 + $0x34] sm:$0xf]
  %v564 = vld [vmem:[%s1 + $0x38] sm:$0xf]
  %v565 = vld [vmem:[%s1 + $0x3c] sm:$0xf]
  %v566 = vld [vmem:[%s1 + $0x40] sm:$0xf]
  %v567 = vld [vmem:[%s1 + $0x44] sm:$0xf]
  %v568 = vld [vmem:[%s1 + $0x48] sm:$0xf]
  %v569 = vld [vmem:[%s1 + $0x4c] sm:$0xf]
  %v570 = vld [vmem:[%s1 + $0x50] sm:$0xf]
  %v571 = vld [vmem:[%s1 + $0x54] sm:$0xf]
  %v572 = vld [vmem:[%s1 + $0x58] sm:$0xf]
  %v573 = vld [vmem:[%s1 + $0x5c] sm:$0xf]
  %v574 = vld [vmem:[%s1 + $0x60] sm:$0xf]
  %v575 = vld [vmem:[%s1 + $0x64] sm:$0xf]
  %v576 = vld [vmem:[%s1 + $0x68] sm:$0xf]
  %v577 = vld [vmem:[%s1 + $0x6c] sm:$0xf]
  %v578 = vld [vmem:[%s1 + $0x70] sm:$0xf]
  %v579 = vld [vmem:[%s1 + $0x74] sm:$0xf]
  %v580 = vld [vmem:[%s1 + $0x78] sm:$0xf]
  %v581 = vld [vmem:[%s1 + $0x7c] sm:$0xf]
  %v582 = vld [vmem:[%s2] sm:$0x1]
  %v584 = vperm.slane %v582, 0
  %v593 = vunpack.c.l.b16 %v543
  %v594 = vunpack.c.h.b16 %v543
  %v595 = vunpack.c.l.b16 %v544
  %v596 = vunpack.c.h.b16 %v544
  %v597 = vunpack.c.l.b16 %v545
  %v598 = vunpack.c.h.b16 %v545
  %v599 = vunpack.c.l.b16 %v546
  %v600 = vunpack.c.h.b16 %v546
  %v601 = vunpack.c.l.b16 %v547
  %v602 = vunpack.c.h.b16 %v547
  %v603 = vunpack.c.l.b16 %v548
  %v604 = vunpack.c.h.b16 %v548
  %v605 = vunpack.c.l.b16 %v549
  %v606 = vunpack.c.h.b16 %v549
  %v607 = vpack.c.b16 %v595, %v593
  %v608 = vpack.c.b16 %v596, %v594
  %v609 = vpack.c.b16 %v599, %v597
  %v610 = vpack.c.b16 %v600, %v598
  %v611 = vpack.c.b16 %v603, %v601
  %v612 = vpack.c.b16 %v604, %v602
  %v613 = vpack.c.b16 %v605, %v605
  %v614 = vpack.c.b16 %v606, %v606
  %v655 = vunpack.c.l.b16 %v550
  %v656 = vunpack.c.l.b16 %v551
  %v657 = vunpack.c.l.b16 %v552
  %v658 = vunpack.c.l.b16 %v553
  %v659 = vunpack.c.l.b16 %v554
  %v660 = vunpack.c.l.b16 %v555
  %v661 = vunpack.c.l.b16 %v556
  %v662 = vunpack.c.l.b16 %v557
  %v663 = vunpack.c.l.b16 %v558
  %v664 = vunpack.c.l.b16 %v559
  %v665 = vunpack.c.l.b16 %v560
  %v666 = vunpack.c.l.b16 %v561
  %v667 = vunpack.c.l.b16 %v562
  %v668 = vunpack.c.l.b16 %v563
  %v669 = vunpack.c.l.b16 %v564
  %v670 = vunpack.c.l.b16 %v565
  %v671 = vunpack.c.l.b16 %v566
  %v672 = vunpack.c.l.b16 %v567
  %v673 = vunpack.c.l.b16 %v568
  %v674 = vunpack.c.l.b16 %v569
  %v675 = vunpack.c.l.b16 %v570
  %v676 = vunpack.c.l.b16 %v571
  %v677 = vunpack.c.l.b16 %v572
  %v678 = vunpack.c.l.b16 %v573
  %v679 = vunpack.c.l.b16 %v574
  %v680 = vunpack.c.l.b16 %v575
  %v681 = vunpack.c.l.b16 %v576
  %v682 = vunpack.c.l.b16 %v577
  %v683 = vunpack.c.l.b16 %v578
  %v684 = vunpack.c.l.b16 %v579
  %v685 = vunpack.c.l.b16 %v580
  %v686 = vunpack.c.l.b16 %v581
  %v687 = vpack.c.b16 %v656, %v655
  %v688 = vpack.c.b16 %v658, %v657
  %v689 = vpack.c.b16 %v660, %v659
  %v690 = vpack.c.b16 %v662, %v661
  %v691 = vpack.c.b16 %v664, %v663
  %v692 = vpack.c.b16 %v666, %v665
  %v693 = vpack.c.b16 %v668, %v667
  %v694 = vpack.c.b16 %v670, %v669
  %v695 = vpack.c.b16 %v672, %v671
  %v696 = vpack.c.b16 %v674, %v673
  %v697 = vpack.c.b16 %v676, %v675
  %v698 = vpack.c.b16 %v678, %v677
  %v699 = vpack.c.b16 %v680, %v679
  %v700 = vpack.c.b16 %v682, %v681
  %v701 = vpack.c.b16 %v684, %v683
  %v702 = vpack.c.b16 %v686, %v685
  %719 = vmatpush.bf16.msra.mxu0 %v694
  %720 = vmatpush.bf16.msra.mxu0 %v693
  %721 = vmatpush.bf16.msra.mxu0 %v692
  %722 = vmatpush.bf16.msra.mxu0 %v691
  %723 = vmatpush.bf16.msra.mxu0 %v690
  %724 = vmatpush.bf16.msra.mxu0 %v689
  %725 = vmatpush.bf16.msra.mxu0 %v688
  %726 = vmatpush.bf16.msra.mxu0 %v687
  %727 = vmatmul.bf16.gmra.mxu0 %v607
  %v728 = vpop.f32.mrf.mxu0
  %v729 = vadd.f32 %v584, %v728
  %v730 = vpop.f32.mrf.mxu0
  %v731 = vadd.f32 %v584, %v730
  %732 = vmatmul.bf16.gmra.mxu0 %v609
  %v733 = vpop.f32.mrf.mxu0
  %v734 = vadd.f32 %v584, %v733
  %v735 = vpop.f32.mrf.mxu0
  %v736 = vadd.f32 %v584, %v735
  %737 = vmatmul.bf16.gmra.mxu0 %v611
  %v738 = vpop.f32.mrf.mxu0
  %v739 = vadd.f32 %v584, %v738
  %v740 = vpop.f32.mrf.mxu0
  %v741 = vadd.f32 %v584, %v740
  %742 = vmatmul.bf16.gmra.mxu0 %v613
  %v743 = vpop.f32.mrf.mxu0
  %v744 = vadd.f32 %v584, %v743
  %v745 = vpop.f32.mrf.mxu0
  %746 = vdwg.mxu0
  %747 = vmatpush.bf16.msra.mxu0 %v702
  %748 = vmatpush.bf16.msra.mxu0 %v701
  %749 = vmatpush.bf16.msra.mxu0 %v700
  %750 = vmatpush.bf16.msra.mxu0 %v699
  %751 = vmatpush.bf16.msra.mxu0 %v698
  %752 = vmatpush.bf16.msra.mxu0 %v697
  %753 = vmatpush.bf16.msra.mxu0 %v696
  %754 = vmatpush.bf16.msra.mxu0 %v695
  %755 = vmatmul.bf16.gmra.mxu0 %v608
  %v756 = vpop.f32.mrf.mxu0
  %v757 = vadd.f32 %v729, %v756
  %v758 = vpop.f32.mrf.mxu0
  %v759 = vadd.f32 %v731, %v758
  %760 = vmatmul.bf16.gmra.mxu0 %v610
  %v761 = vpop.f32.mrf.mxu0
  %v762 = vadd.f32 %v734, %v761
  %v763 = vpop.f32.mrf.mxu0
  %v764 = vadd.f32 %v736, %v763
  %765 = vmatmul.bf16.gmra.mxu0 %v612
  %v766 = vpop.f32.mrf.mxu0
  %v767 = vadd.f32 %v739, %v766
  %v768 = vpop.f32.mrf.mxu0
  %v769 = vadd.f32 %v741, %v768
  %770 = vmatmul.bf16.gmra.mxu0 %v614
  %v771 = vpop.f32.mrf.mxu0
  %v772 = vadd.f32 %v744, %v771
  %v773 = vpop.f32.mrf.mxu0
  %774 = vdwg.mxu0
  %s775 = scalar_lea.vmem [#allocation2], 112
  %776 = vst.msk [vmem:[%s775] sm:$0xff] %vm252, %v757
  %777 = vst.msk [vmem:[%s775 + $0x8] sm:$0xff] %vm252, %v759
  %778 = vst.msk [vmem:[%s775 + $0x10] sm:$0xff] %vm252, %v762
  %779 = vst.msk [vmem:[%s775 + $0x18] sm:$0xff] %vm252, %v764
  %780 = vst.msk [vmem:[%s775 + $0x20] sm:$0xff] %vm252, %v767
  %781 = vst.msk [vmem:[%s775 + $0x28] sm:$0xff] %vm252, %v769
  %782 = vst.msk [vmem:[%s775 + $0x30] sm:$0x3] %vm259, %v772
  %v783 = vsel %vm252, %v757, 0.0
  %v784 = vsel %vm252, %v759, 0.0
  %v785 = vadd.f32 %v783, %v784
  %v786 = vsel %vm252, %v762, 0.0
  %v787 = vadd.f32 %v785, %v786
  %v788 = vsel %vm252, %v764, 0.0
  %v789 = vadd.f32 %v787, %v788
  %v790 = vsel %vm252, %v767, 0.0
  %v791 = vadd.f32 %v789, %v790
  %v792 = vsel %vm252, %v769, 0.0
  %v793 = vadd.f32 %v791, %v792
  %v794 = vsel %vm259, %v772, 0.0
  %v795 = vadd.f32 %v793, %v794
  %v796 = vrot.slane %v795, 4
  %v797 = vadd.f32 %v795, %v796
  %v798 = vrot.slane %v797, 2
  %v799 = vadd.f32 %v797, %v798
  %v800 = vrot.slane %v799, 1
  %v801 = vadd.f32 %v799, %v800
  %v802 = vadd.f32 %v541, %v801
  %s803 = scalar_lea.vmem %s0, 168
  %v804 = vld [vmem:[%s803] sm:$0xff]
  %v805 = vld [vmem:[%s803 + $0x8] sm:$0xff]
  %v806 = vld [vmem:[%s803 + $0x10] sm:$0xff]
  %v807 = vld [vmem:[%s803 + $0x18] sm:$0xff]
  %v808 = vld [vmem:[%s803 + $0x20] sm:$0xff]
  %v809 = vld [vmem:[%s803 + $0x28] sm:$0xff]
  %v810 = vld [vmem:[%s803 + $0x30] sm:$0x11]
  %v811 = vld [vmem:[%s1] sm:$0xf]
  %v812 = vld [vmem:[%s1 + $0x4] sm:$0xf]
  %v813 = vld [vmem:[%s1 + $0x8] sm:$0xf]
  %v814 = vld [vmem:[%s1 + $0xc] sm:$0xf]
  %v815 = vld [vmem:[%s1 + $0x10] sm:$0xf]
  %v816 = vld [vmem:[%s1 + $0x14] sm:$0xf]
  %v817 = vld [vmem:[%s1 + $0x18] sm:$0xf]
  %v818 = vld [vmem:[%s1 + $0x1c] sm:$0xf]
  %v819 = vld [vmem:[%s1 + $0x20] sm:$0xf]
  %v820 = vld [vmem:[%s1 + $0x24] sm:$0xf]
  %v821 = vld [vmem:[%s1 + $0x28] sm:$0xf]
  %v822 = vld [vmem:[%s1 + $0x2c] sm:$0xf]
  %v823 = vld [vmem:[%s1 + $0x30] sm:$0xf]
  %v824 = vld [vmem:[%s1 + $0x34] sm:$0xf]
  %v825 = vld [vmem:[%s1 + $0x38] sm:$0xf]
  %v826 = vld [vmem:[%s1 + $0x3c] sm:$0xf]
  %v827 = vld [vmem:[%s1 + $0x40] sm:$0xf]
  %v828 = vld [vmem:[%s1 + $0x44] sm:$0xf]
  %v829 = vld [vmem:[%s1 + $0x48] sm:$0xf]
  %v830 = vld [vmem:[%s1 + $0x4c] sm:$0xf]
  %v831 = vld [vmem:[%s1 + $0x50] sm:$0xf]
  %v832 = vld [vmem:[%s1 + $0x54] sm:$0xf]
  %v833 = vld [vmem:[%s1 + $0x58] sm:$0xf]
  %v834 = vld [vmem:[%s1 + $0x5c] sm:$0xf]
  %v835 = vld [vmem:[%s1 + $0x60] sm:$0xf]
  %v836 = vld [vmem:[%s1 + $0x64] sm:$0xf]
  %v837 = vld [vmem:[%s1 + $0x68] sm:$0xf]
  %v838 = vld [vmem:[%s1 + $0x6c] sm:$0xf]
  %v839 = vld [vmem:[%s1 + $0x70] sm:$0xf]
  %v840 = vld [vmem:[%s1 + $0x74] sm:$0xf]
  %v841 = vld [vmem:[%s1 + $0x78] sm:$0xf]
  %v842 = vld [vmem:[%s1 + $0x7c] sm:$0xf]
  %v843 = vld [vmem:[%s2] sm:$0x1]
  %v845 = vperm.slane %v843, 0
  %v854 = vunpack.c.l.b16 %v804
  %v855 = vunpack.c.h.b16 %v804
  %v856 = vunpack.c.l.b16 %v805
  %v857 = vunpack.c.h.b16 %v805
  %v858 = vunpack.c.l.b16 %v806
  %v859 = vunpack.c.h.b16 %v806
  %v860 = vunpack.c.l.b16 %v807
  %v861 = vunpack.c.h.b16 %v807
  %v862 = vunpack.c.l.b16 %v808
  %v863 = vunpack.c.h.b16 %v808
  %v864 = vunpack.c.l.b16 %v809
  %v865 = vunpack.c.h.b16 %v809
  %v866 = vunpack.c.l.b16 %v810
  %v867 = vunpack.c.h.b16 %v810
  %v868 = vpack.c.b16 %v856, %v854
  %v869 = vpack.c.b16 %v857, %v855
  %v870 = vpack.c.b16 %v860, %v858
  %v871 = vpack.c.b16 %v861, %v859
  %v872 = vpack.c.b16 %v864, %v862
  %v873 = vpack.c.b16 %v865, %v863
  %v874 = vpack.c.b16 %v866, %v866
  %v875 = vpack.c.b16 %v867, %v867
  %v916 = vunpack.c.l.b16 %v811
  %v917 = vunpack.c.l.b16 %v812
  %v918 = vunpack.c.l.b16 %v813
  %v919 = vunpack.c.l.b16 %v814
  %v920 = vunpack.c.l.b16 %v815
  %v921 = vunpack.c.l.b16 %v816
  %v922 = vunpack.c.l.b16 %v817
  %v923 = vunpack.c.l.b16 %v818
  %v924 = vunpack.c.l.b16 %v819
  %v925 = vunpack.c.l.b16 %v820
  %v926 = vunpack.c.l.b16 %v821
  %v927 = vunpack.c.l.b16 %v822
  %v928 = vunpack.c.l.b16 %v823
  %v929 = vunpack.c.l.b16 %v824
  %v930 = vunpack.c.l.b16 %v825
  %v931 = vunpack.c.l.b16 %v826
  %v932 = vunpack.c.l.b16 %v827
  %v933 = vunpack.c.l.b16 %v828
  %v934 = vunpack.c.l.b16 %v829
  %v935 = vunpack.c.l.b16 %v830
  %v936 = vunpack.c.l.b16 %v831
  %v937 = vunpack.c.l.b16 %v832
  %v938 = vunpack.c.l.b16 %v833
  %v939 = vunpack.c.l.b16 %v834
  %v940 = vunpack.c.l.b16 %v835
  %v941 = vunpack.c.l.b16 %v836
  %v942 = vunpack.c.l.b16 %v837
  %v943 = vunpack.c.l.b16 %v838
  %v944 = vunpack.c.l.b16 %v839
  %v945 = vunpack.c.l.b16 %v840
  %v946 = vunpack.c.l.b16 %v841
  %v947 = vunpack.c.l.b16 %v842
  %v948 = vpack.c.b16 %v917, %v916
  %v949 = vpack.c.b16 %v919, %v918
  %v950 = vpack.c.b16 %v921, %v920
  %v951 = vpack.c.b16 %v923, %v922
  %v952 = vpack.c.b16 %v925, %v924
  %v953 = vpack.c.b16 %v927, %v926
  %v954 = vpack.c.b16 %v929, %v928
  %v955 = vpack.c.b16 %v931, %v930
  %v956 = vpack.c.b16 %v933, %v932
  %v957 = vpack.c.b16 %v935, %v934
  %v958 = vpack.c.b16 %v937, %v936
  %v959 = vpack.c.b16 %v939, %v938
  %v960 = vpack.c.b16 %v941, %v940
  %v961 = vpack.c.b16 %v943, %v942
  %v962 = vpack.c.b16 %v945, %v944
  %v963 = vpack.c.b16 %v947, %v946
  %980 = vmatpush.bf16.msra.mxu0 %v955
  %981 = vmatpush.bf16.msra.mxu0 %v954
  %982 = vmatpush.bf16.msra.mxu0 %v953
  %983 = vmatpush.bf16.msra.mxu0 %v952
  %984 = vmatpush.bf16.msra.mxu0 %v951
  %985 = vmatpush.bf16.msra.mxu0 %v950
  %986 = vmatpush.bf16.msra.mxu0 %v949
  %987 = vmatpush.bf16.msra.mxu0 %v948
  %988 = vmatmul.bf16.gmra.mxu0 %v868
  %v989 = vpop.f32.mrf.mxu0
  %v990 = vadd.f32 %v845, %v989
  %v991 = vpop.f32.mrf.mxu0
  %v992 = vadd.f32 %v845, %v991
  %993 = vmatmul.bf16.gmra.mxu0 %v870
  %v994 = vpop.f32.mrf.mxu0
  %v995 = vadd.f32 %v845, %v994
  %v996 = vpop.f32.mrf.mxu0
  %v997 = vadd.f32 %v845, %v996
  %998 = vmatmul.bf16.gmra.mxu0 %v872
  %v999 = vpop.f32.mrf.mxu0
  %v1000 = vadd.f32 %v845, %v999
  %v1001 = vpop.f32.mrf.mxu0
  %v1002 = vadd.f32 %v845, %v1001
  %1003 = vmatmul.bf16.gmra.mxu0 %v874
  %v1004 = vpop.f32.mrf.mxu0
  %v1005 = vadd.f32 %v845, %v1004
  %v1006 = vpop.f32.mrf.mxu0
  %1007 = vdwg.mxu0
  %1008 = vmatpush.bf16.msra.mxu0 %v963
  %1009 = vmatpush.bf16.msra.mxu0 %v962
  %1010 = vmatpush.bf16.msra.mxu0 %v961
  %1011 = vmatpush.bf16.msra.mxu0 %v960
  %1012 = vmatpush.bf16.msra.mxu0 %v959
  %1013 = vmatpush.bf16.msra.mxu0 %v958
  %1014 = vmatpush.bf16.msra.mxu0 %v957
  %1015 = vmatpush.bf16.msra.mxu0 %v956
  %1016 = vmatmul.bf16.gmra.mxu0 %v869
  %v1017 = vpop.f32.mrf.mxu0
  %v1018 = vadd.f32 %v990, %v1017
  %v1019 = vpop.f32.mrf.mxu0
  %v1020 = vadd.f32 %v992, %v1019
  %1021 = vmatmul.bf16.gmra.mxu0 %v871
  %v1022 = vpop.f32.mrf.mxu0
  %v1023 = vadd.f32 %v995, %v1022
  %v1024 = vpop.f32.mrf.mxu0
  %v1025 = vadd.f32 %v997, %v1024
  %1026 = vmatmul.bf16.gmra.mxu0 %v873
  %v1027 = vpop.f32.mrf.mxu0
  %v1028 = vadd.f32 %v1000, %v1027
  %v1029 = vpop.f32.mrf.mxu0
  %v1030 = vadd.f32 %v1002, %v1029
  %1031 = vmatmul.bf16.gmra.mxu0 %v875
  %v1032 = vpop.f32.mrf.mxu0
  %v1033 = vadd.f32 %v1005, %v1032
  %v1034 = vpop.f32.mrf.mxu0
  %1035 = vdwg.mxu0
  %s1036 = scalar_lea.vmem [#allocation2], 168
  %1037 = vst.msk [vmem:[%s1036] sm:$0xff] %vm252, %v1018
  %1038 = vst.msk [vmem:[%s1036 + $0x8] sm:$0xff] %vm252, %v1020
  %1039 = vst.msk [vmem:[%s1036 + $0x10] sm:$0xff] %vm252, %v1023
  %1040 = vst.msk [vmem:[%s1036 + $0x18] sm:$0xff] %vm252, %v1025
  %1041 = vst.msk [vmem:[%s1036 + $0x20] sm:$0xff] %vm252, %v1028
  %1042 = vst.msk [vmem:[%s1036 + $0x28] sm:$0xff] %vm252, %v1030
  %1043 = vst.msk [vmem:[%s1036 + $0x30] sm:$0x3] %vm259, %v1033
  %v1044 = vsel %vm252, %v1018, 0.0
  %v1045 = vsel %vm252, %v1020, 0.0
  %v1046 = vadd.f32 %v1044, %v1045
  %v1047 = vsel %vm252, %v1023, 0.0
  %v1048 = vadd.f32 %v1046, %v1047
  %v1049 = vsel %vm252, %v1025, 0.0
  %v1050 = vadd.f32 %v1048, %v1049
  %v1051 = vsel %vm252, %v1028, 0.0
  %v1052 = vadd.f32 %v1050, %v1051
  %v1053 = vsel %vm252, %v1030, 0.0
  %v1054 = vadd.f32 %v1052, %v1053
  %v1055 = vsel %vm259, %v1033, 0.0
  %v1056 = vadd.f32 %v1054, %v1055
  %v1057 = vrot.slane %v1056, 4
  %v1058 = vadd.f32 %v1056, %v1057
  %v1059 = vrot.slane %v1058, 2
  %v1060 = vadd.f32 %v1058, %v1059
  %v1061 = vrot.slane %v1060, 1
  %v1062 = vadd.f32 %v1060, %v1061
  %v1063 = vadd.f32 %v802, %v1062
  %v1064 = vmul.f32 %v1063, 0.005
  %v1065 = vld [vmem:[#allocation2] sm:$0xff]
  %v1066 = vld [vmem:[#allocation2 + $0x8] sm:$0xff]
  %v1067 = vld [vmem:[#allocation2 + $0x10] sm:$0xff]
  %v1068 = vld [vmem:[#allocation2 + $0x18] sm:$0xff]
  %v1069 = vld [vmem:[#allocation2 + $0x20] sm:$0xff]
  %v1070 = vld [vmem:[#allocation2 + $0x28] sm:$0xff]
  %v1071 = vld [vmem:[#allocation2 + $0x30] sm:$0x3]
  %v1072 = vsub.f32 %v1065, %v1064
  %v1073 = vsub.f32 %v1066, %v1064
  %v1074 = vsub.f32 %v1067, %v1064
  %v1075 = vsub.f32 %v1068, %v1064
  %v1076 = vsub.f32 %v1069, %v1064
  %v1077 = vsub.f32 %v1070, %v1064
  %v1078 = vsub.f32 %v1071, %v1064
  %v1079 = vmul.f32 %v1072, %v1072
  %v1080 = vmul.f32 %v1073, %v1073
  %v1081 = vmul.f32 %v1074, %v1074
  %v1082 = vmul.f32 %v1075, %v1075
  %v1083 = vmul.f32 %v1076, %v1076
  %v1084 = vmul.f32 %v1077, %v1077
  %v1085 = vmul.f32 %v1078, %v1078
  %v1086 = vsel %vm252, %v1079, 0.0
  %v1087 = vsel %vm252, %v1080, 0.0
  %v1088 = vadd.f32 %v1086, %v1087
  %v1089 = vsel %vm252, %v1081, 0.0
  %v1090 = vadd.f32 %v1088, %v1089
  %v1091 = vsel %vm252, %v1082, 0.0
  %v1092 = vadd.f32 %v1090, %v1091
  %v1093 = vsel %vm252, %v1083, 0.0
  %v1094 = vadd.f32 %v1092, %v1093
  %v1095 = vsel %vm252, %v1084, 0.0
  %v1096 = vadd.f32 %v1094, %v1095
  %v1097 = vsel %vm259, %v1085, 0.0
  %v1098 = vadd.f32 %v1096, %v1097
  %v1099 = vrot.slane %v1098, 4
  %v1100 = vadd.f32 %v1098, %v1099
  %v1101 = vrot.slane %v1100, 2
  %v1102 = vadd.f32 %v1100, %v1101
  %v1103 = vrot.slane %v1102, 1
  %v1104 = vadd.f32 %v1102, %v1103
  %v1105 = vadd.f32 %v1104, 0.0
  %v1106 = vld [vmem:[%s514] sm:$0xff]
  %v1107 = vld [vmem:[%s514 + $0x8] sm:$0xff]
  %v1108 = vld [vmem:[%s514 + $0x10] sm:$0xff]
  %v1109 = vld [vmem:[%s514 + $0x18] sm:$0xff]
  %v1110 = vld [vmem:[%s514 + $0x20] sm:$0xff]
  %v1111 = vld [vmem:[%s514 + $0x28] sm:$0xff]
  %v1112 = vld [vmem:[%s514 + $0x30] sm:$0x3]
  %v1113 = vsub.f32 %v1106, %v1064
  %v1114 = vsub.f32 %v1107, %v1064
  %v1115 = vsub.f32 %v1108, %v1064
  %v1116 = vsub.f32 %v1109, %v1064
  %v1117 = vsub.f32 %v1110, %v1064
  %v1118 = vsub.f32 %v1111, %v1064
  %v1119 = vsub.f32 %v1112, %v1064
  %v1120 = vmul.f32 %v1113, %v1113
  %v1121 = vmul.f32 %v1114, %v1114
  %v1122 = vmul.f32 %v1115, %v1115
  %v1123 = vmul.f32 %v1116, %v1116
  %v1124 = vmul.f32 %v1117, %v1117
  %v1125 = vmul.f32 %v1118, %v1118
  %v1126 = vmul.f32 %v1119, %v1119
  %v1127 = vsel %vm252, %v1120, 0.0
  %v1128 = vsel %vm252, %v1121, 0.0
  %v1129 = vadd.f32 %v1127, %v1128
  %v1130 = vsel %vm252, %v1122, 0.0
  %v1131 = vadd.f32 %v1129, %v1130
  %v1132 = vsel %vm252, %v1123, 0.0
  %v1133 = vadd.f32 %v1131, %v1132
  %v1134 = vsel %vm252, %v1124, 0.0
  %v1135 = vadd.f32 %v1133, %v1134
  %v1136 = vsel %vm252, %v1125, 0.0
  %v1137 = vadd.f32 %v1135, %v1136
  %v1138 = vsel %vm259, %v1126, 0.0
  %v1139 = vadd.f32 %v1137, %v1138
  %v1140 = vrot.slane %v1139, 4
  %v1141 = vadd.f32 %v1139, %v1140
  %v1142 = vrot.slane %v1141, 2
  %v1143 = vadd.f32 %v1141, %v1142
  %v1144 = vrot.slane %v1143, 1
  %v1145 = vadd.f32 %v1143, %v1144
  %v1146 = vadd.f32 %v1105, %v1145
  %v1147 = vld [vmem:[%s775] sm:$0xff]
  %v1148 = vld [vmem:[%s775 + $0x8] sm:$0xff]
  %v1149 = vld [vmem:[%s775 + $0x10] sm:$0xff]
  %v1150 = vld [vmem:[%s775 + $0x18] sm:$0xff]
  %v1151 = vld [vmem:[%s775 + $0x20] sm:$0xff]
  %v1152 = vld [vmem:[%s775 + $0x28] sm:$0xff]
  %v1153 = vld [vmem:[%s775 + $0x30] sm:$0x3]
  %v1154 = vsub.f32 %v1147, %v1064
  %v1155 = vsub.f32 %v1148, %v1064
  %v1156 = vsub.f32 %v1149, %v1064
  %v1157 = vsub.f32 %v1150, %v1064
  %v1158 = vsub.f32 %v1151, %v1064
  %v1159 = vsub.f32 %v1152, %v1064
  %v1160 = vsub.f32 %v1153, %v1064
  %v1161 = vmul.f32 %v1154, %v1154
  %v1162 = vmul.f32 %v1155, %v1155
  %v1163 = vmul.f32 %v1156, %v1156
  %v1164 = vmul.f32 %v1157, %v1157
  %v1165 = vmul.f32 %v1158, %v1158
  %v1166 = vmul.f32 %v1159, %v1159
  %v1167 = vmul.f32 %v1160, %v1160
  %v1168 = vsel %vm252, %v1161, 0.0
  %v1169 = vsel %vm252, %v1162, 0.0
  %v1170 = vadd.f32 %v1168, %v1169
  %v1171 = vsel %vm252, %v1163, 0.0
  %v1172 = vadd.f32 %v1170, %v1171
  %v1173 = vsel %vm252, %v1164, 0.0
  %v1174 = vadd.f32 %v1172, %v1173
  %v1175 = vsel %vm252, %v1165, 0.0
  %v1176 = vadd.f32 %v1174, %v1175
  %v1177 = vsel %vm252, %v1166, 0.0
  %v1178 = vadd.f32 %v1176, %v1177
  %v1179 = vsel %vm259, %v1167, 0.0
  %v1180 = vadd.f32 %v1178, %v1179
  %v1181 = vrot.slane %v1180, 4
  %v1182 = vadd.f32 %v1180, %v1181
  %v1183 = vrot.slane %v1182, 2
  %v1184 = vadd.f32 %v1182, %v1183
  %v1185 = vrot.slane %v1184, 1
  %v1186 = vadd.f32 %v1184, %v1185
  %v1187 = vadd.f32 %v1146, %v1186
  %v1188 = vld [vmem:[%s1036] sm:$0xff]
  %v1189 = vld [vmem:[%s1036 + $0x8] sm:$0xff]
  %v1190 = vld [vmem:[%s1036 + $0x10] sm:$0xff]
  %v1191 = vld [vmem:[%s1036 + $0x18] sm:$0xff]
  %v1192 = vld [vmem:[%s1036 + $0x20] sm:$0xff]
  %v1193 = vld [vmem:[%s1036 + $0x28] sm:$0xff]
  %v1194 = vld [vmem:[%s1036 + $0x30] sm:$0x3]
  %v1195 = vsub.f32 %v1188, %v1064
  %v1196 = vsub.f32 %v1189, %v1064
  %v1197 = vsub.f32 %v1190, %v1064
  %v1198 = vsub.f32 %v1191, %v1064
  %v1199 = vsub.f32 %v1192, %v1064
  %v1200 = vsub.f32 %v1193, %v1064
  %v1201 = vsub.f32 %v1194, %v1064
  %v1202 = vmul.f32 %v1195, %v1195
  %v1203 = vmul.f32 %v1196, %v1196
  %v1204 = vmul.f32 %v1197, %v1197
  %v1205 = vmul.f32 %v1198, %v1198
  %v1206 = vmul.f32 %v1199, %v1199
  %v1207 = vmul.f32 %v1200, %v1200
  %v1208 = vmul.f32 %v1201, %v1201
  %v1209 = vsel %vm252, %v1202, 0.0
  %v1210 = vsel %vm252, %v1203, 0.0
  %v1211 = vadd.f32 %v1209, %v1210
  %v1212 = vsel %vm252, %v1204, 0.0
  %v1213 = vadd.f32 %v1211, %v1212
  %v1214 = vsel %vm252, %v1205, 0.0
  %v1215 = vadd.f32 %v1213, %v1214
  %v1216 = vsel %vm252, %v1206, 0.0
  %v1217 = vadd.f32 %v1215, %v1216
  %v1218 = vsel %vm252, %v1207, 0.0
  %v1219 = vadd.f32 %v1217, %v1218
  %v1220 = vsel %vm259, %v1208, 0.0
  %v1221 = vadd.f32 %v1219, %v1220
  %v1222 = vrot.slane %v1221, 4
  %v1223 = vadd.f32 %v1221, %v1222
  %v1224 = vrot.slane %v1223, 2
  %v1225 = vadd.f32 %v1223, %v1224
  %v1226 = vrot.slane %v1225, 1
  %v1227 = vadd.f32 %v1225, %v1226
  %v1228 = vadd.f32 %v1187, %v1227
  %v1229 = vmul.f32 %v1228, 0.005
  %v1230 = vld [vmem:[%s3] sm:$0x1]
  %v1231 = vadd.f32 %v1229, 1e-05
  %v1232 = vrsqrt.pop %v1231
  %v1233 = vmul.f32 %v1232, %v1231
  %v1234 = vmul.f32 %v1233, %v1232
  %v1235 = vmul.f32 0.5, %v1234
  %v1236 = vsub.f32 1.5, %v1235
  %v1237 = vmul.f32 %v1232, %v1236
  %vm1238 = vweird.f32 %v1231
  %vm1239 = vweird.f32 %v1232
  %vm1240 = vmor %vm1238, %vm1239
  %v1241 = vsel %vm1240, %v1232, %v1237
  %v1242 = vmul.f32 %v1230, %v1241
  %v1243 = vld [vmem:[%s4] sm:$0x1]
  %v1244 = vmul.f32 %v1064, %v1242
  %v1245 = vsub.f32 %v1243, %v1244
  %v1247 = vperm.slane %v1242, 0
  %v1249 = vmul.f32 %v1065, %v1247
  %v1250 = vmul.f32 %v1066, %v1247
  %v1251 = vmul.f32 %v1067, %v1247
  %v1252 = vmul.f32 %v1068, %v1247
  %v1253 = vmul.f32 %v1069, %v1247
  %v1254 = vmul.f32 %v1070, %v1247
  %v1255 = vmul.f32 %v1071, %v1247
  %v1257 = vperm.slane %v1245, 0
  %v1259 = vadd.f32 %v1249, %v1257
  %v1260 = vadd.f32 %v1250, %v1257
  %v1261 = vadd.f32 %v1251, %v1257
  %v1262 = vadd.f32 %v1252, %v1257
  %v1263 = vadd.f32 %v1253, %v1257
  %v1264 = vadd.f32 %v1254, %v1257
  %v1265 = vadd.f32 %v1255, %v1257
  %v1266 = vmax.f32 %v1259, 0.0
  %v1267 = vmax.f32 %v1260, 0.0
  %v1268 = vmax.f32 %v1261, 0.0
  %v1269 = vmax.f32 %v1262, 0.0
  %v1270 = vmax.f32 %v1263, 0.0
  %v1271 = vmax.f32 %v1264, 0.0
  %v1272 = vmax.f32 %v1265, 0.0
  %v1273 = vmul.f32 %v1106, %v1247
  %v1274 = vmul.f32 %v1107, %v1247
  %v1275 = vmul.f32 %v1108, %v1247
  %v1276 = vmul.f32 %v1109, %v1247
  %v1277 = vmul.f32 %v1110, %v1247
  %v1278 = vmul.f32 %v1111, %v1247
  %v1279 = vmul.f32 %v1112, %v1247
  %v1280 = vadd.f32 %v1273, %v1257
  %v1281 = vadd.f32 %v1274, %v1257
  %v1282 = vadd.f32 %v1275, %v1257
  %v1283 = vadd.f32 %v1276, %v1257
  %v1284 = vadd.f32 %v1277, %v1257
  %v1285 = vadd.f32 %v1278, %v1257
  %v1286 = vadd.f32 %v1279, %v1257
  %v1287 = vmax.f32 %v1280, 0.0
  %v1288 = vmax.f32 %v1281, 0.0
  %v1289 = vmax.f32 %v1282, 0.0
  %v1290 = vmax.f32 %v1283, 0.0
  %v1291 = vmax.f32 %v1284, 0.0
  %v1292 = vmax.f32 %v1285, 0.0
  %v1293 = vmax.f32 %v1286, 0.0
  %v1294 = vmul.f32 %v1147, %v1247
  %v1295 = vmul.f32 %v1148, %v1247
  %v1296 = vmul.f32 %v1149, %v1247
  %v1297 = vmul.f32 %v1150, %v1247
  %v1298 = vmul.f32 %v1151, %v1247
  %v1299 = vmul.f32 %v1152, %v1247
  %v1300 = vmul.f32 %v1153, %v1247
  %v1301 = vadd.f32 %v1294, %v1257
  %v1302 = vadd.f32 %v1295, %v1257
  %v1303 = vadd.f32 %v1296, %v1257
  %v1304 = vadd.f32 %v1297, %v1257
  %v1305 = vadd.f32 %v1298, %v1257
  %v1306 = vadd.f32 %v1299, %v1257
  %v1307 = vadd.f32 %v1300, %v1257
  %v1308 = vmax.f32 %v1301, 0.0
  %v1309 = vmax.f32 %v1302, 0.0
  %v1310 = vmax.f32 %v1303, 0.0
  %v1311 = vmax.f32 %v1304, 0.0
  %v1312 = vmax.f32 %v1305, 0.0
  %v1313 = vmax.f32 %v1306, 0.0
  %v1314 = vmax.f32 %v1307, 0.0
  %v1315 = vmul.f32 %v1188, %v1247
  %v1316 = vmul.f32 %v1189, %v1247
  %v1317 = vmul.f32 %v1190, %v1247
  %v1318 = vmul.f32 %v1191, %v1247
  %v1319 = vmul.f32 %v1192, %v1247
  %v1320 = vmul.f32 %v1193, %v1247
  %v1321 = vmul.f32 %v1194, %v1247
  %v1322 = vadd.f32 %v1315, %v1257
  %v1323 = vadd.f32 %v1316, %v1257
  %v1324 = vadd.f32 %v1317, %v1257
  %v1325 = vadd.f32 %v1318, %v1257
  %v1326 = vadd.f32 %v1319, %v1257
  %v1327 = vadd.f32 %v1320, %v1257
  %v1328 = vadd.f32 %v1321, %v1257
  %v1329 = vmax.f32 %v1322, 0.0
  %v1330 = vmax.f32 %v1323, 0.0
  %v1331 = vmax.f32 %v1324, 0.0
  %v1332 = vmax.f32 %v1325, 0.0
  %v1333 = vmax.f32 %v1326, 0.0
  %v1334 = vmax.f32 %v1327, 0.0
  %v1335 = vmax.f32 %v1328, 0.0
  %v1336 = vmax.f32 %v1266, %v1287
  %v1337 = vmax.f32 %v1267, %v1288
  %v1338 = vmax.f32 %v1268, %v1289
  %v1339 = vmax.f32 %v1269, %v1290
  %v1340 = vmax.f32 %v1270, %v1291
  %v1341 = vmax.f32 %v1271, %v1292
  %v1342 = vmax.f32 %v1272, %v1293
  %v1343 = vmax.f32 %v1308, %v1329
  %v1344 = vmax.f32 %v1309, %v1330
  %v1345 = vmax.f32 %v1310, %v1331
  %v1346 = vmax.f32 %v1311, %v1332
  %v1347 = vmax.f32 %v1312, %v1333
  %v1348 = vmax.f32 %v1313, %v1334
  %v1349 = vmax.f32 %v1314, %v1335
  %v1350 = vmax.f32 %v1336, %v1343
  %v1351 = vmax.f32 %v1337, %v1344
  %v1352 = vmax.f32 %v1338, %v1345
  %v1353 = vmax.f32 %v1339, %v1346
  %v1354 = vmax.f32 %v1340, %v1347
  %v1355 = vmax.f32 %v1341, %v1348
  %v1356 = vmax.f32 %v1342, %v1349
  %1357 = vst.msk [vmem:[%s5] sm:$0xff] %vm252, %v1350
  %1358 = vst.msk [vmem:[%s5 + $0x8] sm:$0xff] %vm252, %v1351
  %1359 = vst.msk [vmem:[%s5 + $0x10] sm:$0xff] %vm252, %v1352
  %1360 = vst.msk [vmem:[%s5 + $0x18] sm:$0xff] %vm252, %v1353
  %1361 = vst.msk [vmem:[%s5 + $0x20] sm:$0xff] %vm252, %v1354
  %1362 = vst.msk [vmem:[%s5 + $0x28] sm:$0xff] %vm252, %v1355
  %1363 = vst.msk [vmem:[%s5 + $0x30] sm:$0x3] %vm259, %v1356
  // Predicated region
  $region22: #{lenet_forward.4} parent=0 // pred_check
    _
  $region23: #{lenet_forward.4} parent=0 // pred_check_branch
    %1365 = sbr.rel (0) target = $region25
  $region24: #{lenet_forward.4} parent=0 // pred_region
    _
  $region25: #{lenet_forward.4} parent=0 // pred_fallthru
    _
  // Predicated region
  $region26: #{lenet_forward.4} parent=0 // pred_check
    _
  $region27: #{lenet_forward.4} parent=0 // pred_check_branch
    %1367 = sbr.rel (0) target = $region29
  $region28: #{lenet_forward.4} parent=0 // pred_region
    _
  $region29: #{lenet_forward.4} parent=0 // pred_fallthru
    _

// kernel: lenet_forward.5
$region0: #{lenet_forward.5}
  #allocation0 [shape = 'u32[]', space=smem, size = 0x4, offset = 0x4, fixed_abs, tag = 'smem constant byte address 0x4 - core index']
  #allocation1 [shape = 'u32[72,128]{1,0:T(1,128)}', space=vmem, size = 0x9000, scoped, tag = 'internal scratch']
  %s0 = inlined_call_operand.vmem [shape: f32[2,400], index: 0, kind: input, shape index: {}]
  %s1 = inlined_call_operand.vmem [shape: f32[400,120], index: 1, kind: input, shape index: {}]
  %s2 = inlined_call_operand.vmem [shape: f32[1,120], index: 2, kind: input, shape index: {}]
  %s3 = inlined_call_operand.vmem [shape: f32[1,120], index: 3, kind: input, shape index: {}]
  %s4 = inlined_call_operand.vmem [shape: f32[1,120], index: 4, kind: input, shape index: {}]
  %s5 = inlined_call_operand.vmem [shape: f32[120,84], index: 5, kind: input, shape index: {}]
  %s6 = inlined_call_operand.vmem [shape: f32[1,84], index: 6, kind: input, shape index: {}]
  %s7 = inlined_call_operand.vmem [shape: f32[1,84], index: 7, kind: input, shape index: {}]
  %s8 = inlined_call_operand.vmem [shape: f32[1,84], index: 8, kind: input, shape index: {}]
  %s9 = inlined_call_operand.vmem [shape: f32[84,10], index: 9, kind: input, shape index: {}]
  %s10 = inlined_call_operand.vmem [shape: f32[1,10], index: 10, kind: input, shape index: {}]
  %s11 = inlined_call_operand.hbm [shape: f32[2,10], index: 11, kind: output, shape index: {}]
  %s12 = sld [smem:[#allocation0]]
  $region54: #{lenet_forward.5} parent=0
    _
  %s14 = ssub.s32 1, %s12
  %s15 = scalar_select 0, %s14, %s12
  $region1: #{lenet_forward.5} parent=0
    #allocation2 [shape = 'u8[1024]{0}', space=vmem, size = 0x400, scoped, tag = 'output window, operand 0, single buffered']
    #allocation3 [shape = 's32[1]{0}', space=sflag, size = 0x4, scoped, tag = 'scoped memory for lenet_forward.5']
    %16 = vsyncpa [#allocation3], 0
    // Predicated region
    $region2: #{lenet_forward.5} parent=1 // pred_check
      _
    $region3: #{lenet_forward.5} parent=1 // pred_check_branch
      %18 = sbr.rel (0) target = $region5
    $region4: #{lenet_forward.5} parent=1 // pred_region
      _
    $region5: #{lenet_forward.5} parent=1 // pred_fallthru
      _
    // Predicated region
    $region6: #{lenet_forward.5} parent=1 // pred_check
      _
    $region7: #{lenet_forward.5} parent=1 // pred_check_branch
      %20 = sbr.rel (0) target = $region9
    $region8: #{lenet_forward.5} parent=1 // pred_region
      _
    $region9: #{lenet_forward.5} parent=1 // pred_fallthru
      _
    // Predicated region
    $region10: #{lenet_forward.5} parent=1 // pred_check
      _
    $region11: #{lenet_forward.5} parent=1 // pred_check_branch
      %22 = sbr.rel (0) target = $region13
    $region12: #{lenet_forward.5} parent=1 // pred_region
      _
    $region13: #{lenet_forward.5} parent=1 // pred_fallthru
      _
    // Predicated region
    $region14: #{lenet_forward.5} parent=1 // pred_check
      _
    $region15: #{lenet_forward.5} parent=1 // pred_check_branch
      %24 = sbr.rel (0) target = $region17
    $region16: #{lenet_forward.5} parent=1 // pred_region
      _
    $region17: #{lenet_forward.5} parent=1 // pred_fallthru
      _
    // Predicated region
    $region18: #{lenet_forward.5} parent=1 // pred_check
      _
    $region19: #{lenet_forward.5} parent=1 // pred_check_branch
      %26 = sbr.rel (0) target = $region21
    $region20: #{lenet_forward.5} parent=1 // pred_region
      _
    $region21: #{lenet_forward.5} parent=1 // pred_fallthru
      _
    // Predicated region
    $region22: #{lenet_forward.5} parent=1 // pred_check
      _
    $region23: #{lenet_forward.5} parent=1 // pred_check_branch
      %28 = sbr.rel (0) target = $region25
    $region24: #{lenet_forward.5} parent=1 // pred_region
      _
    $region25: #{lenet_forward.5} parent=1 // pred_fallthru
      _
    // Predicated region
    $region26: #{lenet_forward.5} parent=1 // pred_check
      _
    $region27: #{lenet_forward.5} parent=1 // pred_check_branch
      %30 = sbr.rel (0) target = $region29
    $region28: #{lenet_forward.5} parent=1 // pred_region
      _
    $region29: #{lenet_forward.5} parent=1 // pred_fallthru
      _
    // Predicated region
    $region30: #{lenet_forward.5} parent=1 // pred_check
      _
    $region31: #{lenet_forward.5} parent=1 // pred_check_branch
      %32 = sbr.rel (0) target = $region33
    $region32: #{lenet_forward.5} parent=1 // pred_region
      _
    $region33: #{lenet_forward.5} parent=1 // pred_fallthru
      _
    // Predicated region
    $region34: #{lenet_forward.5} parent=1 // pred_check
      _
    $region35: #{lenet_forward.5} parent=1 // pred_check_branch
      %34 = sbr.rel (0) target = $region37
    $region36: #{lenet_forward.5} parent=1 // pred_region
      _
    $region37: #{lenet_forward.5} parent=1 // pred_fallthru
      _
    // Predicated region
    $region38: #{lenet_forward.5} parent=1 // pred_check
      _
    $region39: #{lenet_forward.5} parent=1 // pred_check_branch
      %36 = sbr.rel (0) target = $region41
    $region40: #{lenet_forward.5} parent=1 // pred_region
      _
    $region41: #{lenet_forward.5} parent=1 // pred_fallthru
      _
    // Predicated region
    $region42: #{lenet_forward.5} parent=1 // pred_check
      _
    $region43: #{lenet_forward.5} parent=1 // pred_check_branch
      %38 = sbr.rel (0) target = $region45
    $region44: #{lenet_forward.5} parent=1 // pred_region
      _
    $region45: #{lenet_forward.5} parent=1 // pred_fallthru
      _
    %v39 = vld [vmem:[%s0] sm:$0xff]
    %v40 = vld [vmem:[%s1] sm:$0xff]
    %v41 = vld [vmem:[%s1 + $0x8] sm:$0xff]
    %v42 = vld [vmem:[%s1 + $0x10] sm:$0xff]
    %v43 = vld [vmem:[%s1 + $0x18] sm:$0xff]
    %v44 = vld [vmem:[%s1 + $0x20] sm:$0xff]
    %v45 = vld [vmem:[%s1 + $0x28] sm:$0xff]
    %v46 = vld [vmem:[%s1 + $0x30] sm:$0xff]
    %v47 = vld [vmem:[%s1 + $0x38] sm:$0xff]
    %v48 = vld [vmem:[%s1 + $0x40] sm:$0xff]
    %v49 = vld [vmem:[%s1 + $0x48] sm:$0xff]
    %v50 = vld [vmem:[%s1 + $0x50] sm:$0xff]
    %v51 = vld [vmem:[%s1 + $0x58] sm:$0xff]
    %v52 = vld [vmem:[%s1 + $0x60] sm:$0xff]
    %v53 = vld [vmem:[%s1 + $0x68] sm:$0xff]
    %v54 = vld [vmem:[%s1 + $0x70] sm:$0xff]
    %v55 = vld [vmem:[%s1 + $0x78] sm:$0xff]
    %v56 = vld [vmem:[%s1 + $0x80] sm:$0xff]
    %v57 = vld [vmem:[%s1 + $0x88] sm:$0xff]
    %v58 = vld [vmem:[%s1 + $0x90] sm:$0xff]
    %v59 = vld [vmem:[%s1 + $0x98] sm:$0xff]
    %v60 = vld [vmem:[%s1 + $0xa0] sm:$0xff]
    %v61 = vld [vmem:[%s1 + $0xa8] sm:$0xff]
    %v62 = vld [vmem:[%s1 + $0xb0] sm:$0xff]
    %v63 = vld [vmem:[%s1 + $0xb8] sm:$0xff]
    %v64 = vld [vmem:[%s1 + $0xc0] sm:$0xff]
    %v65 = vld [vmem:[%s1 + $0xc8] sm:$0xff]
    %v66 = vld [vmem:[%s1 + $0xd0] sm:$0xff]
    %v67 = vld [vmem:[%s1 + $0xd8] sm:$0xff]
    %v68 = vld [vmem:[%s1 + $0xe0] sm:$0xff]
    %v69 = vld [vmem:[%s1 + $0xe8] sm:$0xff]
    %v70 = vld [vmem:[%s1 + $0xf0] sm:$0xff]
    %v71 = vld [vmem:[%s1 + $0xf8] sm:$0xff]
    %v72 = vld [vmem:[%s1 + $0x100] sm:$0xff]
    %v73 = vld [vmem:[%s1 + $0x108] sm:$0xff]
    %v74 = vld [vmem:[%s1 + $0x110] sm:$0xff]
    %v75 = vld [vmem:[%s1 + $0x118] sm:$0xff]
    %v76 = vld [vmem:[%s1 + $0x120] sm:$0xff]
    %v77 = vld [vmem:[%s1 + $0x128] sm:$0xff]
    %v78 = vld [vmem:[%s1 + $0x130] sm:$0xff]
    %v79 = vld [vmem:[%s1 + $0x138] sm:$0xff]
    %v80 = vld [vmem:[%s1 + $0x140] sm:$0xff]
    %v81 = vld [vmem:[%s1 + $0x148] sm:$0xff]
    %v82 = vld [vmem:[%s1 + $0x150] sm:$0xff]
    %v83 = vld [vmem:[%s1 + $0x158] sm:$0xff]
    %v84 = vld [vmem:[%s1 + $0x160] sm:$0xff]
    %v85 = vld [vmem:[%s1 + $0x168] sm:$0xff]
    %v86 = vld [vmem:[%s1 + $0x170] sm:$0xff]
    %v87 = vld [vmem:[%s1 + $0x178] sm:$0xff]
    %v88 = vld [vmem:[%s1 + $0x180] sm:$0xff]
    %v89 = vld [vmem:[%s1 + $0x188] sm:$0xff]
    %v90 = vld [vmem:[%s2] sm:$0x1]
    %v92 = vperm.slane %v90, 0
    %95 = vst [vmem:[#allocation1] ss:$4 sm:$0xff] %v39
    %v96 = vld.sshfl [vmem:[#allocation1] sm:$0xff pattern:$0x73625140]
    %v97 = vld.sshfl [vmem:[#allocation1 + $0x8] sm:$0xff pattern:$0x73625140]
    %v98 = vld.sshfl [vmem:[#allocation1 + $0x10] sm:$0xff pattern:$0x73625140]
    %v99 = vld.sshfl [vmem:[#allocation1 + $0x18] sm:$0xff pattern:$0x73625140]
    %vm103 = vcmask 130048
    %v104 = vsel %vm103, %v99, 0
    %106 = vmatpush.msra.mxu0 %v55
    %107 = vmatpush.msra.mxu0 %v54
    %108 = vmatpush.msra.mxu0 %v53
    %109 = vmatpush.msra.mxu0 %v52
    %110 = vmatpush.msra.mxu0 %v51
    %111 = vmatpush.msra.mxu0 %v50
    %112 = vmatpush.msra.mxu0 %v49
    %113 = vmatpush.msra.mxu0 %v48
    %114 = vmatpush.msra.mxu0 %v47
    %115 = vmatpush.msra.mxu0 %v46
    %116 = vmatpush.msra.mxu0 %v45
    %117 = vmatpush.msra.mxu0 %v44
    %118 = vmatpush.msra.mxu0 %v43
    %119 = vmatpush.msra.mxu0 %v42
    %120 = vmatpush.msra.mxu0 %v41
    %121 = vmatpush.msra.mxu0 %v40
    %122 = vmatmul.f32.gmra.mxu0 %v96
    %v123 = vpop.f32.mrf.mxu0
    %v124 = vadd.f32 %v92, %v123
    %125 = vdwg.mxu0
    %126 = vmatpush.msra.mxu0 %v71
    %127 = vmatpush.msra.mxu0 %v70
    %128 = vmatpush.msra.mxu0 %v69
    %129 = vmatpush.msra.mxu0 %v68
    %130 = vmatpush.msra.mxu0 %v67
    %131 = vmatpush.msra.mxu0 %v66
    %132 = vmatpush.msra.mxu0 %v65
    %133 = vmatpush.msra.mxu0 %v64
    %134 = vmatpush.msra.mxu0 %v63
    %135 = vmatpush.msra.mxu0 %v62
    %136 = vmatpush.msra.mxu0 %v61
    %137 = vmatpush.msra.mxu0 %v60
    %138 = vmatpush.msra.mxu0 %v59
    %139 = vmatpush.msra.mxu0 %v58
    %140 = vmatpush.msra.mxu0 %v57
    %141 = vmatpush.msra.mxu0 %v56
    %142 = vmatmul.f32.gmra.mxu0 %v97
    %v143 = vpop.f32.mrf.mxu0
    %v144 = vadd.f32 %v124, %v143
    %145 = vdwg.mxu0
    %146 = vmatpush.msra.mxu0 %v87
    %147 = vmatpush.msra.mxu0 %v86
    %148 = vmatpush.msra.mxu0 %v85
    %149 = vmatpush.msra.mxu0 %v84
    %150 = vmatpush.msra.mxu0 %v83
    %151 = vmatpush.msra.mxu0 %v82
    %152 = vmatpush.msra.mxu0 %v81
    %153 = vmatpush.msra.mxu0 %v80
    %154 = vmatpush.msra.mxu0 %v79
    %155 = vmatpush.msra.mxu0 %v78
    %156 = vmatpush.msra.mxu0 %v77
    %157 = vmatpush.msra.mxu0 %v76
    %158 = vmatpush.msra.mxu0 %v75
    %159 = vmatpush.msra.mxu0 %v74
    %160 = vmatpush.msra.mxu0 %v73
    %161 = vmatpush.msra.mxu0 %v72
    %162 = vmatmul.f32.gmra.mxu0 %v98
    %v163 = vpop.f32.mrf.mxu0
    %v164 = vadd.f32 %v144, %v163
    %165 = vdwg.mxu0
    %166 = vmatpush.msra.mxu0 0.0
    %167 = vmatpush.msra.mxu0 0.0
    %168 = vmatpush.msra.mxu0 0.0
    %169 = vmatpush.msra.mxu0 0.0
    %170 = vmatpush.msra.mxu0 0.0
    %171 = vmatpush.msra.mxu0 0.0
    %172 = vmatpush.msra.mxu0 0.0
    %173 = vmatpush.msra.mxu0 0.0
    %174 = vmatpush.msra.mxu0 0.0
    %175 = vmatpush.msra.mxu0 0.0
    %176 = vmatpush.msra.mxu0 0.0
    %177 = vmatpush.msra.mxu0 0.0
    %178 = vmatpush.msra.mxu0 0.0
    %179 = vmatpush.msra.mxu0 0.0
    %180 = vmatpush.msra.mxu0 %v89
    %181 = vmatpush.msra.mxu0 %v88
    %182 = vmatmul.f32.gmra.mxu0 %v104
    %v183 = vpop.f32.mrf.mxu0
    %v184 = vadd.f32 %v164, %v183
    %185 = vdwg.mxu0
    %v186 = vld [vmem:[%s3] sm:$0x1]
    %v187 = vld [vmem:[%s4] sm:$0x1]
    %vm188 = vcmask 975872
    %v189 = vsel %vm188, %v184, 0.0
    %v190 = vrot.slane %v189, 4
    %v191 = vadd.f32 %v189, %v190
    %v192 = vrot.slane %v191, 2
    %v193 = vadd.f32 %v191, %v192
    %v194 = vrot.slane %v193, 1
    %v195 = vadd.f32 %v193, %v194
    %v196 = vrcp.pop 2.0
    %v197 = vmul.f32 2.0, %v196
    %v198 = vsub.f32 1.0, %v197
    %v199 = vmul.f32 %v196, %v198
    %v200 = vadd.f32 %v196, %v199
    %vm201 = vweird.f32 %v196
    %v202 = vsel %vm201, %v196, %v200
    %v203 = vmul.f32 %v195, %v202
    %v204 = vsub.f32 %v184, %v203
    %v205 = vmul.f32 %v204, %v204
    %v206 = vsel %vm188, %v205, 0.0
    %v207 = vrot.slane %v206, 4
    %v208 = vadd.f32 %v206, %v207
    %v209 = vrot.slane %v208, 2
    %v210 = vadd.f32 %v208, %v209
    %v211 = vrot.slane %v210, 1
    %v212 = vadd.f32 %v210, %v211
    %v213 = vmul.f32 %v212, %v202
    %v214 = vadd.f32 %v213, 1e-05
    %v215 = vrsqrt.pop %v214
    %v216 = vmul.f32 %v215, %v214
    %v217 = vmul.f32 %v216, %v215
    %v218 = vmul.f32 0.5, %v217
    %v219 = vsub.f32 1.5, %v218
    %v220 = vmul.f32 %v215, %v219
    %vm221 = vweird.f32 %v214
    %vm222 = vweird.f32 %v215
    %vm223 = vmor %vm221, %vm222
    %v224 = vsel %vm223, %v215, %v220
    %v225 = vmul.f32 %v204, %v224
    %v227 = vperm.slane %v186, 0
    %v229 = vmul.f32 %v225, %v227
    %v231 = vperm.slane %v187, 0
    %v233 = vadd.f32 %v229, %v231
    %v234 = vmax.f32 %v233, 0.0
    %v235 = vld [vmem:[%s5] sm:$0xff]
    %v236 = vld [vmem:[%s5 + $0x8] sm:$0xff]
    %v237 = vld [vmem:[%s5 + $0x10] sm:$0xff]
    %v238 = vld [vmem:[%s5 + $0x18] sm:$0xff]
    %v239 = vld [vmem:[%s5 + $0x20] sm:$0xff]
    %v240 = vld [vmem:[%s5 + $0x28] sm:$0xff]
    %v241 = vld [vmem:[%s5 + $0x30] sm:$0xff]
    %v242 = vld [vmem:[%s5 + $0x38] sm:$0xff]
    %v243 = vld [vmem:[%s5 + $0x40] sm:$0xff]
    %v244 = vld [vmem:[%s5 + $0x48] sm:$0xff]
    %v245 = vld [vmem:[%s5 + $0x50] sm:$0xff]
    %v246 = vld [vmem:[%s5 + $0x58] sm:$0xff]
    %v247 = vld [vmem:[%s5 + $0x60] sm:$0xff]
    %v248 = vld [vmem:[%s5 + $0x68] sm:$0xff]
    %v249 = vld [vmem:[%s5 + $0x70] sm:$0xff]
    %v250 = vld [vmem:[%s6] sm:$0x1]
    %v252 = vperm.slane %v250, 0
    %vm254 = vcmask 982016
    %v256 = vsel %vm254, %v234, 0
    %258 = vmatpush.msra.mxu0 0.0
    %259 = vmatpush.msra.mxu0 %v249
    %260 = vmatpush.msra.mxu0 %v248
    %261 = vmatpush.msra.mxu0 %v247
    %262 = vmatpush.msra.mxu0 %v246
    %263 = vmatpush.msra.mxu0 %v245
    %264 = vmatpush.msra.mxu0 %v244
    %265 = vmatpush.msra.mxu0 %v243
    %266 = vmatpush.msra.mxu0 %v242
    %267 = vmatpush.msra.mxu0 %v241
    %268 = vmatpush.msra.mxu0 %v240
    %269 = vmatpush.msra.mxu0 %v239
    %270 = vmatpush.msra.mxu0 %v238
    %271 = vmatpush.msra.mxu0 %v237
    %272 = vmatpush.msra.mxu0 %v236
    %273 = vmatpush.msra.mxu0 %v235
    %274 = vmatmul.f32.gmra.mxu0 %v256
    %v275 = vpop.f32.mrf.mxu0
    %v276 = vadd.f32 %v252, %v275
    %277 = vdwg.mxu0
    %v278 = vld [vmem:[%s7] sm:$0x1]
    %v279 = vld [vmem:[%s8] sm:$0x1]
    %vm280 = vcmask 680960
    %v281 = vsel %vm280, %v276, 0.0
    %v282 = vrot.slane %v281, 4
    %v283 = vadd.f32 %v281, %v282
    %v284 = vrot.slane %v283, 2
    %v285 = vadd.f32 %v283, %v284
    %v286 = vrot.slane %v285, 1
    %v287 = vadd.f32 %v285, %v286
    %v288 = vmul.f32 %v287, %v202
    %v289 = vsub.f32 %v276, %v288
    %v290 = vmul.f32 %v289, %v289
    %v291 = vsel %vm280, %v290, 0.0
    %v292 = vrot.slane %v291, 4
    %v293 = vadd.f32 %v291, %v292
    %v294 = vrot.slane %v293, 2
    %v295 = vadd.f32 %v293, %v294
    %v296 = vrot.slane %v295, 1
    %v297 = vadd.f32 %v295, %v296
    %v298 = vmul.f32 %v297, %v202
    %v299 = vadd.f32 %v298, 1e-05
    %v300 = vrsqrt.pop %v299
    %v301 = vmul.f32 %v300, %v299
    %v302 = vmul.f32 %v301, %v300
    %v303 = vmul.f32 0.5, %v302
    %v304 = vsub.f32 1.5, %v303
    %v305 = vmul.f32 %v300, %v304
    %vm306 = vweird.f32 %v299
    %vm307 = vweird.f32 %v300
    %vm308 = vmor %vm306, %vm307
    %v309 = vsel %vm308, %v300, %v305
    %v310 = vmul.f32 %v289, %v309
    %v312 = vperm.slane %v278, 0
    %v314 = vmul.f32 %v310, %v312
    %v316 = vperm.slane %v279, 0
    %v318 = vadd.f32 %v314, %v316
    %v319 = vmax.f32 %v318, 0.0
    %v320 = vld [vmem:[%s9] sm:$0xff]
    %v321 = vld [vmem:[%s9 + $0x8] sm:$0xff]
    %v322 = vld [vmem:[%s9 + $0x10] sm:$0xff]
    %v323 = vld [vmem:[%s9 + $0x18] sm:$0xff]
    %v324 = vld [vmem:[%s9 + $0x20] sm:$0xff]
    %v325 = vld [vmem:[%s9 + $0x28] sm:$0xff]
    %v326 = vld [vmem:[%s9 + $0x30] sm:$0xff]
    %v327 = vld [vmem:[%s9 + $0x38] sm:$0xff]
    %v328 = vld [vmem:[%s9 + $0x40] sm:$0xff]
    %v329 = vld [vmem:[%s9 + $0x48] sm:$0xff]
    %v330 = vld [vmem:[%s9 + $0x50] sm:$0xf]
    %v331 = vld [vmem:[%s10] sm:$0x1]
    %v333 = vperm.slane %v331, 0
    %vm335 = vcmask 687104
    %v337 = vsel %vm335, %v319, 0
    %vm339 = vcmask 1043456
    %v341 = vsel %vm339, %v330, 0
    %343 = vmatpush.msra.mxu0 0.0
    %344 = vmatpush.msra.mxu0 0.0
    %345 = vmatpush.msra.mxu0 0.0
    %346 = vmatpush.msra.mxu0 0.0
    %347 = vmatpush.msra.mxu0 0.0
    %348 = vmatpush.msra.mxu0 %v341
    %349 = vmatpush.msra.mxu0 %v329
    %350 = vmatpush.msra.mxu0 %v328
    %351 = vmatpush.msra.mxu0 %v327
    %352 = vmatpush.msra.mxu0 %v326
    %353 = vmatpush.msra.mxu0 %v325
    %354 = vmatpush.msra.mxu0 %v324
    %355 = vmatpush.msra.mxu0 %v323
    %356 = vmatpush.msra.mxu0 %v322
    %357 = vmatpush.msra.mxu0 %v321
    %358 = vmatpush.msra.mxu0 %v320
    %359 = vmatmul.f32.gmra.mxu0 %v337
    %v360 = vpop.f32.mrf.mxu0
    %v361 = vadd.f32 %v333, %v360
    %362 = vdwg.mxu0
    %vm363 = vcmask 74752
    %364 = vst.msk [vmem:[#allocation2] sm:$0x3] %vm363, %v361
    // Predicated region
    $region46: #{lenet_forward.5} parent=1 // pred_check
      _
    $region47: #{lenet_forward.5} parent=1 // pred_check_branch
      %366 = sbr.rel (0) target = $region49
    $region48: #{lenet_forward.5} parent=1 // pred_region
      %368 = vsyncadd [#allocation3], 0
      %s370 = sshll.u32 [#allocation2], 4
      %s371 = int_to_ptr.vmem [resolvable:$true] %s370
      %s372 = sshll.u32 %s11, 4
      %s373 = int_to_ptr.hbm [resolvable:$true] %s372
      %375 = dma.vmem_to_hbm [thread:$0]  %s371, 32, %s373, [#allocation3]
    $region49: #{lenet_forward.5} parent=1 // pred_fallthru
      _
    // Predicated region
    $region50: #{lenet_forward.5} parent=1 // pred_check
      _
    $region51: #{lenet_forward.5} parent=1 // pred_check_branch
      %377 = sbr.rel (0) target = $region53
    $region52: #{lenet_forward.5} parent=1 // pred_region
      %379 = dma.done [#allocation3], 32
    $region53: #{lenet_forward.5} parent=1 // pred_fallthru
      _
    %380 = vsyncpa [#allocation3], 1

</llo_original>
